<compile_context>
chip_gen: v7x
topology: tpu7x:2x2x1
jax: 0.10.0
libtpu: 0.0.40
codegen_flags: <defaults>
</compile_context>

<pallas_src>
import jax
import jax.numpy as jnp
from jax.experimental import pallas as pl
from jax.experimental.pallas import tpu as pltpu

BN_EPS = 1e-5


# ----------------------------------------------------------------------------
# Pallas kernels (lane-dense: channels on sublanes, M = N*OH*OW on lanes)
# ----------------------------------------------------------------------------
def _conv_bn_tanh_kernel(w_ref, g_ref, b_ref, p_ref, o_ref):
    """tanh(BN(conv)) with conv as W^T @ patches^T.

    w_ref: (C, K)   conv weight, transposed/flattened
    g_ref: (C, 1)   BN gamma
    b_ref: (C, 1)   BN beta
    p_ref: (K, M)   im2col patches, transposed (M on lanes)
    o_ref: (C, M)
    """
    w = w_ref[...]
    y = jnp.dot(w, p_ref[...], preferred_element_type=jnp.float32)       # (C, M)
    mean = jnp.mean(y, axis=-1, keepdims=True)                           # (C, 1)
    var = jnp.mean(jnp.square(y - mean), axis=-1, keepdims=True)         # (C, 1)
    inv = jax.lax.rsqrt(var + BN_EPS)
    o_ref[...] = jnp.tanh((y - mean) * inv * g_ref[...] + b_ref[...])


def _conv_bn_tanh_pool_kernel(w_ref, g_ref, b_ref, ps_ref,
                              p00_ref, p01_ref, p10_ref, p11_ref, o_ref):
    """tanh(BN(conv)) followed by a fused 2x2 max-pool.

    w_ref:          (C, K)   conv weight, transposed/flattened
    g_ref, b_ref:   (C, 1)   BN gamma / beta
    ps_ref:         (C-stat) (K, M)  patches for ALL conv-output positions
                              (used only for exact BatchNorm batch statistics)
    p00..p11_ref:   (K, Mp)  patches for the conv-output positions that form
                              pool-window offset (i, j) of every pooled pixel
    o_ref:          (C, Mp)  pooled output
    """
    w = w_ref[...]

    # BatchNorm statistics over the full (un-pooled) conv output.
    y_stats = jnp.dot(w, ps_ref[...], preferred_element_type=jnp.float32)  # (C, M)
    mean = jnp.mean(y_stats, axis=-1, keepdims=True)                       # (C, 1)
    var = jnp.mean(jnp.square(y_stats - mean), axis=-1, keepdims=True)     # (C, 1)
    inv = jax.lax.rsqrt(var + BN_EPS)
    scale = g_ref[...] * inv                                               # (C, 1)
    shift = b_ref[...] - mean * scale                                      # (C, 1)

    def branch(p_ref):
        y = jnp.dot(w, p_ref[...], preferred_element_type=jnp.float32)    # (C, Mp)
        return jnp.tanh(y * scale + shift)

    o_ref[...] = jnp.maximum(
        jnp.maximum(branch(p00_ref), branch(p01_ref)),
        jnp.maximum(branch(p10_ref), branch(p11_ref)),
    )


def _vmem():
    return pl.BlockSpec(memory_space=pltpu.MemorySpace.VMEM)


def pallas_conv_bn_tanh(wt, gamma, beta, patches_t):
    C = wt.shape[0]
    M = patches_t.shape[1]
    return pl.pallas_call(
        _conv_bn_tanh_kernel,
        out_shape=jax.ShapeDtypeStruct((C, M), jnp.float32),
        in_specs=[_vmem()] * 4,
        out_specs=_vmem(),
    )(
        wt.astype(jnp.float32),
        gamma.reshape(C, 1).astype(jnp.float32),
        beta.reshape(C, 1).astype(jnp.float32),
        patches_t.astype(jnp.float32),
    )


def pallas_conv_bn_tanh_pool(wt, gamma, beta, p_stats, p00, p01, p10, p11):
    C = wt.shape[0]
    Mp = p00.shape[1]
    return pl.pallas_call(
        _conv_bn_tanh_pool_kernel,
        out_shape=jax.ShapeDtypeStruct((C, Mp), jnp.float32),
        in_specs=[_vmem()] * 8,
        out_specs=_vmem(),
    )(
        wt.astype(jnp.float32),
        gamma.reshape(C, 1).astype(jnp.float32),
        beta.reshape(C, 1).astype(jnp.float32),
        p_stats.astype(jnp.float32),
        p00.astype(jnp.float32), p01.astype(jnp.float32),
        p10.astype(jnp.float32), p11.astype(jnp.float32),
    )


# ----------------------------------------------------------------------------
# Plain-JAX glue (NCHW throughout): transposed im2col, dilation, weight packing
# ----------------------------------------------------------------------------
def im2col_t(x_nchw, kh, kw, stride, padding):
    """Transposed im2col: returns ((kh*kw*C, N*OH*OW), OH, OW)."""
    N, C, H, W = x_nchw.shape
    xp = jnp.pad(x_nchw, ((0, 0), (0, 0), (padding, padding), (padding, padding)))
    OH = (H + 2 * padding - kh) // stride + 1
    OW = (W + 2 * padding - kw) // stride + 1
    rows = []
    for i in range(kh):
        for j in range(kw):
            win = xp[:, :, i: i + stride * (OH - 1) + 1: stride,
                           j: j + stride * (OW - 1) + 1: stride]      # (N, C, OH, OW)
            rows.append(jnp.transpose(win, (1, 0, 2, 3)).reshape(C, N * OH * OW))
    return jnp.concatenate(rows, axis=0), OH, OW                       # (K, M)


def conv_weight_to_mat_t(w_oihw):
    """PyTorch Conv2d weight (OC, IC, kh, kw) -> (OC, kh*kw*IC)."""
    OC, IC, kh, kw = w_oihw.shape
    return jnp.transpose(w_oihw, (0, 2, 3, 1)).reshape(OC, kh * kw * IC)


def convt_weight_to_mat_t(w_iohw):
    """PyTorch ConvTranspose2d weight (IC, OC, kh, kw) -> flipped-conv (OC, K)."""
    IC, OC, kh, kw = w_iohw.shape
    w = jnp.flip(w_iohw, axis=(2, 3))                  # spatial flip
    return jnp.transpose(w, (1, 2, 3, 0)).reshape(OC, kh * kw * IC)


def dilate_and_pad(x_nchw, stride, pad):
    """Insert (stride-1) zeros between pixels, then symmetric zero-pad."""
    N, C, H, W = x_nchw.shape
    HD, WD = (H - 1) * stride + 1, (W - 1) * stride + 1
    xd = jnp.zeros((N, C, HD, WD), x_nchw.dtype)
    xd = xd.at[:, :, ::stride, ::stride].set(x_nchw)
    return jnp.pad(xd, ((0, 0), (0, 0), (pad, pad), (pad, pad)))


def conv_pool_block(x_nchw, w_oihw, gamma, beta, *, kernel, stride, padding,
                    pool_stride):
    """Conv2d + BN(batch stats) + Tanh + MaxPool2d(2, pool_stride), fused."""
    N = x_nchw.shape[0]
    OC = w_oihw.shape[0]
    Pt, OH, OW = im2col_t(x_nchw, kernel, kernel, stride, padding)
    K = Pt.shape[0]
    POH = (OH - 2) // pool_stride + 1
    POW = (OW - 2) // pool_stride + 1
    P4 = Pt.reshape(K, N, OH, OW)

    def branch(i, j):
        return P4[:, :, i: i + pool_stride * (POH - 1) + 1: pool_stride,
                        j: j + pool_stride * (POW - 1) + 1: pool_stride
                  ].reshape(K, N * POH * POW)

    wt = conv_weight_to_mat_t(w_oihw)
    z = pallas_conv_bn_tanh_pool(wt, gamma, beta, Pt,
                                 branch(0, 0), branch(0, 1),
                                 branch(1, 0), branch(1, 1))           # (OC, N*POH*POW)
    return jnp.transpose(z.reshape(OC, N, POH, POW), (1, 0, 2, 3))     # NCHW


def convt_block(x_nchw, w_iohw, gamma, beta, *, kernel, stride, padding):
    """ConvTranspose2d + BN(batch stats) + Tanh."""
    # ConvTranspose2d == dilate by `stride`, pad by (k-1-padding), stride-1 conv
    # with the spatially flipped weight.
    N = x_nchw.shape[0]
    OC = w_iohw.shape[1]
    xd = dilate_and_pad(x_nchw, stride, kernel - 1 - padding)
    Pt, OH, OW = im2col_t(xd, kernel, kernel, stride=1, padding=0)
    wt = convt_weight_to_mat_t(w_iohw)
    z = pallas_conv_bn_tanh(wt, gamma, beta, Pt)                       # (OC, N*OH*OW)
    return jnp.transpose(z.reshape(OC, N, OH, OW), (1, 0, 2, 3))       # NCHW


# ----------------------------------------------------------------------------
# Model: parameter init + forward
# ----------------------------------------------------------------------------
def init_params(key):
    ks = jax.random.split(key, 12)

    def w(k, shape, scale=0.1):
        return scale * jax.random.normal(k, shape, dtype=jnp.float32)

    def bn(k, c):
        k1, k2 = jax.random.split(k)
        return (1.0 + 0.1 * jax.random.normal(k1, (c,), dtype=jnp.float32),
                0.1 * jax.random.normal(k2, (c,), dtype=jnp.float32))

    p = {}
    # encoder convs (PyTorch Conv2d layout: OC, IC, kh, kw)
    p["w1"], p["b1"] = w(ks[0], (16, 3, 3, 3)), w(ks[1], (16,))
    p["g1"], p["bt1"] = bn(ks[2], 16)
    p["w2"], p["b2"] = w(ks[3], (4, 16, 3, 3)), w(ks[4], (4,))
    p["g2"], p["bt2"] = bn(ks[5], 4)
    # decoder transposed convs (PyTorch ConvTranspose2d layout: IC, OC, kh, kw)
    p["wt1"], p["bd1"] = w(ks[6], (4, 16, 3, 3)), w(ks[7], (16,))
    p["gd1"], p["btd1"] = bn(ks[8], 16)
    p["wt2"], p["bd2"] = w(ks[9], (16, 8, 5, 5)), w(ks[10], (8,))
    p["gd2"], p["btd2"] = bn(ks[11], 8)
    k3 = jax.random.split(jax.random.fold_in(key, 99), 3)
    p["wt3"], p["bd3"] = w(k3[0], (8, 3, 2, 2)), w(k3[1], (3,))
    p["gd3"], p["btd3"] = bn(k3[2], 3)
    # NOTE: the conv biases (b1, b2, bd1, bd2, bd3) are kept for module parity
    # but are mathematically cancelled by the following train-mode BatchNorm
    # (batch statistics), so they are not passed to the kernels.
    return p


@jax.jit
def cnnae_forward(x_nchw, p):
    """Returns (feature_map, encode, decode), each NCHW like the PyTorch module."""
    # conv1: Conv2d(3,16,3,s=3,p=1) + BN + Tanh + MaxPool2d(2, s=2)   (fused)
    feature_map = conv_pool_block(x_nchw, p["w1"], p["g1"], p["bt1"],
                                  kernel=3, stride=3, padding=1, pool_stride=2)
    # conv2: Conv2d(16,4,3,s=2,p=1) + BN + Tanh + MaxPool2d(2, s=1)   (fused)
    encode = conv_pool_block(feature_map, p["w2"], p["g2"], p["bt2"],
                             kernel=3, stride=2, padding=1, pool_stride=1)
    # decoder
    d = convt_block(encode, p["wt1"], p["gd1"], p["btd1"], kernel=3, stride=2, padding=0)
    d = convt_block(d, p["wt2"], p["gd2"], p["btd2"], kernel=5, stride=3, padding=1)
    decode = convt_block(d, p["wt3"], p["gd3"], p["btd3"], kernel=2, stride=2, padding=1)
    return feature_map, encode, decode


if __name__ == "__main__":
    key = jax.random.PRNGKey(0)
    pkey, xkey = jax.random.split(key)
    params = init_params(pkey)

    # Small input consistent with the module's 3-channel NCHW expectation.
    x = jax.random.normal(xkey, (2, 3, 30, 30), dtype=jnp.float32)

    feature_map, encode, decode = jax.block_until_ready(cnnae_forward(x, params))

    assert feature_map.shape == (2, 16, 5, 5), feature_map.shape
    assert encode.shape == (2, 4, 2, 2), encode.shape
    assert decode.shape == (2, 3, 28, 28), decode.shape
    assert bool(jnp.all(jnp.isfinite(feature_map)))
    assert bool(jnp.all(jnp.isfinite(encode)))
    assert bool(jnp.all(jnp.isfinite(decode)))

    print("KERNEL_OK")
</pallas_src>

<mosaic_0001>
module attributes {stable_mosaic.version = 11 : i64} {
  func.func @_conv_bn_tanh_pool_kernel(%arg0: memref<16x27xf32, #tpu.memory_space<vmem>>, %arg1: memref<16x1xf32, #tpu.memory_space<vmem>>, %arg2: memref<16x1xf32, #tpu.memory_space<vmem>>, %arg3: memref<27x200xf32, #tpu.memory_space<vmem>>, %arg4: memref<27x50xf32, #tpu.memory_space<vmem>>, %arg5: memref<27x50xf32, #tpu.memory_space<vmem>>, %arg6: memref<27x50xf32, #tpu.memory_space<vmem>>, %arg7: memref<27x50xf32, #tpu.memory_space<vmem>>, %arg8: memref<16x50xf32, #tpu.memory_space<vmem>>) attributes {dimension_semantics = [], scalar_prefetch = 0 : i64, scratch_operands = 0 : i64, tpu.core_type = #tpu.core_type<tc>} {
    %c0 = arith.constant 0 : index
    %c0_0 = arith.constant 0 : index
    %0 = vector.load %arg0[%c0, %c0_0] : memref<16x27xf32, #tpu.memory_space<vmem>>, vector<16x27xf32>
    %c0_1 = arith.constant 0 : index
    %c0_2 = arith.constant 0 : index
    %1 = vector.load %arg3[%c0_1, %c0_2] : memref<27x200xf32, #tpu.memory_space<vmem>>, vector<27x200xf32>
    %cst = arith.constant dense<0.000000e+00> : vector<16x200xf32>
    %2 = tpu.matmul %0, %1, %cst {dimension_numbers = #tpu.dot_dimension_numbers<[1], [0], [0], [1], [0, 0, 1, 1], [], []>} : vector<16x27xf32>, vector<27x200xf32>, vector<16x200xf32> -> vector<16x200xf32>
    %cst_3 = arith.constant dense<0.000000e+00> : vector<16xf32>
    %3 = vector.multi_reduction <add>, %2, %cst_3 [1] : vector<16x200xf32> to vector<16xf32>
    %4 = vector.shape_cast %3 : vector<16xf32> to vector<16x1xf32>
    %cst_4 = arith.constant 2.000000e+02 : f32
    %5 = vector.broadcast %cst_4 : f32 to vector<16x1xf32>
    %6 = arith.divf %4, %5 : vector<16x1xf32>
    %7 = vector.broadcast %6 : vector<16x1xf32> to vector<16x200xf32>
    %8 = arith.subf %2, %7 : vector<16x200xf32>
    %9 = arith.mulf %8, %8 : vector<16x200xf32>
    %cst_5 = arith.constant dense<0.000000e+00> : vector<16xf32>
    %10 = vector.multi_reduction <add>, %9, %cst_5 [1] : vector<16x200xf32> to vector<16xf32>
    %11 = vector.shape_cast %10 : vector<16xf32> to vector<16x1xf32>
    %cst_6 = arith.constant 2.000000e+02 : f32
    %12 = vector.broadcast %cst_6 : f32 to vector<16x1xf32>
    %13 = arith.divf %11, %12 : vector<16x1xf32>
    %cst_7 = arith.constant 9.99999974E-6 : f32
    %14 = vector.broadcast %cst_7 : f32 to vector<16x1xf32>
    %15 = arith.addf %13, %14 : vector<16x1xf32>
    %16 = math.rsqrt %15 : vector<16x1xf32>
    %c0_8 = arith.constant 0 : index
    %c0_9 = arith.constant 0 : index
    %17 = vector.load %arg1[%c0_8, %c0_9] : memref<16x1xf32, #tpu.memory_space<vmem>>, vector<16x1xf32>
    %18 = arith.mulf %17, %16 : vector<16x1xf32>
    %c0_10 = arith.constant 0 : index
    %c0_11 = arith.constant 0 : index
    %19 = vector.load %arg2[%c0_10, %c0_11] : memref<16x1xf32, #tpu.memory_space<vmem>>, vector<16x1xf32>
    %20 = arith.mulf %6, %18 : vector<16x1xf32>
    %21 = arith.subf %19, %20 : vector<16x1xf32>
    %c0_12 = arith.constant 0 : index
    %c0_13 = arith.constant 0 : index
    %22 = vector.load %arg4[%c0_12, %c0_13] : memref<27x50xf32, #tpu.memory_space<vmem>>, vector<27x50xf32>
    %cst_14 = arith.constant dense<0.000000e+00> : vector<16x50xf32>
    %23 = tpu.matmul %0, %22, %cst_14 {dimension_numbers = #tpu.dot_dimension_numbers<[1], [0], [0], [1], [0, 0, 1, 1], [], []>} : vector<16x27xf32>, vector<27x50xf32>, vector<16x50xf32> -> vector<16x50xf32>
    %24 = vector.broadcast %18 : vector<16x1xf32> to vector<16x50xf32>
    %25 = arith.mulf %23, %24 : vector<16x50xf32>
    %26 = vector.broadcast %21 : vector<16x1xf32> to vector<16x50xf32>
    %27 = arith.addf %25, %26 : vector<16x50xf32>
    %28 = math.tanh %27 : vector<16x50xf32>
    %c0_15 = arith.constant 0 : index
    %c0_16 = arith.constant 0 : index
    %29 = vector.load %arg5[%c0_15, %c0_16] : memref<27x50xf32, #tpu.memory_space<vmem>>, vector<27x50xf32>
    %cst_17 = arith.constant dense<0.000000e+00> : vector<16x50xf32>
    %30 = tpu.matmul %0, %29, %cst_17 {dimension_numbers = #tpu.dot_dimension_numbers<[1], [0], [0], [1], [0, 0, 1, 1], [], []>} : vector<16x27xf32>, vector<27x50xf32>, vector<16x50xf32> -> vector<16x50xf32>
    %31 = vector.broadcast %18 : vector<16x1xf32> to vector<16x50xf32>
    %32 = arith.mulf %30, %31 : vector<16x50xf32>
    %33 = vector.broadcast %21 : vector<16x1xf32> to vector<16x50xf32>
    %34 = arith.addf %32, %33 : vector<16x50xf32>
    %35 = math.tanh %34 : vector<16x50xf32>
    %36 = arith.maximumf %28, %35 : vector<16x50xf32>
    %c0_18 = arith.constant 0 : index
    %c0_19 = arith.constant 0 : index
    %37 = vector.load %arg6[%c0_18, %c0_19] : memref<27x50xf32, #tpu.memory_space<vmem>>, vector<27x50xf32>
    %cst_20 = arith.constant dense<0.000000e+00> : vector<16x50xf32>
    %38 = tpu.matmul %0, %37, %cst_20 {dimension_numbers = #tpu.dot_dimension_numbers<[1], [0], [0], [1], [0, 0, 1, 1], [], []>} : vector<16x27xf32>, vector<27x50xf32>, vector<16x50xf32> -> vector<16x50xf32>
    %39 = vector.broadcast %18 : vector<16x1xf32> to vector<16x50xf32>
    %40 = arith.mulf %38, %39 : vector<16x50xf32>
    %41 = vector.broadcast %21 : vector<16x1xf32> to vector<16x50xf32>
    %42 = arith.addf %40, %41 : vector<16x50xf32>
    %43 = math.tanh %42 : vector<16x50xf32>
    %c0_21 = arith.constant 0 : index
    %c0_22 = arith.constant 0 : index
    %44 = vector.load %arg7[%c0_21, %c0_22] : memref<27x50xf32, #tpu.memory_space<vmem>>, vector<27x50xf32>
    %cst_23 = arith.constant dense<0.000000e+00> : vector<16x50xf32>
    %45 = tpu.matmul %0, %44, %cst_23 {dimension_numbers = #tpu.dot_dimension_numbers<[1], [0], [0], [1], [0, 0, 1, 1], [], []>} : vector<16x27xf32>, vector<27x50xf32>, vector<16x50xf32> -> vector<16x50xf32>
    %46 = vector.broadcast %18 : vector<16x1xf32> to vector<16x50xf32>
    %47 = arith.mulf %45, %46 : vector<16x50xf32>
    %48 = vector.broadcast %21 : vector<16x1xf32> to vector<16x50xf32>
    %49 = arith.addf %47, %48 : vector<16x50xf32>
    %50 = math.tanh %49 : vector<16x50xf32>
    %51 = arith.maximumf %43, %50 : vector<16x50xf32>
    %52 = arith.maximumf %36, %51 : vector<16x50xf32>
    %c0_24 = arith.constant 0 : index
    %c0_25 = arith.constant 0 : index
    %53 = vector.load %arg8[%c0_24, %c0_25] : memref<16x50xf32, #tpu.memory_space<vmem>>, vector<16x50xf32>
    tpu.vector_store %arg8[%c0_24, %c0_25], %52 {strides = array<i32>} : memref<16x50xf32, #tpu.memory_space<vmem>>, vector<16x50xf32>,
    return
  }
}

module attributes {stable_mosaic.version = 11 : i64} {
  func.func @_conv_bn_tanh_pool_kernel(%arg0: memref<4x144xf32, #tpu.memory_space<vmem>>, %arg1: memref<4x1xf32, #tpu.memory_space<vmem>>, %arg2: memref<4x1xf32, #tpu.memory_space<vmem>>, %arg3: memref<144x18xf32, #tpu.memory_space<vmem>>, %arg4: memref<144x8xf32, #tpu.memory_space<vmem>>, %arg5: memref<144x8xf32, #tpu.memory_space<vmem>>, %arg6: memref<144x8xf32, #tpu.memory_space<vmem>>, %arg7: memref<144x8xf32, #tpu.memory_space<vmem>>, %arg8: memref<4x8xf32, #tpu.memory_space<vmem>>) attributes {dimension_semantics = [], scalar_prefetch = 0 : i64, scratch_operands = 0 : i64, tpu.core_type = #tpu.core_type<tc>} {
    %c0 = arith.constant 0 : index
    %c0_0 = arith.constant 0 : index
    %0 = vector.load %arg0[%c0, %c0_0] : memref<4x144xf32, #tpu.memory_space<vmem>>, vector<4x144xf32>
    %c0_1 = arith.constant 0 : index
    %c0_2 = arith.constant 0 : index
    %1 = vector.load %arg3[%c0_1, %c0_2] : memref<144x18xf32, #tpu.memory_space<vmem>>, vector<144x18xf32>
    %cst = arith.constant dense<0.000000e+00> : vector<4x18xf32>
    %2 = tpu.matmul %0, %1, %cst {dimension_numbers = #tpu.dot_dimension_numbers<[1], [0], [0], [1], [0, 0, 1, 1], [], []>} : vector<4x144xf32>, vector<144x18xf32>, vector<4x18xf32> -> vector<4x18xf32>
    %cst_3 = arith.constant dense<0.000000e+00> : vector<4xf32>
    %3 = vector.multi_reduction <add>, %2, %cst_3 [1] : vector<4x18xf32> to vector<4xf32>
    %4 = vector.shape_cast %3 : vector<4xf32> to vector<4x1xf32>
    %cst_4 = arith.constant 1.800000e+01 : f32
    %5 = vector.broadcast %cst_4 : f32 to vector<4x1xf32>
    %6 = arith.divf %4, %5 : vector<4x1xf32>
    %7 = vector.broadcast %6 : vector<4x1xf32> to vector<4x18xf32>
    %8 = arith.subf %2, %7 : vector<4x18xf32>
    %9 = arith.mulf %8, %8 : vector<4x18xf32>
    %cst_5 = arith.constant dense<0.000000e+00> : vector<4xf32>
    %10 = vector.multi_reduction <add>, %9, %cst_5 [1] : vector<4x18xf32> to vector<4xf32>
    %11 = vector.shape_cast %10 : vector<4xf32> to vector<4x1xf32>
    %cst_6 = arith.constant 1.800000e+01 : f32
    %12 = vector.broadcast %cst_6 : f32 to vector<4x1xf32>
    %13 = arith.divf %11, %12 : vector<4x1xf32>
    %cst_7 = arith.constant 9.99999974E-6 : f32
    %14 = vector.broadcast %cst_7 : f32 to vector<4x1xf32>
    %15 = arith.addf %13, %14 : vector<4x1xf32>
    %16 = math.rsqrt %15 : vector<4x1xf32>
    %c0_8 = arith.constant 0 : index
    %c0_9 = arith.constant 0 : index
    %17 = vector.load %arg1[%c0_8, %c0_9] : memref<4x1xf32, #tpu.memory_space<vmem>>, vector<4x1xf32>
    %18 = arith.mulf %17, %16 : vector<4x1xf32>
    %c0_10 = arith.constant 0 : index
    %c0_11 = arith.constant 0 : index
    %19 = vector.load %arg2[%c0_10, %c0_11] : memref<4x1xf32, #tpu.memory_space<vmem>>, vector<4x1xf32>
    %20 = arith.mulf %6, %18 : vector<4x1xf32>
    %21 = arith.subf %19, %20 : vector<4x1xf32>
    %c0_12 = arith.constant 0 : index
    %c0_13 = arith.constant 0 : index
    %22 = vector.load %arg4[%c0_12, %c0_13] : memref<144x8xf32, #tpu.memory_space<vmem>>, vector<144x8xf32>
    %cst_14 = arith.constant dense<0.000000e+00> : vector<4x8xf32>
    %23 = tpu.matmul %0, %22, %cst_14 {dimension_numbers = #tpu.dot_dimension_numbers<[1], [0], [0], [1], [0, 0, 1, 1], [], []>} : vector<4x144xf32>, vector<144x8xf32>, vector<4x8xf32> -> vector<4x8xf32>
    %24 = vector.broadcast %18 : vector<4x1xf32> to vector<4x8xf32>
    %25 = arith.mulf %23, %24 : vector<4x8xf32>
    %26 = vector.broadcast %21 : vector<4x1xf32> to vector<4x8xf32>
    %27 = arith.addf %25, %26 : vector<4x8xf32>
    %28 = math.tanh %27 : vector<4x8xf32>
    %c0_15 = arith.constant 0 : index
    %c0_16 = arith.constant 0 : index
    %29 = vector.load %arg5[%c0_15, %c0_16] : memref<144x8xf32, #tpu.memory_space<vmem>>, vector<144x8xf32>
    %cst_17 = arith.constant dense<0.000000e+00> : vector<4x8xf32>
    %30 = tpu.matmul %0, %29, %cst_17 {dimension_numbers = #tpu.dot_dimension_numbers<[1], [0], [0], [1], [0, 0, 1, 1], [], []>} : vector<4x144xf32>, vector<144x8xf32>, vector<4x8xf32> -> vector<4x8xf32>
    %31 = vector.broadcast %18 : vector<4x1xf32> to vector<4x8xf32>
    %32 = arith.mulf %30, %31 : vector<4x8xf32>
    %33 = vector.broadcast %21 : vector<4x1xf32> to vector<4x8xf32>
    %34 = arith.addf %32, %33 : vector<4x8xf32>
    %35 = math.tanh %34 : vector<4x8xf32>
    %36 = arith.maximumf %28, %35 : vector<4x8xf32>
    %c0_18 = arith.constant 0 : index
    %c0_19 = arith.constant 0 : index
    %37 = vector.load %arg6[%c0_18, %c0_19] : memref<144x8xf32, #tpu.memory_space<vmem>>, vector<144x8xf32>
    %cst_20 = arith.constant dense<0.000000e+00> : vector<4x8xf32>
    %38 = tpu.matmul %0, %37, %cst_20 {dimension_numbers = #tpu.dot_dimension_numbers<[1], [0], [0], [1], [0, 0, 1, 1], [], []>} : vector<4x144xf32>, vector<144x8xf32>, vector<4x8xf32> -> vector<4x8xf32>
    %39 = vector.broadcast %18 : vector<4x1xf32> to vector<4x8xf32>
    %40 = arith.mulf %38, %39 : vector<4x8xf32>
    %41 = vector.broadcast %21 : vector<4x1xf32> to vector<4x8xf32>
    %42 = arith.addf %40, %41 : vector<4x8xf32>
    %43 = math.tanh %42 : vector<4x8xf32>
    %c0_21 = arith.constant 0 : index
    %c0_22 = arith.constant 0 : index
    %44 = vector.load %arg7[%c0_21, %c0_22] : memref<144x8xf32, #tpu.memory_space<vmem>>, vector<144x8xf32>
    %cst_23 = arith.constant dense<0.000000e+00> : vector<4x8xf32>
    %45 = tpu.matmul %0, %44, %cst_23 {dimension_numbers = #tpu.dot_dimension_numbers<[1], [0], [0], [1], [0, 0, 1, 1], [], []>} : vector<4x144xf32>, vector<144x8xf32>, vector<4x8xf32> -> vector<4x8xf32>
    %46 = vector.broadcast %18 : vector<4x1xf32> to vector<4x8xf32>
    %47 = arith.mulf %45, %46 : vector<4x8xf32>
    %48 = vector.broadcast %21 : vector<4x1xf32> to vector<4x8xf32>
    %49 = arith.addf %47, %48 : vector<4x8xf32>
    %50 = math.tanh %49 : vector<4x8xf32>
    %51 = arith.maximumf %43, %50 : vector<4x8xf32>
    %52 = arith.maximumf %36, %51 : vector<4x8xf32>
    %c0_24 = arith.constant 0 : index
    %c0_25 = arith.constant 0 : index
    %53 = vector.load %arg8[%c0_24, %c0_25] : memref<4x8xf32, #tpu.memory_space<vmem>>, vector<4x8xf32>
    tpu.vector_store %arg8[%c0_24, %c0_25], %52 {strides = array<i32>} : memref<4x8xf32, #tpu.memory_space<vmem>>, vector<4x8xf32>,
    return
  }
}

module attributes {stable_mosaic.version = 11 : i64} {
  func.func @_conv_bn_tanh_kernel(%arg0: memref<16x36xf32, #tpu.memory_space<vmem>>, %arg1: memref<16x1xf32, #tpu.memory_space<vmem>>, %arg2: memref<16x1xf32, #tpu.memory_space<vmem>>, %arg3: memref<36x50xf32, #tpu.memory_space<vmem>>, %arg4: memref<16x50xf32, #tpu.memory_space<vmem>>) attributes {dimension_semantics = [], scalar_prefetch = 0 : i64, scratch_operands = 0 : i64, tpu.core_type = #tpu.core_type<tc>} {
    %c0 = arith.constant 0 : index
    %c0_0 = arith.constant 0 : index
    %0 = vector.load %arg0[%c0, %c0_0] : memref<16x36xf32, #tpu.memory_space<vmem>>, vector<16x36xf32>
    %c0_1 = arith.constant 0 : index
    %c0_2 = arith.constant 0 : index
    %1 = vector.load %arg3[%c0_1, %c0_2] : memref<36x50xf32, #tpu.memory_space<vmem>>, vector<36x50xf32>
    %cst = arith.constant dense<0.000000e+00> : vector<16x50xf32>
    %2 = tpu.matmul %0, %1, %cst {dimension_numbers = #tpu.dot_dimension_numbers<[1], [0], [0], [1], [0, 0, 1, 1], [], []>} : vector<16x36xf32>, vector<36x50xf32>, vector<16x50xf32> -> vector<16x50xf32>
    %cst_3 = arith.constant dense<0.000000e+00> : vector<16xf32>
    %3 = vector.multi_reduction <add>, %2, %cst_3 [1] : vector<16x50xf32> to vector<16xf32>
    %4 = vector.shape_cast %3 : vector<16xf32> to vector<16x1xf32>
    %cst_4 = arith.constant 5.000000e+01 : f32
    %5 = vector.broadcast %cst_4 : f32 to vector<16x1xf32>
    %6 = arith.divf %4, %5 : vector<16x1xf32>
    %7 = vector.broadcast %6 : vector<16x1xf32> to vector<16x50xf32>
    %8 = arith.subf %2, %7 : vector<16x50xf32>
    %9 = arith.mulf %8, %8 : vector<16x50xf32>
    %cst_5 = arith.constant dense<0.000000e+00> : vector<16xf32>
    %10 = vector.multi_reduction <add>, %9, %cst_5 [1] : vector<16x50xf32> to vector<16xf32>
    %11 = vector.shape_cast %10 : vector<16xf32> to vector<16x1xf32>
    %cst_6 = arith.constant 5.000000e+01 : f32
    %12 = vector.broadcast %cst_6 : f32 to vector<16x1xf32>
    %13 = arith.divf %11, %12 : vector<16x1xf32>
    %cst_7 = arith.constant 9.99999974E-6 : f32
    %14 = vector.broadcast %cst_7 : f32 to vector<16x1xf32>
    %15 = arith.addf %13, %14 : vector<16x1xf32>
    %16 = math.rsqrt %15 : vector<16x1xf32>
    %17 = vector.broadcast %6 : vector<16x1xf32> to vector<16x50xf32>
    %18 = arith.subf %2, %17 : vector<16x50xf32>
    %19 = vector.broadcast %16 : vector<16x1xf32> to vector<16x50xf32>
    %20 = arith.mulf %18, %19 : vector<16x50xf32>
    %c0_8 = arith.constant 0 : index
    %c0_9 = arith.constant 0 : index
    %21 = vector.load %arg1[%c0_8, %c0_9] : memref<16x1xf32, #tpu.memory_space<vmem>>, vector<16x1xf32>
    %22 = vector.broadcast %21 : vector<16x1xf32> to vector<16x50xf32>
    %23 = arith.mulf %20, %22 : vector<16x50xf32>
    %c0_10 = arith.constant 0 : index
    %c0_11 = arith.constant 0 : index
    %24 = vector.load %arg2[%c0_10, %c0_11] : memref<16x1xf32, #tpu.memory_space<vmem>>, vector<16x1xf32>
    %25 = vector.broadcast %24 : vector<16x1xf32> to vector<16x50xf32>
    %26 = arith.addf %23, %25 : vector<16x50xf32>
    %27 = math.tanh %26 : vector<16x50xf32>
    %c0_12 = arith.constant 0 : index
    %c0_13 = arith.constant 0 : index
    %28 = vector.load %arg4[%c0_12, %c0_13] : memref<16x50xf32, #tpu.memory_space<vmem>>, vector<16x50xf32>
    tpu.vector_store %arg4[%c0_12, %c0_13], %27 {strides = array<i32>} : memref<16x50xf32, #tpu.memory_space<vmem>>, vector<16x50xf32>,
    return
  }
}

module attributes {stable_mosaic.version = 11 : i64} {
  func.func @_conv_bn_tanh_kernel(%arg0: memref<8x400xf32, #tpu.memory_space<vmem>>, %arg1: memref<8x1xf32, #tpu.memory_space<vmem>>, %arg2: memref<8x1xf32, #tpu.memory_space<vmem>>, %arg3: memref<400x450xf32, #tpu.memory_space<vmem>>, %arg4: memref<8x450xf32, #tpu.memory_space<vmem>>) attributes {dimension_semantics = [], scalar_prefetch = 0 : i64, scratch_operands = 0 : i64, tpu.core_type = #tpu.core_type<tc>} {
    %c0 = arith.constant 0 : index
    %c0_0 = arith.constant 0 : index
    %0 = vector.load %arg0[%c0, %c0_0] : memref<8x400xf32, #tpu.memory_space<vmem>>, vector<8x400xf32>
    %c0_1 = arith.constant 0 : index
    %c0_2 = arith.constant 0 : index
    %1 = vector.load %arg3[%c0_1, %c0_2] : memref<400x450xf32, #tpu.memory_space<vmem>>, vector<400x450xf32>
    %cst = arith.constant dense<0.000000e+00> : vector<8x450xf32>
    %2 = tpu.matmul %0, %1, %cst {dimension_numbers = #tpu.dot_dimension_numbers<[1], [0], [0], [1], [0, 0, 1, 1], [], []>} : vector<8x400xf32>, vector<400x450xf32>, vector<8x450xf32> -> vector<8x450xf32>
    %cst_3 = arith.constant dense<0.000000e+00> : vector<8xf32>
    %3 = vector.multi_reduction <add>, %2, %cst_3 [1] : vector<8x450xf32> to vector<8xf32>
    %4 = vector.shape_cast %3 : vector<8xf32> to vector<8x1xf32>
    %cst_4 = arith.constant 4.500000e+02 : f32
    %5 = vector.broadcast %cst_4 : f32 to vector<8x1xf32>
    %6 = arith.divf %4, %5 : vector<8x1xf32>
    %7 = vector.broadcast %6 : vector<8x1xf32> to vector<8x450xf32>
    %8 = arith.subf %2, %7 : vector<8x450xf32>
    %9 = arith.mulf %8, %8 : vector<8x450xf32>
    %cst_5 = arith.constant dense<0.000000e+00> : vector<8xf32>
    %10 = vector.multi_reduction <add>, %9, %cst_5 [1] : vector<8x450xf32> to vector<8xf32>
    %11 = vector.shape_cast %10 : vector<8xf32> to vector<8x1xf32>
    %cst_6 = arith.constant 4.500000e+02 : f32
    %12 = vector.broadcast %cst_6 : f32 to vector<8x1xf32>
    %13 = arith.divf %11, %12 : vector<8x1xf32>
    %cst_7 = arith.constant 9.99999974E-6 : f32
    %14 = vector.broadcast %cst_7 : f32 to vector<8x1xf32>
    %15 = arith.addf %13, %14 : vector<8x1xf32>
    %16 = math.rsqrt %15 : vector<8x1xf32>
    %17 = vector.broadcast %6 : vector<8x1xf32> to vector<8x450xf32>
    %18 = arith.subf %2, %17 : vector<8x450xf32>
    %19 = vector.broadcast %16 : vector<8x1xf32> to vector<8x450xf32>
    %20 = arith.mulf %18, %19 : vector<8x450xf32>
    %c0_8 = arith.constant 0 : index
    %c0_9 = arith.constant 0 : index
    %21 = vector.load %arg1[%c0_8, %c0_9] : memref<8x1xf32, #tpu.memory_space<vmem>>, vector<8x1xf32>
    %22 = vector.broadcast %21 : vector<8x1xf32> to vector<8x450xf32>
    %23 = arith.mulf %20, %22 : vector<8x450xf32>
    %c0_10 = arith.constant 0 : index
    %c0_11 = arith.constant 0 : index
    %24 = vector.load %arg2[%c0_10, %c0_11] : memref<8x1xf32, #tpu.memory_space<vmem>>, vector<8x1xf32>
    %25 = vector.broadcast %24 : vector<8x1xf32> to vector<8x450xf32>
    %26 = arith.addf %23, %25 : vector<8x450xf32>
    %27 = math.tanh %26 : vector<8x450xf32>
    %c0_12 = arith.constant 0 : index
    %c0_13 = arith.constant 0 : index
    %28 = vector.load %arg4[%c0_12, %c0_13] : memref<8x450xf32, #tpu.memory_space<vmem>>, vector<8x450xf32>
    tpu.vector_store %arg4[%c0_12, %c0_13], %27 {strides = array<i32>} : memref<8x450xf32, #tpu.memory_space<vmem>>, vector<8x450xf32>,
    return
  }
}

module attributes {stable_mosaic.version = 11 : i64} {
  func.func @_conv_bn_tanh_kernel(%arg0: memref<3x32xf32, #tpu.memory_space<vmem>>, %arg1: memref<3x1xf32, #tpu.memory_space<vmem>>, %arg2: memref<3x1xf32, #tpu.memory_space<vmem>>, %arg3: memref<32x1568xf32, #tpu.memory_space<vmem>>, %arg4: memref<3x1568xf32, #tpu.memory_space<vmem>>) attributes {dimension_semantics = [], scalar_prefetch = 0 : i64, scratch_operands = 0 : i64, tpu.core_type = #tpu.core_type<tc>} {
    %c0 = arith.constant 0 : index
    %c0_0 = arith.constant 0 : index
    %0 = vector.load %arg0[%c0, %c0_0] : memref<3x32xf32, #tpu.memory_space<vmem>>, vector<3x32xf32>
    %c0_1 = arith.constant 0 : index
    %c0_2 = arith.constant 0 : index
    %1 = vector.load %arg3[%c0_1, %c0_2] : memref<32x1568xf32, #tpu.memory_space<vmem>>, vector<32x1568xf32>
    %cst = arith.constant dense<0.000000e+00> : vector<3x1568xf32>
    %2 = tpu.matmul %0, %1, %cst {dimension_numbers = #tpu.dot_dimension_numbers<[1], [0], [0], [1], [0, 0, 1, 1], [], []>} : vector<3x32xf32>, vector<32x1568xf32>, vector<3x1568xf32> -> vector<3x1568xf32>
    %cst_3 = arith.constant dense<0.000000e+00> : vector<3xf32>
    %3 = vector.multi_reduction <add>, %2, %cst_3 [1] : vector<3x1568xf32> to vector<3xf32>
    %4 = vector.shape_cast %3 : vector<3xf32> to vector<3x1xf32>
    %cst_4 = arith.constant 1.568000e+03 : f32
    %5 = vector.broadcast %cst_4 : f32 to vector<3x1xf32>
    %6 = arith.divf %4, %5 : vector<3x1xf32>
    %7 = vector.broadcast %6 : vector<3x1xf32> to vector<3x1568xf32>
    %8 = arith.subf %2, %7 : vector<3x1568xf32>
    %9 = arith.mulf %8, %8 : vector<3x1568xf32>
    %cst_5 = arith.constant dense<0.000000e+00> : vector<3xf32>
    %10 = vector.multi_reduction <add>, %9, %cst_5 [1] : vector<3x1568xf32> to vector<3xf32>
    %11 = vector.shape_cast %10 : vector<3xf32> to vector<3x1xf32>
    %cst_6 = arith.constant 1.568000e+03 : f32
    %12 = vector.broadcast %cst_6 : f32 to vector<3x1xf32>
    %13 = arith.divf %11, %12 : vector<3x1xf32>
    %cst_7 = arith.constant 9.99999974E-6 : f32
    %14 = vector.broadcast %cst_7 : f32 to vector<3x1xf32>
    %15 = arith.addf %13, %14 : vector<3x1xf32>
    %16 = math.rsqrt %15 : vector<3x1xf32>
    %17 = vector.broadcast %6 : vector<3x1xf32> to vector<3x1568xf32>
    %18 = arith.subf %2, %17 : vector<3x1568xf32>
    %19 = vector.broadcast %16 : vector<3x1xf32> to vector<3x1568xf32>
    %20 = arith.mulf %18, %19 : vector<3x1568xf32>
    %c0_8 = arith.constant 0 : index
    %c0_9 = arith.constant 0 : index
    %21 = vector.load %arg1[%c0_8, %c0_9] : memref<3x1xf32, #tpu.memory_space<vmem>>, vector<3x1xf32>
    %22 = vector.broadcast %21 : vector<3x1xf32> to vector<3x1568xf32>
    %23 = arith.mulf %20, %22 : vector<3x1568xf32>
    %c0_10 = arith.constant 0 : index
    %c0_11 = arith.constant 0 : index
    %24 = vector.load %arg2[%c0_10, %c0_11] : memref<3x1xf32, #tpu.memory_space<vmem>>, vector<3x1xf32>
    %25 = vector.broadcast %24 : vector<3x1xf32> to vector<3x1568xf32>
    %26 = arith.addf %23, %25 : vector<3x1568xf32>
    %27 = math.tanh %26 : vector<3x1568xf32>
    %c0_12 = arith.constant 0 : index
    %c0_13 = arith.constant 0 : index
    %28 = vector.load %arg4[%c0_12, %c0_13] : memref<3x1568xf32, #tpu.memory_space<vmem>>, vector<3x1568xf32>
    tpu.vector_store %arg4[%c0_12, %c0_13], %27 {strides = array<i32>} : memref<3x1568xf32, #tpu.memory_space<vmem>>, vector<3x1568xf32>,
    return
  }
}

</mosaic_0001>

<llo_original>
// kernel: cnnae_forward.5
$region0: #{cnnae_forward.5}
  #allocation0 [shape = 'u32[]', space=smem, size = 0x4, offset = 0x4, fixed_abs, tag = 'smem constant byte address 0x4 - core index']
  #allocation1 [shape = 'u32[144,128]{1,0:T(1,128)}', space=vmem, size = 0x12000, scoped, tag = 'internal scratch']
  %s0 = inlined_call_operand.vmem [shape: f32[16,27], index: 0, kind: input, shape index: {}]
  %s1 = inlined_call_operand.vmem [shape: f32[16,1], index: 1, kind: input, shape index: {}]
  %s2 = inlined_call_operand.vmem [shape: f32[16,1], index: 2, kind: input, shape index: {}]
  %s3 = inlined_call_operand.vmem [shape: f32[27,200], index: 3, kind: input, shape index: {}]
  %s4 = inlined_call_operand.vmem [shape: f32[27,50], index: 4, kind: input, shape index: {}]
  %s5 = inlined_call_operand.vmem [shape: f32[27,50], index: 5, kind: input, shape index: {}]
  %s6 = inlined_call_operand.vmem [shape: f32[27,50], index: 6, kind: input, shape index: {}]
  %s7 = inlined_call_operand.vmem [shape: f32[27,50], index: 7, kind: input, shape index: {}]
  %s8 = inlined_call_operand.vmem [shape: f32[16,50], index: 8, kind: output, shape index: {}]
  %s9 = sld [smem:[#allocation0]]
  $region42: #{cnnae_forward.5} parent=0
    _
  %s11 = ssub.s32 1, %s9
  %s12 = scalar_select 0, %s11, %s9
  // Predicated region
  $region2: #{cnnae_forward.5} parent=0 // pred_check
    _
  $region3: #{cnnae_forward.5} parent=0 // pred_check_branch
    %14 = sbr.rel (0) target = $region5
  $region4: #{cnnae_forward.5} parent=0 // pred_region
    _
  $region5: #{cnnae_forward.5} parent=0 // pred_fallthru
    _
  // Predicated region
  $region6: #{cnnae_forward.5} parent=0 // pred_check
    _
  $region7: #{cnnae_forward.5} parent=0 // pred_check_branch
    %16 = sbr.rel (0) target = $region9
  $region8: #{cnnae_forward.5} parent=0 // pred_region
    _
  $region9: #{cnnae_forward.5} parent=0 // pred_fallthru
    _
  // Predicated region
  $region10: #{cnnae_forward.5} parent=0 // pred_check
    _
  $region11: #{cnnae_forward.5} parent=0 // pred_check_branch
    %18 = sbr.rel (0) target = $region13
  $region12: #{cnnae_forward.5} parent=0 // pred_region
    _
  $region13: #{cnnae_forward.5} parent=0 // pred_fallthru
    _
  // Predicated region
  $region14: #{cnnae_forward.5} parent=0 // pred_check
    _
  $region15: #{cnnae_forward.5} parent=0 // pred_check_branch
    %20 = sbr.rel (0) target = $region17
  $region16: #{cnnae_forward.5} parent=0 // pred_region
    _
  $region17: #{cnnae_forward.5} parent=0 // pred_fallthru
    _
  // Predicated region
  $region18: #{cnnae_forward.5} parent=0 // pred_check
    _
  $region19: #{cnnae_forward.5} parent=0 // pred_check_branch
    %22 = sbr.rel (0) target = $region21
  $region20: #{cnnae_forward.5} parent=0 // pred_region
    _
  $region21: #{cnnae_forward.5} parent=0 // pred_fallthru
    _
  // Predicated region
  $region22: #{cnnae_forward.5} parent=0 // pred_check
    _
  $region23: #{cnnae_forward.5} parent=0 // pred_check_branch
    %24 = sbr.rel (0) target = $region25
  $region24: #{cnnae_forward.5} parent=0 // pred_region
    _
  $region25: #{cnnae_forward.5} parent=0 // pred_fallthru
    _
  // Predicated region
  $region26: #{cnnae_forward.5} parent=0 // pred_check
    _
  $region27: #{cnnae_forward.5} parent=0 // pred_check_branch
    %26 = sbr.rel (0) target = $region29
  $region28: #{cnnae_forward.5} parent=0 // pred_region
    _
  $region29: #{cnnae_forward.5} parent=0 // pred_fallthru
    _
  // Predicated region
  $region30: #{cnnae_forward.5} parent=0 // pred_check
    _
  $region31: #{cnnae_forward.5} parent=0 // pred_check_branch
    %28 = sbr.rel (0) target = $region33
  $region32: #{cnnae_forward.5} parent=0 // pred_region
    _
  $region33: #{cnnae_forward.5} parent=0 // pred_fallthru
    _
  %v29 = vld [vmem:[%s0] sm:$0xff]
  %v30 = vld [vmem:[%s0 + $0x8] sm:$0xff]
  %v31 = vld [vmem:[%s3] sm:$0xff]
  %v32 = vld [vmem:[%s3 + $0x8] sm:$0xff]
  %v33 = vld [vmem:[%s3 + $0x10] sm:$0xff]
  %v34 = vld [vmem:[%s3 + $0x18] sm:$0xff]
  %v35 = vld [vmem:[%s3 + $0x20] sm:$0xff]
  %v36 = vld [vmem:[%s3 + $0x28] sm:$0xff]
  %v37 = vld [vmem:[%s3 + $0x30] sm:$0x7]
  %v38 = vld [vmem:[%s3 + $0x38] sm:$0x7]
  %vm39 = vcmask 220160
  %v41 = vsel %vm39, %v29, 0
  %v44 = vsel %vm39, %v30, 0
  %vm46 = vcmask 1042432
  %v48 = vsel %vm46, %v37, 0
  %v51 = vsel %vm46, %v38, 0
  %53 = vmatprep.subr.mxu0 %v32
  %54 = vmatpush1.msra.mxu0 %v31
  %55 = vmatprep.subr.mxu0 %v34
  %56 = vmatpush1.msra.mxu0 %v33
  %57 = vmatprep.subr.mxu0 %v36
  %58 = vmatpush1.msra.mxu0 %v35
  %59 = vmatprep.subr.mxu0 %v51
  %60 = vmatpush1.msra.mxu0 %v48
  %61 = vmatprep.subr.mxu0 0.0
  %62 = vmatpush1.msra.mxu0 0.0
  %63 = vmatprep.subr.mxu0 0.0
  %64 = vmatpush1.msra.mxu0 0.0
  %65 = vmatprep.subr.mxu0 0.0
  %66 = vmatpush1.msra.mxu0 0.0
  %67 = vmatprep.subr.mxu0 0.0
  %68 = vmatpush1.msra.mxu0 0.0
  %69 = vmatprep.subr.mxu0 0.0
  %70 = vmatpush1.msra.mxu0 0.0
  %71 = vmatprep.subr.mxu0 0.0
  %72 = vmatpush1.msra.mxu0 0.0
  %73 = vmatprep.subr.mxu0 0.0
  %74 = vmatpush1.msra.mxu0 0.0
  %75 = vmatprep.subr.mxu0 0.0
  %76 = vmatpush1.msra.mxu0 0.0
  %77 = vmatprep.subr.mxu0 0.0
  %78 = vmatpush1.msra.mxu0 0.0
  %79 = vmatprep.subr.mxu0 0.0
  %80 = vmatpush1.msra.mxu0 0.0
  %81 = vmatprep.subr.mxu0 0.0
  %82 = vmatpush1.msra.mxu0 0.0
  %83 = vmatprep.subr.mxu0 0.0
  %84 = vmatpush1.msra.mxu0 0.0
  %85 = vmatprep.subr.mxu0 0.0
  %86 = vmatpush1.msra.mxu0 0.0
  %87 = vmatprep.subr.mxu0 0.0
  %88 = vmatpush1.msra.mxu0 0.0
  %89 = vmatprep.subr.mxu0 0.0
  %90 = vmatpush1.msra.mxu0 0.0
  %91 = vmatprep.subr.mxu0 0.0
  %92 = vmatpush1.msra.mxu0 0.0
  %93 = vmatprep.subr.mxu0 0.0
  %94 = vmatpush1.msra.mxu0 0.0
  %95 = vmatprep.subr.mxu0 0.0
  %96 = vmatpush1.msra.mxu0 0.0
  %97 = vmatprep.subr.mxu0 0.0
  %98 = vmatpush1.msra.mxu0 0.0
  %99 = vmatprep.subr.mxu0 0.0
  %100 = vmatpush1.msra.mxu0 0.0
  %101 = vmatprep.subr.mxu0 0.0
  %102 = vmatpush1.msra.mxu0 0.0
  %103 = vmatprep.subr.mxu0 0.0
  %104 = vmatpush1.msra.mxu0 0.0
  %105 = vmatprep.subr.mxu0 0.0
  %106 = vmatpush1.msra.mxu0 0.0
  %107 = vmatprep.subr.mxu0 0.0
  %108 = vmatpush1.msra.mxu0 0.0
  %109 = vmatprep.subr.mxu0 0.0
  %110 = vmatpush1.msra.mxu0 0.0
  %111 = vmatprep.subr.mxu0 0.0
  %112 = vmatpush1.msra.mxu0 0.0
  %113 = vmatprep.subr.mxu0 0.0
  %114 = vmatpush1.msra.mxu0 0.0
  %115 = vmatprep.subr.mxu0 0.0
  %116 = vmatpush1.msra.mxu0 0.0
  %117 = vmatprep.mubr.f32.mxu0 0.0
  %118 = vmatmul.mubr.f32.gmra.mrb[0].mxu0 %v41
  %v119 = vpop.f32.mrb[0].mxu0
  %v120 = vadd.f32 0.0, %v119
  %v121 = vpop.f32.mrb[0].mxu0
  %v122 = vadd.f32 0.0, %v121
  %123 = vmatprep.mubr.f32.mxu0 0.0
  %124 = vmatmul.mubr.f32.gmra.mrb[0].mxu0 %v44
  %v125 = vpop.f32.mrb[0].mxu0
  %v126 = vadd.f32 0.0, %v125
  %v127 = vpop.f32.mrb[0].mxu0
  %v128 = vadd.f32 0.0, %v127
  %129 = vdwg.mxu0
  %vm130 = vcmask 588800
  %v131 = vsel %vm130, %v122, 0.0
  %v132 = vadd.f32 %v120, %v131
  %133 = vadd.xlane.f32.xlu0 %v132
  %v134 = vpop.xlane.xlu0 %133
  %v135 = vsel %vm130, %v128, 0.0
  %v136 = vadd.f32 %v126, %v135
  %137 = vadd.xlane.f32.xlu0 %v136
  %v138 = vpop.xlane.xlu0 %137
  %v139 = vrcp.pop 200.0
  %v140 = vmul.f32 %v134, %v139
  %v141 = vmul.f32 %v138, %v139
  %v142 = vsub.f32 %v120, %v140
  %v143 = vsub.f32 %v122, %v140
  %v144 = vsub.f32 %v126, %v141
  %v145 = vsub.f32 %v128, %v141
  %v146 = vmul.f32 %v142, %v142
  %v147 = vmul.f32 %v143, %v143
  %v148 = vmul.f32 %v144, %v144
  %v149 = vmul.f32 %v145, %v145
  %v150 = vsel %vm130, %v147, 0.0
  %v151 = vadd.f32 %v146, %v150
  %152 = vadd.xlane.f32.xlu0 %v151
  %v153 = vpop.xlane.xlu0 %152
  %v154 = vsel %vm130, %v149, 0.0
  %v155 = vadd.f32 %v148, %v154
  %156 = vadd.xlane.f32.xlu0 %v155
  %v157 = vpop.xlane.xlu0 %156
  %v158 = vmul.f32 %v153, %v139
  %v159 = vmul.f32 %v157, %v139
  %v160 = vadd.f32 %v158, 1e-05
  %v161 = vadd.f32 %v159, 1e-05
  %v162 = vrsqrt.pop %v160
  %v163 = vrsqrt.pop %v161
  %v164 = vld [vmem:[%s1] sm:$0xff]
  %v165 = vld [vmem:[%s1 + $0x8] sm:$0xff]
  %v166 = vmul.f32 %v164, %v162
  %v167 = vmul.f32 %v165, %v163
  %v168 = vld [vmem:[%s2] sm:$0xff]
  %v169 = vld [vmem:[%s2 + $0x8] sm:$0xff]
  %v170 = vmul.f32 %v140, %v166
  %v171 = vmul.f32 %v141, %v167
  %v172 = vsub.f32 %v168, %v170
  %v173 = vsub.f32 %v169, %v171
  %v174 = vld [vmem:[%s4] sm:$0xff]
  %v175 = vld [vmem:[%s4 + $0x8] sm:$0xff]
  %v176 = vld [vmem:[%s4 + $0x10] sm:$0xff]
  %v177 = vld [vmem:[%s4 + $0x18] sm:$0x7]
  %v179 = vsel %vm46, %v177, 0
  %181 = vmatprep.subr.mxu0 0.0
  %182 = vmatpush1.msra.mxu0 %v174
  %183 = vmatprep.subr.mxu0 0.0
  %184 = vmatpush1.msra.mxu0 %v175
  %185 = vmatprep.subr.mxu0 0.0
  %186 = vmatpush1.msra.mxu0 %v176
  %187 = vmatprep.subr.mxu0 0.0
  %188 = vmatpush1.msra.mxu0 %v179
  %189 = vmatprep.subr.mxu0 0.0
  %190 = vmatpush1.msra.mxu0 0.0
  %191 = vmatprep.subr.mxu0 0.0
  %192 = vmatpush1.msra.mxu0 0.0
  %193 = vmatprep.subr.mxu0 0.0
  %194 = vmatpush1.msra.mxu0 0.0
  %195 = vmatprep.subr.mxu0 0.0
  %196 = vmatpush1.msra.mxu0 0.0
  %197 = vmatprep.subr.mxu0 0.0
  %198 = vmatpush1.msra.mxu0 0.0
  %199 = vmatprep.subr.mxu0 0.0
  %200 = vmatpush1.msra.mxu0 0.0
  %201 = vmatprep.subr.mxu0 0.0
  %202 = vmatpush1.msra.mxu0 0.0
  %203 = vmatprep.subr.mxu0 0.0
  %204 = vmatpush1.msra.mxu0 0.0
  %205 = vmatprep.subr.mxu0 0.0
  %206 = vmatpush1.msra.mxu0 0.0
  %207 = vmatprep.subr.mxu0 0.0
  %208 = vmatpush1.msra.mxu0 0.0
  %209 = vmatprep.subr.mxu0 0.0
  %210 = vmatpush1.msra.mxu0 0.0
  %211 = vmatprep.subr.mxu0 0.0
  %212 = vmatpush1.msra.mxu0 0.0
  %213 = vmatprep.subr.mxu0 0.0
  %214 = vmatpush1.msra.mxu0 0.0
  %215 = vmatprep.subr.mxu0 0.0
  %216 = vmatpush1.msra.mxu0 0.0
  %217 = vmatprep.subr.mxu0 0.0
  %218 = vmatpush1.msra.mxu0 0.0
  %219 = vmatprep.subr.mxu0 0.0
  %220 = vmatpush1.msra.mxu0 0.0
  %221 = vmatprep.subr.mxu0 0.0
  %222 = vmatpush1.msra.mxu0 0.0
  %223 = vmatprep.subr.mxu0 0.0
  %224 = vmatpush1.msra.mxu0 0.0
  %225 = vmatprep.subr.mxu0 0.0
  %226 = vmatpush1.msra.mxu0 0.0
  %227 = vmatprep.subr.mxu0 0.0
  %228 = vmatpush1.msra.mxu0 0.0
  %229 = vmatprep.subr.mxu0 0.0
  %230 = vmatpush1.msra.mxu0 0.0
  %231 = vmatprep.subr.mxu0 0.0
  %232 = vmatpush1.msra.mxu0 0.0
  %233 = vmatprep.subr.mxu0 0.0
  %234 = vmatpush1.msra.mxu0 0.0
  %235 = vmatprep.subr.mxu0 0.0
  %236 = vmatpush1.msra.mxu0 0.0
  %237 = vmatprep.subr.mxu0 0.0
  %238 = vmatpush1.msra.mxu0 0.0
  %239 = vmatprep.subr.mxu0 0.0
  %240 = vmatpush1.msra.mxu0 0.0
  %241 = vmatprep.subr.mxu0 0.0
  %242 = vmatpush1.msra.mxu0 0.0
  %243 = vmatprep.subr.mxu0 0.0
  %244 = vmatpush1.msra.mxu0 0.0
  %245 = vmatprep.mubr.f32.mxu0 0.0
  %246 = vmatmul.mubr.f32.gmra.mrb[0].mxu0 %v41
  %v247 = vpop.f32.mrb[0].mxu0
  %v248 = vadd.f32 0.0, %v247
  %v249 = vpop.f32.mrb[0].mxu0
  %250 = vmatprep.mubr.f32.mxu0 0.0
  %251 = vmatmul.mubr.f32.gmra.mrb[0].mxu0 %v44
  %v252 = vpop.f32.mrb[0].mxu0
  %v253 = vadd.f32 0.0, %v252
  %v254 = vpop.f32.mrb[0].mxu0
  %255 = vdwg.mxu0
  %257 = vset.pattern.permute.xlu0 0
  %258 = vperm.xlu0 %257, %v166
  %v259 = vpop.permute.xlu0 %258
  %262 = vset.pattern.permute.xlu0 0
  %263 = vperm.xlu0 %262, %v167
  %v264 = vpop.permute.xlu0 %263
  %v266 = vmul.f32 %v248, %v259
  %v267 = vmul.f32 %v253, %v264
  %269 = vset.pattern.permute.xlu0 0
  %270 = vperm.xlu0 %269, %v172
  %v271 = vpop.permute.xlu0 %270
  %274 = vset.pattern.permute.xlu0 0
  %275 = vperm.xlu0 %274, %v173
  %v276 = vpop.permute.xlu0 %275
  %v278 = vadd.f32 %v266, %v271
  %v279 = vadd.f32 %v267, %v276
  %v280 = vtanh.pop %v278
  %v281 = vtanh.pop %v279
  %v282 = vld [vmem:[%s5] sm:$0xff]
  %v283 = vld [vmem:[%s5 + $0x8] sm:$0xff]
  %v284 = vld [vmem:[%s5 + $0x10] sm:$0xff]
  %v285 = vld [vmem:[%s5 + $0x18] sm:$0x7]
  %v287 = vsel %vm46, %v285, 0
  %289 = vmatprep.subr.mxu0 0.0
  %290 = vmatpush1.msra.mxu0 %v282
  %291 = vmatprep.subr.mxu0 0.0
  %292 = vmatpush1.msra.mxu0 %v283
  %293 = vmatprep.subr.mxu0 0.0
  %294 = vmatpush1.msra.mxu0 %v284
  %295 = vmatprep.subr.mxu0 0.0
  %296 = vmatpush1.msra.mxu0 %v287
  %297 = vmatprep.subr.mxu0 0.0
  %298 = vmatpush1.msra.mxu0 0.0
  %299 = vmatprep.subr.mxu0 0.0
  %300 = vmatpush1.msra.mxu0 0.0
  %301 = vmatprep.subr.mxu0 0.0
  %302 = vmatpush1.msra.mxu0 0.0
  %303 = vmatprep.subr.mxu0 0.0
  %304 = vmatpush1.msra.mxu0 0.0
  %305 = vmatprep.subr.mxu0 0.0
  %306 = vmatpush1.msra.mxu0 0.0
  %307 = vmatprep.subr.mxu0 0.0
  %308 = vmatpush1.msra.mxu0 0.0
  %309 = vmatprep.subr.mxu0 0.0
  %310 = vmatpush1.msra.mxu0 0.0
  %311 = vmatprep.subr.mxu0 0.0
  %312 = vmatpush1.msra.mxu0 0.0
  %313 = vmatprep.subr.mxu0 0.0
  %314 = vmatpush1.msra.mxu0 0.0
  %315 = vmatprep.subr.mxu0 0.0
  %316 = vmatpush1.msra.mxu0 0.0
  %317 = vmatprep.subr.mxu0 0.0
  %318 = vmatpush1.msra.mxu0 0.0
  %319 = vmatprep.subr.mxu0 0.0
  %320 = vmatpush1.msra.mxu0 0.0
  %321 = vmatprep.subr.mxu0 0.0
  %322 = vmatpush1.msra.mxu0 0.0
  %323 = vmatprep.subr.mxu0 0.0
  %324 = vmatpush1.msra.mxu0 0.0
  %325 = vmatprep.subr.mxu0 0.0
  %326 = vmatpush1.msra.mxu0 0.0
  %327 = vmatprep.subr.mxu0 0.0
  %328 = vmatpush1.msra.mxu0 0.0
  %329 = vmatprep.subr.mxu0 0.0
  %330 = vmatpush1.msra.mxu0 0.0
  %331 = vmatprep.subr.mxu0 0.0
  %332 = vmatpush1.msra.mxu0 0.0
  %333 = vmatprep.subr.mxu0 0.0
  %334 = vmatpush1.msra.mxu0 0.0
  %335 = vmatprep.subr.mxu0 0.0
  %336 = vmatpush1.msra.mxu0 0.0
  %337 = vmatprep.subr.mxu0 0.0
  %338 = vmatpush1.msra.mxu0 0.0
  %339 = vmatprep.subr.mxu0 0.0
  %340 = vmatpush1.msra.mxu0 0.0
  %341 = vmatprep.subr.mxu0 0.0
  %342 = vmatpush1.msra.mxu0 0.0
  %343 = vmatprep.subr.mxu0 0.0
  %344 = vmatpush1.msra.mxu0 0.0
  %345 = vmatprep.subr.mxu0 0.0
  %346 = vmatpush1.msra.mxu0 0.0
  %347 = vmatprep.subr.mxu0 0.0
  %348 = vmatpush1.msra.mxu0 0.0
  %349 = vmatprep.subr.mxu0 0.0
  %350 = vmatpush1.msra.mxu0 0.0
  %351 = vmatprep.subr.mxu0 0.0
  %352 = vmatpush1.msra.mxu0 0.0
  %353 = vmatprep.mubr.f32.mxu0 0.0
  %354 = vmatmul.mubr.f32.gmra.mrb[0].mxu0 %v41
  %v355 = vpop.f32.mrb[0].mxu0
  %v356 = vadd.f32 0.0, %v355
  %v357 = vpop.f32.mrb[0].mxu0
  %358 = vmatprep.mubr.f32.mxu0 0.0
  %359 = vmatmul.mubr.f32.gmra.mrb[0].mxu0 %v44
  %v360 = vpop.f32.mrb[0].mxu0
  %v361 = vadd.f32 0.0, %v360
  %v362 = vpop.f32.mrb[0].mxu0
  %363 = vdwg.mxu0
  %v364 = vmul.f32 %v356, %v259
  %v365 = vmul.f32 %v361, %v264
  %v366 = vadd.f32 %v364, %v271
  %v367 = vadd.f32 %v365, %v276
  %v368 = vtanh.pop %v366
  %v369 = vtanh.pop %v367
  %v370 = vmax.f32 %v280, %v368
  %v371 = vmax.f32 %v281, %v369
  %v372 = vld [vmem:[%s6] sm:$0xff]
  %v373 = vld [vmem:[%s6 + $0x8] sm:$0xff]
  %v374 = vld [vmem:[%s6 + $0x10] sm:$0xff]
  %v375 = vld [vmem:[%s6 + $0x18] sm:$0x7]
  %v377 = vsel %vm46, %v375, 0
  %379 = vmatprep.subr.mxu0 0.0
  %380 = vmatpush1.msra.mxu0 %v372
  %381 = vmatprep.subr.mxu0 0.0
  %382 = vmatpush1.msra.mxu0 %v373
  %383 = vmatprep.subr.mxu0 0.0
  %384 = vmatpush1.msra.mxu0 %v374
  %385 = vmatprep.subr.mxu0 0.0
  %386 = vmatpush1.msra.mxu0 %v377
  %387 = vmatprep.subr.mxu0 0.0
  %388 = vmatpush1.msra.mxu0 0.0
  %389 = vmatprep.subr.mxu0 0.0
  %390 = vmatpush1.msra.mxu0 0.0
  %391 = vmatprep.subr.mxu0 0.0
  %392 = vmatpush1.msra.mxu0 0.0
  %393 = vmatprep.subr.mxu0 0.0
  %394 = vmatpush1.msra.mxu0 0.0
  %395 = vmatprep.subr.mxu0 0.0
  %396 = vmatpush1.msra.mxu0 0.0
  %397 = vmatprep.subr.mxu0 0.0
  %398 = vmatpush1.msra.mxu0 0.0
  %399 = vmatprep.subr.mxu0 0.0
  %400 = vmatpush1.msra.mxu0 0.0
  %401 = vmatprep.subr.mxu0 0.0
  %402 = vmatpush1.msra.mxu0 0.0
  %403 = vmatprep.subr.mxu0 0.0
  %404 = vmatpush1.msra.mxu0 0.0
  %405 = vmatprep.subr.mxu0 0.0
  %406 = vmatpush1.msra.mxu0 0.0
  %407 = vmatprep.subr.mxu0 0.0
  %408 = vmatpush1.msra.mxu0 0.0
  %409 = vmatprep.subr.mxu0 0.0
  %410 = vmatpush1.msra.mxu0 0.0
  %411 = vmatprep.subr.mxu0 0.0
  %412 = vmatpush1.msra.mxu0 0.0
  %413 = vmatprep.subr.mxu0 0.0
  %414 = vmatpush1.msra.mxu0 0.0
  %415 = vmatprep.subr.mxu0 0.0
  %416 = vmatpush1.msra.mxu0 0.0
  %417 = vmatprep.subr.mxu0 0.0
  %418 = vmatpush1.msra.mxu0 0.0
  %419 = vmatprep.subr.mxu0 0.0
  %420 = vmatpush1.msra.mxu0 0.0
  %421 = vmatprep.subr.mxu0 0.0
  %422 = vmatpush1.msra.mxu0 0.0
  %423 = vmatprep.subr.mxu0 0.0
  %424 = vmatpush1.msra.mxu0 0.0
  %425 = vmatprep.subr.mxu0 0.0
  %426 = vmatpush1.msra.mxu0 0.0
  %427 = vmatprep.subr.mxu0 0.0
  %428 = vmatpush1.msra.mxu0 0.0
  %429 = vmatprep.subr.mxu0 0.0
  %430 = vmatpush1.msra.mxu0 0.0
  %431 = vmatprep.subr.mxu0 0.0
  %432 = vmatpush1.msra.mxu0 0.0
  %433 = vmatprep.subr.mxu0 0.0
  %434 = vmatpush1.msra.mxu0 0.0
  %435 = vmatprep.subr.mxu0 0.0
  %436 = vmatpush1.msra.mxu0 0.0
  %437 = vmatprep.subr.mxu0 0.0
  %438 = vmatpush1.msra.mxu0 0.0
  %439 = vmatprep.subr.mxu0 0.0
  %440 = vmatpush1.msra.mxu0 0.0
  %441 = vmatprep.subr.mxu0 0.0
  %442 = vmatpush1.msra.mxu0 0.0
  %443 = vmatprep.mubr.f32.mxu0 0.0
  %444 = vmatmul.mubr.f32.gmra.mrb[0].mxu0 %v41
  %v445 = vpop.f32.mrb[0].mxu0
  %v446 = vadd.f32 0.0, %v445
  %v447 = vpop.f32.mrb[0].mxu0
  %448 = vmatprep.mubr.f32.mxu0 0.0
  %449 = vmatmul.mubr.f32.gmra.mrb[0].mxu0 %v44
  %v450 = vpop.f32.mrb[0].mxu0
  %v451 = vadd.f32 0.0, %v450
  %v452 = vpop.f32.mrb[0].mxu0
  %453 = vdwg.mxu0
  %v454 = vmul.f32 %v446, %v259
  %v455 = vmul.f32 %v451, %v264
  %v456 = vadd.f32 %v454, %v271
  %v457 = vadd.f32 %v455, %v276
  %v458 = vtanh.pop %v456
  %v459 = vtanh.pop %v457
  %v460 = vld [vmem:[%s7] sm:$0xff]
  %v461 = vld [vmem:[%s7 + $0x8] sm:$0xff]
  %v462 = vld [vmem:[%s7 + $0x10] sm:$0xff]
  %v463 = vld [vmem:[%s7 + $0x18] sm:$0x7]
  %v465 = vsel %vm46, %v463, 0
  %467 = vmatprep.subr.mxu0 0.0
  %468 = vmatpush1.msra.mxu0 %v460
  %469 = vmatprep.subr.mxu0 0.0
  %470 = vmatpush1.msra.mxu0 %v461
  %471 = vmatprep.subr.mxu0 0.0
  %472 = vmatpush1.msra.mxu0 %v462
  %473 = vmatprep.subr.mxu0 0.0
  %474 = vmatpush1.msra.mxu0 %v465
  %475 = vmatprep.subr.mxu0 0.0
  %476 = vmatpush1.msra.mxu0 0.0
  %477 = vmatprep.subr.mxu0 0.0
  %478 = vmatpush1.msra.mxu0 0.0
  %479 = vmatprep.subr.mxu0 0.0
  %480 = vmatpush1.msra.mxu0 0.0
  %481 = vmatprep.subr.mxu0 0.0
  %482 = vmatpush1.msra.mxu0 0.0
  %483 = vmatprep.subr.mxu0 0.0
  %484 = vmatpush1.msra.mxu0 0.0
  %485 = vmatprep.subr.mxu0 0.0
  %486 = vmatpush1.msra.mxu0 0.0
  %487 = vmatprep.subr.mxu0 0.0
  %488 = vmatpush1.msra.mxu0 0.0
  %489 = vmatprep.subr.mxu0 0.0
  %490 = vmatpush1.msra.mxu0 0.0
  %491 = vmatprep.subr.mxu0 0.0
  %492 = vmatpush1.msra.mxu0 0.0
  %493 = vmatprep.subr.mxu0 0.0
  %494 = vmatpush1.msra.mxu0 0.0
  %495 = vmatprep.subr.mxu0 0.0
  %496 = vmatpush1.msra.mxu0 0.0
  %497 = vmatprep.subr.mxu0 0.0
  %498 = vmatpush1.msra.mxu0 0.0
  %499 = vmatprep.subr.mxu0 0.0
  %500 = vmatpush1.msra.mxu0 0.0
  %501 = vmatprep.subr.mxu0 0.0
  %502 = vmatpush1.msra.mxu0 0.0
  %503 = vmatprep.subr.mxu0 0.0
  %504 = vmatpush1.msra.mxu0 0.0
  %505 = vmatprep.subr.mxu0 0.0
  %506 = vmatpush1.msra.mxu0 0.0
  %507 = vmatprep.subr.mxu0 0.0
  %508 = vmatpush1.msra.mxu0 0.0
  %509 = vmatprep.subr.mxu0 0.0
  %510 = vmatpush1.msra.mxu0 0.0
  %511 = vmatprep.subr.mxu0 0.0
  %512 = vmatpush1.msra.mxu0 0.0
  %513 = vmatprep.subr.mxu0 0.0
  %514 = vmatpush1.msra.mxu0 0.0
  %515 = vmatprep.subr.mxu0 0.0
  %516 = vmatpush1.msra.mxu0 0.0
  %517 = vmatprep.subr.mxu0 0.0
  %518 = vmatpush1.msra.mxu0 0.0
  %519 = vmatprep.subr.mxu0 0.0
  %520 = vmatpush1.msra.mxu0 0.0
  %521 = vmatprep.subr.mxu0 0.0
  %522 = vmatpush1.msra.mxu0 0.0
  %523 = vmatprep.subr.mxu0 0.0
  %524 = vmatpush1.msra.mxu0 0.0
  %525 = vmatprep.subr.mxu0 0.0
  %526 = vmatpush1.msra.mxu0 0.0
  %527 = vmatprep.subr.mxu0 0.0
  %528 = vmatpush1.msra.mxu0 0.0
  %529 = vmatprep.subr.mxu0 0.0
  %530 = vmatpush1.msra.mxu0 0.0
  %531 = vmatprep.mubr.f32.mxu0 0.0
  %532 = vmatmul.mubr.f32.gmra.mrb[0].mxu0 %v41
  %v533 = vpop.f32.mrb[0].mxu0
  %v534 = vadd.f32 0.0, %v533
  %v535 = vpop.f32.mrb[0].mxu0
  %536 = vmatprep.mubr.f32.mxu0 0.0
  %537 = vmatmul.mubr.f32.gmra.mrb[0].mxu0 %v44
  %v538 = vpop.f32.mrb[0].mxu0
  %v539 = vadd.f32 0.0, %v538
  %v540 = vpop.f32.mrb[0].mxu0
  %541 = vdwg.mxu0
  %v542 = vmul.f32 %v534, %v259
  %v543 = vmul.f32 %v539, %v264
  %v544 = vadd.f32 %v542, %v271
  %v545 = vadd.f32 %v543, %v276
  %v546 = vtanh.pop %v544
  %v547 = vtanh.pop %v545
  %v548 = vmax.f32 %v458, %v546
  %v549 = vmax.f32 %v459, %v547
  %v550 = vmax.f32 %v370, %v548
  %v551 = vmax.f32 %v371, %v549
  %vm552 = vcmask 408576
  %553 = vst.msk [vmem:[%s8] sm:$0xff] %vm552, %v550
  %554 = vst.msk [vmem:[%s8 + $0x8] sm:$0xff] %vm552, %v551
  // Predicated region
  $region34: #{cnnae_forward.5} parent=0 // pred_check
    _
  $region35: #{cnnae_forward.5} parent=0 // pred_check_branch
    %556 = sbr.rel (0) target = $region37
  $region36: #{cnnae_forward.5} parent=0 // pred_region
    _
  $region37: #{cnnae_forward.5} parent=0 // pred_fallthru
    _
  // Predicated region
  $region38: #{cnnae_forward.5} parent=0 // pred_check
    _
  $region39: #{cnnae_forward.5} parent=0 // pred_check_branch
    %558 = sbr.rel (0) target = $region41
  $region40: #{cnnae_forward.5} parent=0 // pred_region
    _
  $region41: #{cnnae_forward.5} parent=0 // pred_fallthru
    _

// kernel: cnnae_forward.6
$region0: #{cnnae_forward.6}
  #allocation0 [shape = 'u32[]', space=smem, size = 0x4, offset = 0x4, fixed_abs, tag = 'smem constant byte address 0x4 - core index']
  #allocation1 [shape = 'u32[144,128]{1,0:T(1,128)}', space=vmem, size = 0x12000, scoped, tag = 'internal scratch']
  %s0 = inlined_call_operand.vmem [shape: f32[4,144], index: 0, kind: input, shape index: {}]
  %s1 = inlined_call_operand.vmem [shape: f32[4,1], index: 1, kind: input, shape index: {}]
  %s2 = inlined_call_operand.vmem [shape: f32[4,1], index: 2, kind: input, shape index: {}]
  %s3 = inlined_call_operand.vmem [shape: f32[144,18], index: 3, kind: input, shape index: {}]
  %s4 = inlined_call_operand.vmem [shape: f32[144,8], index: 4, kind: input, shape index: {}]
  %s5 = inlined_call_operand.vmem [shape: f32[144,8], index: 5, kind: input, shape index: {}]
  %s6 = inlined_call_operand.vmem [shape: f32[144,8], index: 6, kind: input, shape index: {}]
  %s7 = inlined_call_operand.vmem [shape: f32[144,8], index: 7, kind: input, shape index: {}]
  %s8 = inlined_call_operand.vmem [shape: f32[4,8], index: 8, kind: output, shape index: {}]
  %s9 = sld [smem:[#allocation0]]
  $region42: #{cnnae_forward.6} parent=0
    _
  %s11 = ssub.s32 1, %s9
  %s12 = scalar_select 0, %s11, %s9
  // Predicated region
  $region2: #{cnnae_forward.6} parent=0 // pred_check
    _
  $region3: #{cnnae_forward.6} parent=0 // pred_check_branch
    %14 = sbr.rel (0) target = $region5
  $region4: #{cnnae_forward.6} parent=0 // pred_region
    _
  $region5: #{cnnae_forward.6} parent=0 // pred_fallthru
    _
  // Predicated region
  $region6: #{cnnae_forward.6} parent=0 // pred_check
    _
  $region7: #{cnnae_forward.6} parent=0 // pred_check_branch
    %16 = sbr.rel (0) target = $region9
  $region8: #{cnnae_forward.6} parent=0 // pred_region
    _
  $region9: #{cnnae_forward.6} parent=0 // pred_fallthru
    _
  // Predicated region
  $region10: #{cnnae_forward.6} parent=0 // pred_check
    _
  $region11: #{cnnae_forward.6} parent=0 // pred_check_branch
    %18 = sbr.rel (0) target = $region13
  $region12: #{cnnae_forward.6} parent=0 // pred_region
    _
  $region13: #{cnnae_forward.6} parent=0 // pred_fallthru
    _
  // Predicated region
  $region14: #{cnnae_forward.6} parent=0 // pred_check
    _
  $region15: #{cnnae_forward.6} parent=0 // pred_check_branch
    %20 = sbr.rel (0) target = $region17
  $region16: #{cnnae_forward.6} parent=0 // pred_region
    _
  $region17: #{cnnae_forward.6} parent=0 // pred_fallthru
    _
  // Predicated region
  $region18: #{cnnae_forward.6} parent=0 // pred_check
    _
  $region19: #{cnnae_forward.6} parent=0 // pred_check_branch
    %22 = sbr.rel (0) target = $region21
  $region20: #{cnnae_forward.6} parent=0 // pred_region
    _
  $region21: #{cnnae_forward.6} parent=0 // pred_fallthru
    _
  // Predicated region
  $region22: #{cnnae_forward.6} parent=0 // pred_check
    _
  $region23: #{cnnae_forward.6} parent=0 // pred_check_branch
    %24 = sbr.rel (0) target = $region25
  $region24: #{cnnae_forward.6} parent=0 // pred_region
    _
  $region25: #{cnnae_forward.6} parent=0 // pred_fallthru
    _
  // Predicated region
  $region26: #{cnnae_forward.6} parent=0 // pred_check
    _
  $region27: #{cnnae_forward.6} parent=0 // pred_check_branch
    %26 = sbr.rel (0) target = $region29
  $region28: #{cnnae_forward.6} parent=0 // pred_region
    _
  $region29: #{cnnae_forward.6} parent=0 // pred_fallthru
    _
  // Predicated region
  $region30: #{cnnae_forward.6} parent=0 // pred_check
    _
  $region31: #{cnnae_forward.6} parent=0 // pred_check_branch
    %28 = sbr.rel (0) target = $region33
  $region32: #{cnnae_forward.6} parent=0 // pred_region
    _
  $region33: #{cnnae_forward.6} parent=0 // pred_fallthru
    _
  %v29 = vld [vmem:[%s0] sm:$0xff]
  %v30 = vld [vmem:[%s3] sm:$0xff]
  %v31 = vld [vmem:[%s3 + $0x8] sm:$0xff]
  %v32 = vld [vmem:[%s3 + $0x10] sm:$0xff]
  %v33 = vld [vmem:[%s3 + $0x18] sm:$0xff]
  %v34 = vld [vmem:[%s3 + $0x20] sm:$0xff]
  %v35 = vld [vmem:[%s3 + $0x28] sm:$0xff]
  %v36 = vld [vmem:[%s3 + $0x30] sm:$0xff]
  %v37 = vld [vmem:[%s3 + $0x38] sm:$0xff]
  %v38 = vld [vmem:[%s3 + $0x40] sm:$0xff]
  %v39 = vld [vmem:[%s3 + $0x48] sm:$0xff]
  %v40 = vld [vmem:[%s3 + $0x50] sm:$0xff]
  %v41 = vld [vmem:[%s3 + $0x58] sm:$0xff]
  %v42 = vld [vmem:[%s3 + $0x60] sm:$0xff]
  %v43 = vld [vmem:[%s3 + $0x68] sm:$0xff]
  %v44 = vld [vmem:[%s3 + $0x70] sm:$0xff]
  %v45 = vld [vmem:[%s3 + $0x78] sm:$0xff]
  %v46 = vld [vmem:[%s3 + $0x80] sm:$0xff]
  %v47 = vld [vmem:[%s3 + $0x88] sm:$0xff]
  %v49 = vcombine.high %v29, %v29
  %vm50 = vcmask 130048
  %v51 = vsel %vm50, %v49, 0
  %53 = vmatprep.subr.mxu0 0.0
  %54 = vmatpush1.msra.mxu0 %v30
  %55 = vmatprep.subr.mxu0 0.0
  %56 = vmatpush1.msra.mxu0 %v31
  %57 = vmatprep.subr.mxu0 0.0
  %58 = vmatpush1.msra.mxu0 %v32
  %59 = vmatprep.subr.mxu0 0.0
  %60 = vmatpush1.msra.mxu0 %v33
  %61 = vmatprep.subr.mxu0 0.0
  %62 = vmatpush1.msra.mxu0 %v34
  %63 = vmatprep.subr.mxu0 0.0
  %64 = vmatpush1.msra.mxu0 %v35
  %65 = vmatprep.subr.mxu0 0.0
  %66 = vmatpush1.msra.mxu0 %v36
  %67 = vmatprep.subr.mxu0 0.0
  %68 = vmatpush1.msra.mxu0 %v37
  %69 = vmatprep.subr.mxu0 0.0
  %70 = vmatpush1.msra.mxu0 %v38
  %71 = vmatprep.subr.mxu0 0.0
  %72 = vmatpush1.msra.mxu0 %v39
  %73 = vmatprep.subr.mxu0 0.0
  %74 = vmatpush1.msra.mxu0 %v40
  %75 = vmatprep.subr.mxu0 0.0
  %76 = vmatpush1.msra.mxu0 %v41
  %77 = vmatprep.subr.mxu0 0.0
  %78 = vmatpush1.msra.mxu0 %v42
  %79 = vmatprep.subr.mxu0 0.0
  %80 = vmatpush1.msra.mxu0 %v43
  %81 = vmatprep.subr.mxu0 0.0
  %82 = vmatpush1.msra.mxu0 %v44
  %83 = vmatprep.subr.mxu0 0.0
  %84 = vmatpush1.msra.mxu0 %v45
  %85 = vmatprep.subr.mxu0 0.0
  %86 = vmatpush1.msra.mxu0 %v46
  %87 = vmatprep.subr.mxu0 0.0
  %88 = vmatpush1.msra.mxu0 %v47
  %89 = vmatprep.subr.mxu0 0.0
  %90 = vmatpush1.msra.mxu0 0.0
  %91 = vmatprep.subr.mxu0 0.0
  %92 = vmatpush1.msra.mxu0 0.0
  %93 = vmatprep.subr.mxu0 0.0
  %94 = vmatpush1.msra.mxu0 0.0
  %95 = vmatprep.subr.mxu0 0.0
  %96 = vmatpush1.msra.mxu0 0.0
  %97 = vmatprep.subr.mxu0 0.0
  %98 = vmatpush1.msra.mxu0 0.0
  %99 = vmatprep.subr.mxu0 0.0
  %100 = vmatpush1.msra.mxu0 0.0
  %101 = vmatprep.subr.mxu0 0.0
  %102 = vmatpush1.msra.mxu0 0.0
  %103 = vmatprep.subr.mxu0 0.0
  %104 = vmatpush1.msra.mxu0 0.0
  %105 = vmatprep.subr.mxu0 0.0
  %106 = vmatpush1.msra.mxu0 0.0
  %107 = vmatprep.subr.mxu0 0.0
  %108 = vmatpush1.msra.mxu0 0.0
  %109 = vmatprep.subr.mxu0 0.0
  %110 = vmatpush1.msra.mxu0 0.0
  %111 = vmatprep.subr.mxu0 0.0
  %112 = vmatpush1.msra.mxu0 0.0
  %113 = vmatprep.subr.mxu0 0.0
  %114 = vmatpush1.msra.mxu0 0.0
  %115 = vmatprep.subr.mxu0 0.0
  %116 = vmatpush1.msra.mxu0 0.0
  %117 = vmatprep.mubr.f32.mxu0 %v51
  %118 = vmatmul.mubr.f32.gmra.mrb[0].mxu0 %v29
  %v119 = vpop.f32.mrb[0].mxu0
  %v120 = vadd.f32 0.0, %v119
  %v121 = vpop.f32.mrb[0].mxu0
  %122 = vdwg.mxu0
  %vm123 = vcmask 142336
  %v124 = vsel %vm123, %v120, 0.0
  %125 = vadd.xlane.f32.xlu0 %v124
  %v126 = vpop.xlane.xlu0 %125
  %v127 = vrcp.pop 18.0
  %v128 = vmul.f32 %v126, %v127
  %v129 = vsub.f32 %v120, %v128
  %v130 = vmul.f32 %v129, %v129
  %v131 = vsel %vm123, %v130, 0.0
  %132 = vadd.xlane.f32.xlu0 %v131
  %v133 = vpop.xlane.xlu0 %132
  %v134 = vmul.f32 %v133, %v127
  %v135 = vadd.f32 %v134, 1e-05
  %v136 = vrsqrt.pop %v135
  %v137 = vld [vmem:[%s1] sm:$0xf]
  %v138 = vmul.f32 %v137, %v136
  %v139 = vld [vmem:[%s2] sm:$0xf]
  %v140 = vmul.f32 %v128, %v138
  %v141 = vsub.f32 %v139, %v140
  %v142 = vld [vmem:[%s4] sm:$0xff]
  %v143 = vld [vmem:[%s4 + $0x8] sm:$0xff]
  %v144 = vld [vmem:[%s4 + $0x10] sm:$0xff]
  %v145 = vld [vmem:[%s4 + $0x18] sm:$0xff]
  %v146 = vld [vmem:[%s4 + $0x20] sm:$0xff]
  %v147 = vld [vmem:[%s4 + $0x28] sm:$0xff]
  %v148 = vld [vmem:[%s4 + $0x30] sm:$0xff]
  %v149 = vld [vmem:[%s4 + $0x38] sm:$0xff]
  %v150 = vld [vmem:[%s4 + $0x40] sm:$0xff]
  %v151 = vld [vmem:[%s4 + $0x48] sm:$0xff]
  %v152 = vld [vmem:[%s4 + $0x50] sm:$0xff]
  %v153 = vld [vmem:[%s4 + $0x58] sm:$0xff]
  %v154 = vld [vmem:[%s4 + $0x60] sm:$0xff]
  %v155 = vld [vmem:[%s4 + $0x68] sm:$0xff]
  %v156 = vld [vmem:[%s4 + $0x70] sm:$0xff]
  %v157 = vld [vmem:[%s4 + $0x78] sm:$0xff]
  %v158 = vld [vmem:[%s4 + $0x80] sm:$0xff]
  %v159 = vld [vmem:[%s4 + $0x88] sm:$0xff]
  %160 = vmatprep.subr.mxu0 0.0
  %161 = vmatpush1.msra.mxu0 %v142
  %162 = vmatprep.subr.mxu0 0.0
  %163 = vmatpush1.msra.mxu0 %v143
  %164 = vmatprep.subr.mxu0 0.0
  %165 = vmatpush1.msra.mxu0 %v144
  %166 = vmatprep.subr.mxu0 0.0
  %167 = vmatpush1.msra.mxu0 %v145
  %168 = vmatprep.subr.mxu0 0.0
  %169 = vmatpush1.msra.mxu0 %v146
  %170 = vmatprep.subr.mxu0 0.0
  %171 = vmatpush1.msra.mxu0 %v147
  %172 = vmatprep.subr.mxu0 0.0
  %173 = vmatpush1.msra.mxu0 %v148
  %174 = vmatprep.subr.mxu0 0.0
  %175 = vmatpush1.msra.mxu0 %v149
  %176 = vmatprep.subr.mxu0 0.0
  %177 = vmatpush1.msra.mxu0 %v150
  %178 = vmatprep.subr.mxu0 0.0
  %179 = vmatpush1.msra.mxu0 %v151
  %180 = vmatprep.subr.mxu0 0.0
  %181 = vmatpush1.msra.mxu0 %v152
  %182 = vmatprep.subr.mxu0 0.0
  %183 = vmatpush1.msra.mxu0 %v153
  %184 = vmatprep.subr.mxu0 0.0
  %185 = vmatpush1.msra.mxu0 %v154
  %186 = vmatprep.subr.mxu0 0.0
  %187 = vmatpush1.msra.mxu0 %v155
  %188 = vmatprep.subr.mxu0 0.0
  %189 = vmatpush1.msra.mxu0 %v156
  %190 = vmatprep.subr.mxu0 0.0
  %191 = vmatpush1.msra.mxu0 %v157
  %192 = vmatprep.subr.mxu0 0.0
  %193 = vmatpush1.msra.mxu0 %v158
  %194 = vmatprep.subr.mxu0 0.0
  %195 = vmatpush1.msra.mxu0 %v159
  %196 = vmatprep.subr.mxu0 0.0
  %197 = vmatpush1.msra.mxu0 0.0
  %198 = vmatprep.subr.mxu0 0.0
  %199 = vmatpush1.msra.mxu0 0.0
  %200 = vmatprep.subr.mxu0 0.0
  %201 = vmatpush1.msra.mxu0 0.0
  %202 = vmatprep.subr.mxu0 0.0
  %203 = vmatpush1.msra.mxu0 0.0
  %204 = vmatprep.subr.mxu0 0.0
  %205 = vmatpush1.msra.mxu0 0.0
  %206 = vmatprep.subr.mxu0 0.0
  %207 = vmatpush1.msra.mxu0 0.0
  %208 = vmatprep.subr.mxu0 0.0
  %209 = vmatpush1.msra.mxu0 0.0
  %210 = vmatprep.subr.mxu0 0.0
  %211 = vmatpush1.msra.mxu0 0.0
  %212 = vmatprep.subr.mxu0 0.0
  %213 = vmatpush1.msra.mxu0 0.0
  %214 = vmatprep.subr.mxu0 0.0
  %215 = vmatpush1.msra.mxu0 0.0
  %216 = vmatprep.subr.mxu0 0.0
  %217 = vmatpush1.msra.mxu0 0.0
  %218 = vmatprep.subr.mxu0 0.0
  %219 = vmatpush1.msra.mxu0 0.0
  %220 = vmatprep.subr.mxu0 0.0
  %221 = vmatpush1.msra.mxu0 0.0
  %222 = vmatprep.subr.mxu0 0.0
  %223 = vmatpush1.msra.mxu0 0.0
  %224 = vmatprep.mubr.f32.mxu0 %v51
  %225 = vmatmul.mubr.f32.gmra.mrb[0].mxu0 %v29
  %v226 = vpop.f32.mrb[0].mxu0
  %v227 = vadd.f32 0.0, %v226
  %v228 = vpop.f32.mrb[0].mxu0
  %229 = vdwg.mxu0
  %231 = vset.pattern.permute.xlu0 0
  %232 = vperm.xlu0 %231, %v138
  %v233 = vpop.permute.xlu0 %232
  %v235 = vmul.f32 %v227, %v233
  %237 = vset.pattern.permute.xlu0 0
  %238 = vperm.xlu0 %237, %v141
  %v239 = vpop.permute.xlu0 %238
  %v241 = vadd.f32 %v235, %v239
  %v242 = vtanh.pop %v241
  %v243 = vld [vmem:[%s5] sm:$0xff]
  %v244 = vld [vmem:[%s5 + $0x8] sm:$0xff]
  %v245 = vld [vmem:[%s5 + $0x10] sm:$0xff]
  %v246 = vld [vmem:[%s5 + $0x18] sm:$0xff]
  %v247 = vld [vmem:[%s5 + $0x20] sm:$0xff]
  %v248 = vld [vmem:[%s5 + $0x28] sm:$0xff]
  %v249 = vld [vmem:[%s5 + $0x30] sm:$0xff]
  %v250 = vld [vmem:[%s5 + $0x38] sm:$0xff]
  %v251 = vld [vmem:[%s5 + $0x40] sm:$0xff]
  %v252 = vld [vmem:[%s5 + $0x48] sm:$0xff]
  %v253 = vld [vmem:[%s5 + $0x50] sm:$0xff]
  %v254 = vld [vmem:[%s5 + $0x58] sm:$0xff]
  %v255 = vld [vmem:[%s5 + $0x60] sm:$0xff]
  %v256 = vld [vmem:[%s5 + $0x68] sm:$0xff]
  %v257 = vld [vmem:[%s5 + $0x70] sm:$0xff]
  %v258 = vld [vmem:[%s5 + $0x78] sm:$0xff]
  %v259 = vld [vmem:[%s5 + $0x80] sm:$0xff]
  %v260 = vld [vmem:[%s5 + $0x88] sm:$0xff]
  %261 = vmatprep.subr.mxu0 0.0
  %262 = vmatpush1.msra.mxu0 %v243
  %263 = vmatprep.subr.mxu0 0.0
  %264 = vmatpush1.msra.mxu0 %v244
  %265 = vmatprep.subr.mxu0 0.0
  %266 = vmatpush1.msra.mxu0 %v245
  %267 = vmatprep.subr.mxu0 0.0
  %268 = vmatpush1.msra.mxu0 %v246
  %269 = vmatprep.subr.mxu0 0.0
  %270 = vmatpush1.msra.mxu0 %v247
  %271 = vmatprep.subr.mxu0 0.0
  %272 = vmatpush1.msra.mxu0 %v248
  %273 = vmatprep.subr.mxu0 0.0
  %274 = vmatpush1.msra.mxu0 %v249
  %275 = vmatprep.subr.mxu0 0.0
  %276 = vmatpush1.msra.mxu0 %v250
  %277 = vmatprep.subr.mxu0 0.0
  %278 = vmatpush1.msra.mxu0 %v251
  %279 = vmatprep.subr.mxu0 0.0
  %280 = vmatpush1.msra.mxu0 %v252
  %281 = vmatprep.subr.mxu0 0.0
  %282 = vmatpush1.msra.mxu0 %v253
  %283 = vmatprep.subr.mxu0 0.0
  %284 = vmatpush1.msra.mxu0 %v254
  %285 = vmatprep.subr.mxu0 0.0
  %286 = vmatpush1.msra.mxu0 %v255
  %287 = vmatprep.subr.mxu0 0.0
  %288 = vmatpush1.msra.mxu0 %v256
  %289 = vmatprep.subr.mxu0 0.0
  %290 = vmatpush1.msra.mxu0 %v257
  %291 = vmatprep.subr.mxu0 0.0
  %292 = vmatpush1.msra.mxu0 %v258
  %293 = vmatprep.subr.mxu0 0.0
  %294 = vmatpush1.msra.mxu0 %v259
  %295 = vmatprep.subr.mxu0 0.0
  %296 = vmatpush1.msra.mxu0 %v260
  %297 = vmatprep.subr.mxu0 0.0
  %298 = vmatpush1.msra.mxu0 0.0
  %299 = vmatprep.subr.mxu0 0.0
  %300 = vmatpush1.msra.mxu0 0.0
  %301 = vmatprep.subr.mxu0 0.0
  %302 = vmatpush1.msra.mxu0 0.0
  %303 = vmatprep.subr.mxu0 0.0
  %304 = vmatpush1.msra.mxu0 0.0
  %305 = vmatprep.subr.mxu0 0.0
  %306 = vmatpush1.msra.mxu0 0.0
  %307 = vmatprep.subr.mxu0 0.0
  %308 = vmatpush1.msra.mxu0 0.0
  %309 = vmatprep.subr.mxu0 0.0
  %310 = vmatpush1.msra.mxu0 0.0
  %311 = vmatprep.subr.mxu0 0.0
  %312 = vmatpush1.msra.mxu0 0.0
  %313 = vmatprep.subr.mxu0 0.0
  %314 = vmatpush1.msra.mxu0 0.0
  %315 = vmatprep.subr.mxu0 0.0
  %316 = vmatpush1.msra.mxu0 0.0
  %317 = vmatprep.subr.mxu0 0.0
  %318 = vmatpush1.msra.mxu0 0.0
  %319 = vmatprep.subr.mxu0 0.0
  %320 = vmatpush1.msra.mxu0 0.0
  %321 = vmatprep.subr.mxu0 0.0
  %322 = vmatpush1.msra.mxu0 0.0
  %323 = vmatprep.subr.mxu0 0.0
  %324 = vmatpush1.msra.mxu0 0.0
  %325 = vmatprep.mubr.f32.mxu0 %v51
  %326 = vmatmul.mubr.f32.gmra.mrb[0].mxu0 %v29
  %v327 = vpop.f32.mrb[0].mxu0
  %v328 = vadd.f32 0.0, %v327
  %v329 = vpop.f32.mrb[0].mxu0
  %330 = vdwg.mxu0
  %v331 = vmul.f32 %v328, %v233
  %v332 = vadd.f32 %v331, %v239
  %v333 = vtanh.pop %v332
  %v334 = vmax.f32 %v242, %v333
  %v335 = vld [vmem:[%s6] sm:$0xff]
  %v336 = vld [vmem:[%s6 + $0x8] sm:$0xff]
  %v337 = vld [vmem:[%s6 + $0x10] sm:$0xff]
  %v338 = vld [vmem:[%s6 + $0x18] sm:$0xff]
  %v339 = vld [vmem:[%s6 + $0x20] sm:$0xff]
  %v340 = vld [vmem:[%s6 + $0x28] sm:$0xff]
  %v341 = vld [vmem:[%s6 + $0x30] sm:$0xff]
  %v342 = vld [vmem:[%s6 + $0x38] sm:$0xff]
  %v343 = vld [vmem:[%s6 + $0x40] sm:$0xff]
  %v344 = vld [vmem:[%s6 + $0x48] sm:$0xff]
  %v345 = vld [vmem:[%s6 + $0x50] sm:$0xff]
  %v346 = vld [vmem:[%s6 + $0x58] sm:$0xff]
  %v347 = vld [vmem:[%s6 + $0x60] sm:$0xff]
  %v348 = vld [vmem:[%s6 + $0x68] sm:$0xff]
  %v349 = vld [vmem:[%s6 + $0x70] sm:$0xff]
  %v350 = vld [vmem:[%s6 + $0x78] sm:$0xff]
  %v351 = vld [vmem:[%s6 + $0x80] sm:$0xff]
  %v352 = vld [vmem:[%s6 + $0x88] sm:$0xff]
  %353 = vmatprep.subr.mxu0 0.0
  %354 = vmatpush1.msra.mxu0 %v335
  %355 = vmatprep.subr.mxu0 0.0
  %356 = vmatpush1.msra.mxu0 %v336
  %357 = vmatprep.subr.mxu0 0.0
  %358 = vmatpush1.msra.mxu0 %v337
  %359 = vmatprep.subr.mxu0 0.0
  %360 = vmatpush1.msra.mxu0 %v338
  %361 = vmatprep.subr.mxu0 0.0
  %362 = vmatpush1.msra.mxu0 %v339
  %363 = vmatprep.subr.mxu0 0.0
  %364 = vmatpush1.msra.mxu0 %v340
  %365 = vmatprep.subr.mxu0 0.0
  %366 = vmatpush1.msra.mxu0 %v341
  %367 = vmatprep.subr.mxu0 0.0
  %368 = vmatpush1.msra.mxu0 %v342
  %369 = vmatprep.subr.mxu0 0.0
  %370 = vmatpush1.msra.mxu0 %v343
  %371 = vmatprep.subr.mxu0 0.0
  %372 = vmatpush1.msra.mxu0 %v344
  %373 = vmatprep.subr.mxu0 0.0
  %374 = vmatpush1.msra.mxu0 %v345
  %375 = vmatprep.subr.mxu0 0.0
  %376 = vmatpush1.msra.mxu0 %v346
  %377 = vmatprep.subr.mxu0 0.0
  %378 = vmatpush1.msra.mxu0 %v347
  %379 = vmatprep.subr.mxu0 0.0
  %380 = vmatpush1.msra.mxu0 %v348
  %381 = vmatprep.subr.mxu0 0.0
  %382 = vmatpush1.msra.mxu0 %v349
  %383 = vmatprep.subr.mxu0 0.0
  %384 = vmatpush1.msra.mxu0 %v350
  %385 = vmatprep.subr.mxu0 0.0
  %386 = vmatpush1.msra.mxu0 %v351
  %387 = vmatprep.subr.mxu0 0.0
  %388 = vmatpush1.msra.mxu0 %v352
  %389 = vmatprep.subr.mxu0 0.0
  %390 = vmatpush1.msra.mxu0 0.0
  %391 = vmatprep.subr.mxu0 0.0
  %392 = vmatpush1.msra.mxu0 0.0
  %393 = vmatprep.subr.mxu0 0.0
  %394 = vmatpush1.msra.mxu0 0.0
  %395 = vmatprep.subr.mxu0 0.0
  %396 = vmatpush1.msra.mxu0 0.0
  %397 = vmatprep.subr.mxu0 0.0
  %398 = vmatpush1.msra.mxu0 0.0
  %399 = vmatprep.subr.mxu0 0.0
  %400 = vmatpush1.msra.mxu0 0.0
  %401 = vmatprep.subr.mxu0 0.0
  %402 = vmatpush1.msra.mxu0 0.0
  %403 = vmatprep.subr.mxu0 0.0
  %404 = vmatpush1.msra.mxu0 0.0
  %405 = vmatprep.subr.mxu0 0.0
  %406 = vmatpush1.msra.mxu0 0.0
  %407 = vmatprep.subr.mxu0 0.0
  %408 = vmatpush1.msra.mxu0 0.0
  %409 = vmatprep.subr.mxu0 0.0
  %410 = vmatpush1.msra.mxu0 0.0
  %411 = vmatprep.subr.mxu0 0.0
  %412 = vmatpush1.msra.mxu0 0.0
  %413 = vmatprep.subr.mxu0 0.0
  %414 = vmatpush1.msra.mxu0 0.0
  %415 = vmatprep.subr.mxu0 0.0
  %416 = vmatpush1.msra.mxu0 0.0
  %417 = vmatprep.mubr.f32.mxu0 %v51
  %418 = vmatmul.mubr.f32.gmra.mrb[0].mxu0 %v29
  %v419 = vpop.f32.mrb[0].mxu0
  %v420 = vadd.f32 0.0, %v419
  %v421 = vpop.f32.mrb[0].mxu0
  %422 = vdwg.mxu0
  %v423 = vmul.f32 %v420, %v233
  %v424 = vadd.f32 %v423, %v239
  %v425 = vtanh.pop %v424
  %v426 = vld [vmem:[%s7] sm:$0xff]
  %v427 = vld [vmem:[%s7 + $0x8] sm:$0xff]
  %v428 = vld [vmem:[%s7 + $0x10] sm:$0xff]
  %v429 = vld [vmem:[%s7 + $0x18] sm:$0xff]
  %v430 = vld [vmem:[%s7 + $0x20] sm:$0xff]
  %v431 = vld [vmem:[%s7 + $0x28] sm:$0xff]
  %v432 = vld [vmem:[%s7 + $0x30] sm:$0xff]
  %v433 = vld [vmem:[%s7 + $0x38] sm:$0xff]
  %v434 = vld [vmem:[%s7 + $0x40] sm:$0xff]
  %v435 = vld [vmem:[%s7 + $0x48] sm:$0xff]
  %v436 = vld [vmem:[%s7 + $0x50] sm:$0xff]
  %v437 = vld [vmem:[%s7 + $0x58] sm:$0xff]
  %v438 = vld [vmem:[%s7 + $0x60] sm:$0xff]
  %v439 = vld [vmem:[%s7 + $0x68] sm:$0xff]
  %v440 = vld [vmem:[%s7 + $0x70] sm:$0xff]
  %v441 = vld [vmem:[%s7 + $0x78] sm:$0xff]
  %v442 = vld [vmem:[%s7 + $0x80] sm:$0xff]
  %v443 = vld [vmem:[%s7 + $0x88] sm:$0xff]
  %444 = vmatprep.subr.mxu0 0.0
  %445 = vmatpush1.msra.mxu0 %v426
  %446 = vmatprep.subr.mxu0 0.0
  %447 = vmatpush1.msra.mxu0 %v427
  %448 = vmatprep.subr.mxu0 0.0
  %449 = vmatpush1.msra.mxu0 %v428
  %450 = vmatprep.subr.mxu0 0.0
  %451 = vmatpush1.msra.mxu0 %v429
  %452 = vmatprep.subr.mxu0 0.0
  %453 = vmatpush1.msra.mxu0 %v430
  %454 = vmatprep.subr.mxu0 0.0
  %455 = vmatpush1.msra.mxu0 %v431
  %456 = vmatprep.subr.mxu0 0.0
  %457 = vmatpush1.msra.mxu0 %v432
  %458 = vmatprep.subr.mxu0 0.0
  %459 = vmatpush1.msra.mxu0 %v433
  %460 = vmatprep.subr.mxu0 0.0
  %461 = vmatpush1.msra.mxu0 %v434
  %462 = vmatprep.subr.mxu0 0.0
  %463 = vmatpush1.msra.mxu0 %v435
  %464 = vmatprep.subr.mxu0 0.0
  %465 = vmatpush1.msra.mxu0 %v436
  %466 = vmatprep.subr.mxu0 0.0
  %467 = vmatpush1.msra.mxu0 %v437
  %468 = vmatprep.subr.mxu0 0.0
  %469 = vmatpush1.msra.mxu0 %v438
  %470 = vmatprep.subr.mxu0 0.0
  %471 = vmatpush1.msra.mxu0 %v439
  %472 = vmatprep.subr.mxu0 0.0
  %473 = vmatpush1.msra.mxu0 %v440
  %474 = vmatprep.subr.mxu0 0.0
  %475 = vmatpush1.msra.mxu0 %v441
  %476 = vmatprep.subr.mxu0 0.0
  %477 = vmatpush1.msra.mxu0 %v442
  %478 = vmatprep.subr.mxu0 0.0
  %479 = vmatpush1.msra.mxu0 %v443
  %480 = vmatprep.subr.mxu0 0.0
  %481 = vmatpush1.msra.mxu0 0.0
  %482 = vmatprep.subr.mxu0 0.0
  %483 = vmatpush1.msra.mxu0 0.0
  %484 = vmatprep.subr.mxu0 0.0
  %485 = vmatpush1.msra.mxu0 0.0
  %486 = vmatprep.subr.mxu0 0.0
  %487 = vmatpush1.msra.mxu0 0.0
  %488 = vmatprep.subr.mxu0 0.0
  %489 = vmatpush1.msra.mxu0 0.0
  %490 = vmatprep.subr.mxu0 0.0
  %491 = vmatpush1.msra.mxu0 0.0
  %492 = vmatprep.subr.mxu0 0.0
  %493 = vmatpush1.msra.mxu0 0.0
  %494 = vmatprep.subr.mxu0 0.0
  %495 = vmatpush1.msra.mxu0 0.0
  %496 = vmatprep.subr.mxu0 0.0
  %497 = vmatpush1.msra.mxu0 0.0
  %498 = vmatprep.subr.mxu0 0.0
  %499 = vmatpush1.msra.mxu0 0.0
  %500 = vmatprep.subr.mxu0 0.0
  %501 = vmatpush1.msra.mxu0 0.0
  %502 = vmatprep.subr.mxu0 0.0
  %503 = vmatpush1.msra.mxu0 0.0
  %504 = vmatprep.subr.mxu0 0.0
  %505 = vmatpush1.msra.mxu0 0.0
  %506 = vmatprep.subr.mxu0 0.0
  %507 = vmatpush1.msra.mxu0 0.0
  %508 = vmatprep.mubr.f32.mxu0 %v51
  %509 = vmatmul.mubr.f32.gmra.mrb[0].mxu0 %v29
  %v510 = vpop.f32.mrb[0].mxu0
  %v511 = vadd.f32 0.0, %v510
  %v512 = vpop.f32.mrb[0].mxu0
  %513 = vdwg.mxu0
  %v514 = vmul.f32 %v511, %v233
  %v515 = vadd.f32 %v514, %v239
  %v516 = vtanh.pop %v515
  %v517 = vmax.f32 %v425, %v516
  %v518 = vmax.f32 %v334, %v517
  %vm519 = vcmask 60416
  %520 = vst.msk [vmem:[%s8] sm:$0xf] %vm519, %v518
  // Predicated region
  $region34: #{cnnae_forward.6} parent=0 // pred_check
    _
  $region35: #{cnnae_forward.6} parent=0 // pred_check_branch
    %522 = sbr.rel (0) target = $region37
  $region36: #{cnnae_forward.6} parent=0 // pred_region
    _
  $region37: #{cnnae_forward.6} parent=0 // pred_fallthru
    _
  // Predicated region
  $region38: #{cnnae_forward.6} parent=0 // pred_check
    _
  $region39: #{cnnae_forward.6} parent=0 // pred_check_branch
    %524 = sbr.rel (0) target = $region41
  $region40: #{cnnae_forward.6} parent=0 // pred_region
    _
  $region41: #{cnnae_forward.6} parent=0 // pred_fallthru
    _

// kernel: cnnae_forward.7
$region0: #{cnnae_forward.7}
  #allocation0 [shape = 'u32[]', space=smem, size = 0x4, offset = 0x4, fixed_abs, tag = 'smem constant byte address 0x4 - core index']
  #allocation1 [shape = 'u32[144,128]{1,0:T(1,128)}', space=vmem, size = 0x12000, scoped, tag = 'internal scratch']
  %s0 = inlined_call_operand.vmem [shape: f32[16,36], index: 0, kind: input, shape index: {}]
  %s1 = inlined_call_operand.vmem [shape: f32[16,1], index: 1, kind: input, shape index: {}]
  %s2 = inlined_call_operand.vmem [shape: f32[16,1], index: 2, kind: input, shape index: {}]
  %s3 = inlined_call_operand.vmem [shape: f32[36,50], index: 3, kind: input, shape index: {}]
  %s4 = inlined_call_operand.vmem [shape: f32[16,50], index: 4, kind: output, shape index: {}]
  %s5 = sld [smem:[#allocation0]]
  $region26: #{cnnae_forward.7} parent=0
    _
  %s7 = ssub.s32 1, %s5
  %s8 = scalar_select 0, %s7, %s5
  // Predicated region
  $region2: #{cnnae_forward.7} parent=0 // pred_check
    _
  $region3: #{cnnae_forward.7} parent=0 // pred_check_branch
    %10 = sbr.rel (0) target = $region5
  $region4: #{cnnae_forward.7} parent=0 // pred_region
    _
  $region5: #{cnnae_forward.7} parent=0 // pred_fallthru
    _
  // Predicated region
  $region6: #{cnnae_forward.7} parent=0 // pred_check
    _
  $region7: #{cnnae_forward.7} parent=0 // pred_check_branch
    %12 = sbr.rel (0) target = $region9
  $region8: #{cnnae_forward.7} parent=0 // pred_region
    _
  $region9: #{cnnae_forward.7} parent=0 // pred_fallthru
    _
  // Predicated region
  $region10: #{cnnae_forward.7} parent=0 // pred_check
    _
  $region11: #{cnnae_forward.7} parent=0 // pred_check_branch
    %14 = sbr.rel (0) target = $region13
  $region12: #{cnnae_forward.7} parent=0 // pred_region
    _
  $region13: #{cnnae_forward.7} parent=0 // pred_fallthru
    _
  // Predicated region
  $region14: #{cnnae_forward.7} parent=0 // pred_check
    _
  $region15: #{cnnae_forward.7} parent=0 // pred_check_branch
    %16 = sbr.rel (0) target = $region17
  $region16: #{cnnae_forward.7} parent=0 // pred_region
    _
  $region17: #{cnnae_forward.7} parent=0 // pred_fallthru
    _
  %v17 = vld [vmem:[%s0] sm:$0xff]
  %v18 = vld [vmem:[%s0 + $0x8] sm:$0xff]
  %v19 = vld [vmem:[%s3] sm:$0xff]
  %v20 = vld [vmem:[%s3 + $0x8] sm:$0xff]
  %v21 = vld [vmem:[%s3 + $0x10] sm:$0xff]
  %v22 = vld [vmem:[%s3 + $0x18] sm:$0xff]
  %v23 = vld [vmem:[%s3 + $0x20] sm:$0xf]
  %vm24 = vcmask 293888
  %v26 = vsel %vm24, %v17, 0
  %v29 = vsel %vm24, %v18, 0
  %vm31 = vcmask 1043456
  %v33 = vsel %vm31, %v23, 0
  %35 = vmatprep.subr.mxu0 0.0
  %36 = vmatpush1.msra.mxu0 %v19
  %37 = vmatprep.subr.mxu0 0.0
  %38 = vmatpush1.msra.mxu0 %v20
  %39 = vmatprep.subr.mxu0 0.0
  %40 = vmatpush1.msra.mxu0 %v21
  %41 = vmatprep.subr.mxu0 0.0
  %42 = vmatpush1.msra.mxu0 %v22
  %43 = vmatprep.subr.mxu0 0.0
  %44 = vmatpush1.msra.mxu0 %v33
  %45 = vmatprep.subr.mxu0 0.0
  %46 = vmatpush1.msra.mxu0 0.0
  %47 = vmatprep.subr.mxu0 0.0
  %48 = vmatpush1.msra.mxu0 0.0
  %49 = vmatprep.subr.mxu0 0.0
  %50 = vmatpush1.msra.mxu0 0.0
  %51 = vmatprep.subr.mxu0 0.0
  %52 = vmatpush1.msra.mxu0 0.0
  %53 = vmatprep.subr.mxu0 0.0
  %54 = vmatpush1.msra.mxu0 0.0
  %55 = vmatprep.subr.mxu0 0.0
  %56 = vmatpush1.msra.mxu0 0.0
  %57 = vmatprep.subr.mxu0 0.0
  %58 = vmatpush1.msra.mxu0 0.0
  %59 = vmatprep.subr.mxu0 0.0
  %60 = vmatpush1.msra.mxu0 0.0
  %61 = vmatprep.subr.mxu0 0.0
  %62 = vmatpush1.msra.mxu0 0.0
  %63 = vmatprep.subr.mxu0 0.0
  %64 = vmatpush1.msra.mxu0 0.0
  %65 = vmatprep.subr.mxu0 0.0
  %66 = vmatpush1.msra.mxu0 0.0
  %67 = vmatprep.subr.mxu0 0.0
  %68 = vmatpush1.msra.mxu0 0.0
  %69 = vmatprep.subr.mxu0 0.0
  %70 = vmatpush1.msra.mxu0 0.0
  %71 = vmatprep.subr.mxu0 0.0
  %72 = vmatpush1.msra.mxu0 0.0
  %73 = vmatprep.subr.mxu0 0.0
  %74 = vmatpush1.msra.mxu0 0.0
  %75 = vmatprep.subr.mxu0 0.0
  %76 = vmatpush1.msra.mxu0 0.0
  %77 = vmatprep.subr.mxu0 0.0
  %78 = vmatpush1.msra.mxu0 0.0
  %79 = vmatprep.subr.mxu0 0.0
  %80 = vmatpush1.msra.mxu0 0.0
  %81 = vmatprep.subr.mxu0 0.0
  %82 = vmatpush1.msra.mxu0 0.0
  %83 = vmatprep.subr.mxu0 0.0
  %84 = vmatpush1.msra.mxu0 0.0
  %85 = vmatprep.subr.mxu0 0.0
  %86 = vmatpush1.msra.mxu0 0.0
  %87 = vmatprep.subr.mxu0 0.0
  %88 = vmatpush1.msra.mxu0 0.0
  %89 = vmatprep.subr.mxu0 0.0
  %90 = vmatpush1.msra.mxu0 0.0
  %91 = vmatprep.subr.mxu0 0.0
  %92 = vmatpush1.msra.mxu0 0.0
  %93 = vmatprep.subr.mxu0 0.0
  %94 = vmatpush1.msra.mxu0 0.0
  %95 = vmatprep.subr.mxu0 0.0
  %96 = vmatpush1.msra.mxu0 0.0
  %97 = vmatprep.subr.mxu0 0.0
  %98 = vmatpush1.msra.mxu0 0.0
  %99 = vmatprep.mubr.f32.mxu0 0.0
  %100 = vmatmul.mubr.f32.gmra.mrb[0].mxu0 %v26
  %v101 = vpop.f32.mrb[0].mxu0
  %v102 = vadd.f32 0.0, %v101
  %v103 = vpop.f32.mrb[0].mxu0
  %104 = vmatprep.mubr.f32.mxu0 0.0
  %105 = vmatmul.mubr.f32.gmra.mrb[0].mxu0 %v29
  %v106 = vpop.f32.mrb[0].mxu0
  %v107 = vadd.f32 0.0, %v106
  %v108 = vpop.f32.mrb[0].mxu0
  %109 = vdwg.mxu0
  %vm110 = vcmask 408576
  %v111 = vsel %vm110, %v102, 0.0
  %112 = vadd.xlane.f32.xlu0 %v111
  %v113 = vpop.xlane.xlu0 %112
  %v114 = vsel %vm110, %v107, 0.0
  %115 = vadd.xlane.f32.xlu0 %v114
  %v116 = vpop.xlane.xlu0 %115
  %v117 = vrcp.pop 50.0
  %v118 = vmul.f32 %v113, %v117
  %v119 = vmul.f32 %v116, %v117
  %v120 = vsub.f32 %v102, %v118
  %v121 = vsub.f32 %v107, %v119
  %v122 = vmul.f32 %v120, %v120
  %v123 = vmul.f32 %v121, %v121
  %v124 = vsel %vm110, %v122, 0.0
  %125 = vadd.xlane.f32.xlu0 %v124
  %v126 = vpop.xlane.xlu0 %125
  %v127 = vsel %vm110, %v123, 0.0
  %128 = vadd.xlane.f32.xlu0 %v127
  %v129 = vpop.xlane.xlu0 %128
  %v130 = vmul.f32 %v126, %v117
  %v131 = vmul.f32 %v129, %v117
  %v132 = vadd.f32 %v130, 1e-05
  %v133 = vadd.f32 %v131, 1e-05
  %v134 = vrsqrt.pop %v132
  %v135 = vrsqrt.pop %v133
  %v136 = vmul.f32 %v120, %v134
  %v137 = vmul.f32 %v121, %v135
  %v138 = vld [vmem:[%s1] sm:$0xff]
  %v139 = vld [vmem:[%s1 + $0x8] sm:$0xff]
  %141 = vset.pattern.permute.xlu0 0
  %142 = vperm.xlu0 %141, %v138
  %v143 = vpop.permute.xlu0 %142
  %146 = vset.pattern.permute.xlu0 0
  %147 = vperm.xlu0 %146, %v139
  %v148 = vpop.permute.xlu0 %147
  %v150 = vmul.f32 %v136, %v143
  %v151 = vmul.f32 %v137, %v148
  %v152 = vld [vmem:[%s2] sm:$0xff]
  %v153 = vld [vmem:[%s2 + $0x8] sm:$0xff]
  %155 = vset.pattern.permute.xlu0 0
  %156 = vperm.xlu0 %155, %v152
  %v157 = vpop.permute.xlu0 %156
  %160 = vset.pattern.permute.xlu0 0
  %161 = vperm.xlu0 %160, %v153
  %v162 = vpop.permute.xlu0 %161
  %v164 = vadd.f32 %v150, %v157
  %v165 = vadd.f32 %v151, %v162
  %v166 = vtanh.pop %v164
  %v167 = vtanh.pop %v165
  %168 = vst.msk [vmem:[%s4] sm:$0xff] %vm110, %v166
  %169 = vst.msk [vmem:[%s4 + $0x8] sm:$0xff] %vm110, %v167
  // Predicated region
  $region18: #{cnnae_forward.7} parent=0 // pred_check
    _
  $region19: #{cnnae_forward.7} parent=0 // pred_check_branch
    %171 = sbr.rel (0) target = $region21
  $region20: #{cnnae_forward.7} parent=0 // pred_region
    _
  $region21: #{cnnae_forward.7} parent=0 // pred_fallthru
    _
  // Predicated region
  $region22: #{cnnae_forward.7} parent=0 // pred_check
    _
  $region23: #{cnnae_forward.7} parent=0 // pred_check_branch
    %173 = sbr.rel (0) target = $region25
  $region24: #{cnnae_forward.7} parent=0 // pred_region
    _
  $region25: #{cnnae_forward.7} parent=0 // pred_fallthru
    _

// kernel: cnnae_forward.8
$region0: #{cnnae_forward.8}
  #allocation0 [shape = 'u32[]', space=smem, size = 0x4, offset = 0x4, fixed_abs, tag = 'smem constant byte address 0x4 - core index']
  #allocation1 [shape = 'u32[144,128]{1,0:T(1,128)}', space=vmem, size = 0x12000, scoped, tag = 'internal scratch']
  %s0 = inlined_call_operand.vmem [shape: f32[8,400], index: 0, kind: input, shape index: {}]
  %s1 = inlined_call_operand.vmem [shape: f32[8,1], index: 1, kind: input, shape index: {}]
  %s2 = inlined_call_operand.vmem [shape: f32[8,1], index: 2, kind: input, shape index: {}]
  %s3 = inlined_call_operand.vmem [shape: f32[400,450], index: 3, kind: input, shape index: {}]
  %s4 = inlined_call_operand.vmem [shape: f32[8,450], index: 4, kind: output, shape index: {}]
  %s5 = sld [smem:[#allocation0]]
  $region26: #{cnnae_forward.8} parent=0
    _
  %s7 = ssub.s32 1, %s5
  %s8 = scalar_select 0, %s7, %s5
  // Predicated region
  $region2: #{cnnae_forward.8} parent=0 // pred_check
    _
  $region3: #{cnnae_forward.8} parent=0 // pred_check_branch
    %10 = sbr.rel (0) target = $region5
  $region4: #{cnnae_forward.8} parent=0 // pred_region
    _
  $region5: #{cnnae_forward.8} parent=0 // pred_fallthru
    _
  // Predicated region
  $region6: #{cnnae_forward.8} parent=0 // pred_check
    _
  $region7: #{cnnae_forward.8} parent=0 // pred_check_branch
    %12 = sbr.rel (0) target = $region9
  $region8: #{cnnae_forward.8} parent=0 // pred_region
    _
  $region9: #{cnnae_forward.8} parent=0 // pred_fallthru
    _
  // Predicated region
  $region10: #{cnnae_forward.8} parent=0 // pred_check
    _
  $region11: #{cnnae_forward.8} parent=0 // pred_check_branch
    %14 = sbr.rel (0) target = $region13
  $region12: #{cnnae_forward.8} parent=0 // pred_region
    _
  $region13: #{cnnae_forward.8} parent=0 // pred_fallthru
    _
  // Predicated region
  $region14: #{cnnae_forward.8} parent=0 // pred_check
    _
  $region15: #{cnnae_forward.8} parent=0 // pred_check_branch
    %16 = sbr.rel (0) target = $region17
  $region16: #{cnnae_forward.8} parent=0 // pred_region
    _
  $region17: #{cnnae_forward.8} parent=0 // pred_fallthru
    _
  %v17 = vld [vmem:[%s0] sm:$0xff]
  %v18 = vld [vmem:[%s0 + $0x8] sm:$0xff]
  %v19 = vld [vmem:[%s0 + $0x10] sm:$0xff]
  %v20 = vld [vmem:[%s0 + $0x18] sm:$0xff]
  %v21 = vld [vmem:[%s3] sm:$0xff]
  %v22 = vld [vmem:[%s3 + $0x8] sm:$0xff]
  %v23 = vld [vmem:[%s3 + $0x10] sm:$0xff]
  %v24 = vld [vmem:[%s3 + $0x18] sm:$0xff]
  %v25 = vld [vmem:[%s3 + $0x20] sm:$0xff]
  %v26 = vld [vmem:[%s3 + $0x28] sm:$0xff]
  %v27 = vld [vmem:[%s3 + $0x30] sm:$0xff]
  %v28 = vld [vmem:[%s3 + $0x38] sm:$0xff]
  %v29 = vld [vmem:[%s3 + $0x40] sm:$0xff]
  %v30 = vld [vmem:[%s3 + $0x48] sm:$0xff]
  %v31 = vld [vmem:[%s3 + $0x50] sm:$0xff]
  %v32 = vld [vmem:[%s3 + $0x58] sm:$0xff]
  %v33 = vld [vmem:[%s3 + $0x60] sm:$0xff]
  %v34 = vld [vmem:[%s3 + $0x68] sm:$0xff]
  %v35 = vld [vmem:[%s3 + $0x70] sm:$0xff]
  %v36 = vld [vmem:[%s3 + $0x78] sm:$0xff]
  %v37 = vld [vmem:[%s3 + $0x80] sm:$0xff]
  %v38 = vld [vmem:[%s3 + $0x88] sm:$0xff]
  %v39 = vld [vmem:[%s3 + $0x90] sm:$0xff]
  %v40 = vld [vmem:[%s3 + $0x98] sm:$0xff]
  %v41 = vld [vmem:[%s3 + $0xa0] sm:$0xff]
  %v42 = vld [vmem:[%s3 + $0xa8] sm:$0xff]
  %v43 = vld [vmem:[%s3 + $0xb0] sm:$0xff]
  %v44 = vld [vmem:[%s3 + $0xb8] sm:$0xff]
  %v45 = vld [vmem:[%s3 + $0xc0] sm:$0xff]
  %v46 = vld [vmem:[%s3 + $0xc8] sm:$0xff]
  %v47 = vld [vmem:[%s3 + $0xd0] sm:$0xff]
  %v48 = vld [vmem:[%s3 + $0xd8] sm:$0xff]
  %v49 = vld [vmem:[%s3 + $0xe0] sm:$0xff]
  %v50 = vld [vmem:[%s3 + $0xe8] sm:$0xff]
  %v51 = vld [vmem:[%s3 + $0xf0] sm:$0xff]
  %v52 = vld [vmem:[%s3 + $0xf8] sm:$0xff]
  %v53 = vld [vmem:[%s3 + $0x100] sm:$0xff]
  %v54 = vld [vmem:[%s3 + $0x108] sm:$0xff]
  %v55 = vld [vmem:[%s3 + $0x110] sm:$0xff]
  %v56 = vld [vmem:[%s3 + $0x118] sm:$0xff]
  %v57 = vld [vmem:[%s3 + $0x120] sm:$0xff]
  %v58 = vld [vmem:[%s3 + $0x128] sm:$0xff]
  %v59 = vld [vmem:[%s3 + $0x130] sm:$0xff]
  %v60 = vld [vmem:[%s3 + $0x138] sm:$0xff]
  %v61 = vld [vmem:[%s3 + $0x140] sm:$0xff]
  %v62 = vld [vmem:[%s3 + $0x148] sm:$0xff]
  %v63 = vld [vmem:[%s3 + $0x150] sm:$0xff]
  %v64 = vld [vmem:[%s3 + $0x158] sm:$0xff]
  %v65 = vld [vmem:[%s3 + $0x160] sm:$0xff]
  %v66 = vld [vmem:[%s3 + $0x168] sm:$0xff]
  %v67 = vld [vmem:[%s3 + $0x170] sm:$0xff]
  %v68 = vld [vmem:[%s3 + $0x178] sm:$0xff]
  %v69 = vld [vmem:[%s3 + $0x180] sm:$0xff]
  %v70 = vld [vmem:[%s3 + $0x188] sm:$0xff]
  %v71 = vld [vmem:[%s3 + $0x190] sm:$0xff]
  %v72 = vld [vmem:[%s3 + $0x198] sm:$0xff]
  %v73 = vld [vmem:[%s3 + $0x1a0] sm:$0xff]
  %v74 = vld [vmem:[%s3 + $0x1a8] sm:$0xff]
  %v75 = vld [vmem:[%s3 + $0x1b0] sm:$0xff]
  %v76 = vld [vmem:[%s3 + $0x1b8] sm:$0xff]
  %v77 = vld [vmem:[%s3 + $0x1c0] sm:$0xff]
  %v78 = vld [vmem:[%s3 + $0x1c8] sm:$0xff]
  %v79 = vld [vmem:[%s3 + $0x1d0] sm:$0xff]
  %v80 = vld [vmem:[%s3 + $0x1d8] sm:$0xff]
  %v81 = vld [vmem:[%s3 + $0x1e0] sm:$0xff]
  %v82 = vld [vmem:[%s3 + $0x1e8] sm:$0xff]
  %v83 = vld [vmem:[%s3 + $0x1f0] sm:$0xff]
  %v84 = vld [vmem:[%s3 + $0x1f8] sm:$0xff]
  %v85 = vld [vmem:[%s3 + $0x200] sm:$0xff]
  %v86 = vld [vmem:[%s3 + $0x208] sm:$0xff]
  %v87 = vld [vmem:[%s3 + $0x210] sm:$0xff]
  %v88 = vld [vmem:[%s3 + $0x218] sm:$0xff]
  %v89 = vld [vmem:[%s3 + $0x220] sm:$0xff]
  %v90 = vld [vmem:[%s3 + $0x228] sm:$0xff]
  %v91 = vld [vmem:[%s3 + $0x230] sm:$0xff]
  %v92 = vld [vmem:[%s3 + $0x238] sm:$0xff]
  %v93 = vld [vmem:[%s3 + $0x240] sm:$0xff]
  %v94 = vld [vmem:[%s3 + $0x248] sm:$0xff]
  %v95 = vld [vmem:[%s3 + $0x250] sm:$0xff]
  %v96 = vld [vmem:[%s3 + $0x258] sm:$0xff]
  %v97 = vld [vmem:[%s3 + $0x260] sm:$0xff]
  %v98 = vld [vmem:[%s3 + $0x268] sm:$0xff]
  %v99 = vld [vmem:[%s3 + $0x270] sm:$0xff]
  %v100 = vld [vmem:[%s3 + $0x278] sm:$0xff]
  %v101 = vld [vmem:[%s3 + $0x280] sm:$0xff]
  %v102 = vld [vmem:[%s3 + $0x288] sm:$0xff]
  %v103 = vld [vmem:[%s3 + $0x290] sm:$0xff]
  %v104 = vld [vmem:[%s3 + $0x298] sm:$0xff]
  %v105 = vld [vmem:[%s3 + $0x2a0] sm:$0xff]
  %v106 = vld [vmem:[%s3 + $0x2a8] sm:$0xff]
  %v107 = vld [vmem:[%s3 + $0x2b0] sm:$0xff]
  %v108 = vld [vmem:[%s3 + $0x2b8] sm:$0xff]
  %v109 = vld [vmem:[%s3 + $0x2c0] sm:$0xff]
  %v110 = vld [vmem:[%s3 + $0x2c8] sm:$0xff]
  %v111 = vld [vmem:[%s3 + $0x2d0] sm:$0xff]
  %v112 = vld [vmem:[%s3 + $0x2d8] sm:$0xff]
  %v113 = vld [vmem:[%s3 + $0x2e0] sm:$0xff]
  %v114 = vld [vmem:[%s3 + $0x2e8] sm:$0xff]
  %v115 = vld [vmem:[%s3 + $0x2f0] sm:$0xff]
  %v116 = vld [vmem:[%s3 + $0x2f8] sm:$0xff]
  %v117 = vld [vmem:[%s3 + $0x300] sm:$0xff]
  %v118 = vld [vmem:[%s3 + $0x308] sm:$0xff]
  %v119 = vld [vmem:[%s3 + $0x310] sm:$0xff]
  %v120 = vld [vmem:[%s3 + $0x318] sm:$0xff]
  %v121 = vld [vmem:[%s3 + $0x320] sm:$0xff]
  %v122 = vld [vmem:[%s3 + $0x328] sm:$0xff]
  %v123 = vld [vmem:[%s3 + $0x330] sm:$0xff]
  %v124 = vld [vmem:[%s3 + $0x338] sm:$0xff]
  %v125 = vld [vmem:[%s3 + $0x340] sm:$0xff]
  %v126 = vld [vmem:[%s3 + $0x348] sm:$0xff]
  %v127 = vld [vmem:[%s3 + $0x350] sm:$0xff]
  %v128 = vld [vmem:[%s3 + $0x358] sm:$0xff]
  %v129 = vld [vmem:[%s3 + $0x360] sm:$0xff]
  %v130 = vld [vmem:[%s3 + $0x368] sm:$0xff]
  %v131 = vld [vmem:[%s3 + $0x370] sm:$0xff]
  %v132 = vld [vmem:[%s3 + $0x378] sm:$0xff]
  %v133 = vld [vmem:[%s3 + $0x380] sm:$0xff]
  %v134 = vld [vmem:[%s3 + $0x388] sm:$0xff]
  %v135 = vld [vmem:[%s3 + $0x390] sm:$0xff]
  %v136 = vld [vmem:[%s3 + $0x398] sm:$0xff]
  %v137 = vld [vmem:[%s3 + $0x3a0] sm:$0xff]
  %v138 = vld [vmem:[%s3 + $0x3a8] sm:$0xff]
  %v139 = vld [vmem:[%s3 + $0x3b0] sm:$0xff]
  %v140 = vld [vmem:[%s3 + $0x3b8] sm:$0xff]
  %v141 = vld [vmem:[%s3 + $0x3c0] sm:$0xff]
  %v142 = vld [vmem:[%s3 + $0x3c8] sm:$0xff]
  %v143 = vld [vmem:[%s3 + $0x3d0] sm:$0xff]
  %v144 = vld [vmem:[%s3 + $0x3d8] sm:$0xff]
  %v145 = vld [vmem:[%s3 + $0x3e0] sm:$0xff]
  %v146 = vld [vmem:[%s3 + $0x3e8] sm:$0xff]
  %v147 = vld [vmem:[%s3 + $0x3f0] sm:$0xff]
  %v148 = vld [vmem:[%s3 + $0x3f8] sm:$0xff]
  %v149 = vld [vmem:[%s3 + $0x400] sm:$0xff]
  %v150 = vld [vmem:[%s3 + $0x408] sm:$0xff]
  %v151 = vld [vmem:[%s3 + $0x410] sm:$0xff]
  %v152 = vld [vmem:[%s3 + $0x418] sm:$0xff]
  %v153 = vld [vmem:[%s3 + $0x420] sm:$0xff]
  %v154 = vld [vmem:[%s3 + $0x428] sm:$0xff]
  %v155 = vld [vmem:[%s3 + $0x430] sm:$0xff]
  %v156 = vld [vmem:[%s3 + $0x438] sm:$0xff]
  %v157 = vld [vmem:[%s3 + $0x440] sm:$0xff]
  %v158 = vld [vmem:[%s3 + $0x448] sm:$0xff]
  %v159 = vld [vmem:[%s3 + $0x450] sm:$0xff]
  %v160 = vld [vmem:[%s3 + $0x458] sm:$0xff]
  %v161 = vld [vmem:[%s3 + $0x460] sm:$0xff]
  %v162 = vld [vmem:[%s3 + $0x468] sm:$0xff]
  %v163 = vld [vmem:[%s3 + $0x470] sm:$0xff]
  %v164 = vld [vmem:[%s3 + $0x478] sm:$0xff]
  %v165 = vld [vmem:[%s3 + $0x480] sm:$0xff]
  %v166 = vld [vmem:[%s3 + $0x488] sm:$0xff]
  %v167 = vld [vmem:[%s3 + $0x490] sm:$0xff]
  %v168 = vld [vmem:[%s3 + $0x498] sm:$0xff]
  %v169 = vld [vmem:[%s3 + $0x4a0] sm:$0xff]
  %v170 = vld [vmem:[%s3 + $0x4a8] sm:$0xff]
  %v171 = vld [vmem:[%s3 + $0x4b0] sm:$0xff]
  %v172 = vld [vmem:[%s3 + $0x4b8] sm:$0xff]
  %v173 = vld [vmem:[%s3 + $0x4c0] sm:$0xff]
  %v174 = vld [vmem:[%s3 + $0x4c8] sm:$0xff]
  %v175 = vld [vmem:[%s3 + $0x4d0] sm:$0xff]
  %v176 = vld [vmem:[%s3 + $0x4d8] sm:$0xff]
  %v177 = vld [vmem:[%s3 + $0x4e0] sm:$0xff]
  %v178 = vld [vmem:[%s3 + $0x4e8] sm:$0xff]
  %v179 = vld [vmem:[%s3 + $0x4f0] sm:$0xff]
  %v180 = vld [vmem:[%s3 + $0x4f8] sm:$0xff]
  %v181 = vld [vmem:[%s3 + $0x500] sm:$0xff]
  %v182 = vld [vmem:[%s3 + $0x508] sm:$0xff]
  %v183 = vld [vmem:[%s3 + $0x510] sm:$0xff]
  %v184 = vld [vmem:[%s3 + $0x518] sm:$0xff]
  %v185 = vld [vmem:[%s3 + $0x520] sm:$0xff]
  %v186 = vld [vmem:[%s3 + $0x528] sm:$0xff]
  %v187 = vld [vmem:[%s3 + $0x530] sm:$0xff]
  %v188 = vld [vmem:[%s3 + $0x538] sm:$0xff]
  %v189 = vld [vmem:[%s3 + $0x540] sm:$0xff]
  %v190 = vld [vmem:[%s3 + $0x548] sm:$0xff]
  %v191 = vld [vmem:[%s3 + $0x550] sm:$0xff]
  %v192 = vld [vmem:[%s3 + $0x558] sm:$0xff]
  %v193 = vld [vmem:[%s3 + $0x560] sm:$0xff]
  %v194 = vld [vmem:[%s3 + $0x568] sm:$0xff]
  %v195 = vld [vmem:[%s3 + $0x570] sm:$0xff]
  %v196 = vld [vmem:[%s3 + $0x578] sm:$0xff]
  %v197 = vld [vmem:[%s3 + $0x580] sm:$0xff]
  %v198 = vld [vmem:[%s3 + $0x588] sm:$0xff]
  %v199 = vld [vmem:[%s3 + $0x590] sm:$0xff]
  %v200 = vld [vmem:[%s3 + $0x598] sm:$0xff]
  %v201 = vld [vmem:[%s3 + $0x5a0] sm:$0xff]
  %v202 = vld [vmem:[%s3 + $0x5a8] sm:$0xff]
  %v203 = vld [vmem:[%s3 + $0x5b0] sm:$0xff]
  %v204 = vld [vmem:[%s3 + $0x5b8] sm:$0xff]
  %v205 = vld [vmem:[%s3 + $0x5c0] sm:$0xff]
  %v206 = vld [vmem:[%s3 + $0x5c8] sm:$0xff]
  %v207 = vld [vmem:[%s3 + $0x5d0] sm:$0xff]
  %v208 = vld [vmem:[%s3 + $0x5d8] sm:$0xff]
  %v209 = vld [vmem:[%s3 + $0x5e0] sm:$0xff]
  %v210 = vld [vmem:[%s3 + $0x5e8] sm:$0xff]
  %v211 = vld [vmem:[%s3 + $0x5f0] sm:$0xff]
  %v212 = vld [vmem:[%s3 + $0x5f8] sm:$0xff]
  %v213 = vld [vmem:[%s3 + $0x600] sm:$0xff]
  %v214 = vld [vmem:[%s3 + $0x608] sm:$0xff]
  %v215 = vld [vmem:[%s3 + $0x610] sm:$0xff]
  %v216 = vld [vmem:[%s3 + $0x618] sm:$0xff]
  %v217 = vld [vmem:[%s3 + $0x620] sm:$0xff]
  %v218 = vld [vmem:[%s3 + $0x628] sm:$0xff]
  %v219 = vld [vmem:[%s3 + $0x630] sm:$0xff]
  %v220 = vld [vmem:[%s3 + $0x638] sm:$0xff]
  %vm221 = vcmask 130048
  %v223 = vsel %vm221, %v20, 0
  %225 = vmatprep.subr.mxu0 %v22
  %226 = vmatpush1.msra.mxu0 %v21
  %227 = vmatprep.subr.mxu0 %v26
  %228 = vmatpush1.msra.mxu0 %v25
  %229 = vmatprep.subr.mxu0 %v30
  %230 = vmatpush1.msra.mxu0 %v29
  %231 = vmatprep.subr.mxu0 %v34
  %232 = vmatpush1.msra.mxu0 %v33
  %233 = vmatprep.subr.mxu0 %v38
  %234 = vmatpush1.msra.mxu0 %v37
  %235 = vmatprep.subr.mxu0 %v42
  %236 = vmatpush1.msra.mxu0 %v41
  %237 = vmatprep.subr.mxu0 %v46
  %238 = vmatpush1.msra.mxu0 %v45
  %239 = vmatprep.subr.mxu0 %v50
  %240 = vmatpush1.msra.mxu0 %v49
  %241 = vmatprep.subr.mxu0 %v54
  %242 = vmatpush1.msra.mxu0 %v53
  %243 = vmatprep.subr.mxu0 %v58
  %244 = vmatpush1.msra.mxu0 %v57
  %245 = vmatprep.subr.mxu0 %v62
  %246 = vmatpush1.msra.mxu0 %v61
  %247 = vmatprep.subr.mxu0 %v66
  %248 = vmatpush1.msra.mxu0 %v65
  %249 = vmatprep.subr.mxu0 %v70
  %250 = vmatpush1.msra.mxu0 %v69
  %251 = vmatprep.subr.mxu0 %v74
  %252 = vmatpush1.msra.mxu0 %v73
  %253 = vmatprep.subr.mxu0 %v78
  %254 = vmatpush1.msra.mxu0 %v77
  %255 = vmatprep.subr.mxu0 %v82
  %256 = vmatpush1.msra.mxu0 %v81
  %257 = vmatprep.subr.mxu0 %v86
  %258 = vmatpush1.msra.mxu0 %v85
  %259 = vmatprep.subr.mxu0 %v90
  %260 = vmatpush1.msra.mxu0 %v89
  %261 = vmatprep.subr.mxu0 %v94
  %262 = vmatpush1.msra.mxu0 %v93
  %263 = vmatprep.subr.mxu0 %v98
  %264 = vmatpush1.msra.mxu0 %v97
  %265 = vmatprep.subr.mxu0 %v102
  %266 = vmatpush1.msra.mxu0 %v101
  %267 = vmatprep.subr.mxu0 %v106
  %268 = vmatpush1.msra.mxu0 %v105
  %269 = vmatprep.subr.mxu0 %v110
  %270 = vmatpush1.msra.mxu0 %v109
  %271 = vmatprep.subr.mxu0 %v114
  %272 = vmatpush1.msra.mxu0 %v113
  %273 = vmatprep.subr.mxu0 %v118
  %274 = vmatpush1.msra.mxu0 %v117
  %275 = vmatprep.subr.mxu0 %v122
  %276 = vmatpush1.msra.mxu0 %v121
  %277 = vmatprep.subr.mxu0 %v126
  %278 = vmatpush1.msra.mxu0 %v125
  %279 = vmatprep.subr.mxu0 %v130
  %280 = vmatpush1.msra.mxu0 %v129
  %281 = vmatprep.subr.mxu0 %v134
  %282 = vmatpush1.msra.mxu0 %v133
  %283 = vmatprep.subr.mxu0 %v138
  %284 = vmatpush1.msra.mxu0 %v137
  %285 = vmatprep.subr.mxu0 %v142
  %286 = vmatpush1.msra.mxu0 %v141
  %287 = vmatprep.subr.mxu0 %v146
  %288 = vmatpush1.msra.mxu0 %v145
  %289 = vmatprep.mubr.f32.mxu0 %v18
  %290 = vmatmul.mubr.f32.gmra.mrb[0].mxu0 %v17
  %v291 = vpop.f32.mrb[0].mxu0
  %v292 = vadd.f32 0.0, %v291
  %v293 = vpop.f32.mrb[0].mxu0
  %v294 = vadd.f32 0.0, %v293
  %295 = vdwg.mxu0
  %296 = vmatprep.subr.mxu0 %v150
  %297 = vmatpush1.msra.mxu0 %v149
  %298 = vmatprep.subr.mxu0 %v154
  %299 = vmatpush1.msra.mxu0 %v153
  %300 = vmatprep.subr.mxu0 %v158
  %301 = vmatpush1.msra.mxu0 %v157
  %302 = vmatprep.subr.mxu0 %v162
  %303 = vmatpush1.msra.mxu0 %v161
  %304 = vmatprep.subr.mxu0 %v166
  %305 = vmatpush1.msra.mxu0 %v165
  %306 = vmatprep.subr.mxu0 %v170
  %307 = vmatpush1.msra.mxu0 %v169
  %308 = vmatprep.subr.mxu0 %v174
  %309 = vmatpush1.msra.mxu0 %v173
  %310 = vmatprep.subr.mxu0 %v178
  %311 = vmatpush1.msra.mxu0 %v177
  %312 = vmatprep.subr.mxu0 %v182
  %313 = vmatpush1.msra.mxu0 %v181
  %314 = vmatprep.subr.mxu0 %v186
  %315 = vmatpush1.msra.mxu0 %v185
  %316 = vmatprep.subr.mxu0 %v190
  %317 = vmatpush1.msra.mxu0 %v189
  %318 = vmatprep.subr.mxu0 %v194
  %319 = vmatpush1.msra.mxu0 %v193
  %320 = vmatprep.subr.mxu0 %v198
  %321 = vmatpush1.msra.mxu0 %v197
  %322 = vmatprep.subr.mxu0 %v202
  %323 = vmatpush1.msra.mxu0 %v201
  %324 = vmatprep.subr.mxu0 %v206
  %325 = vmatpush1.msra.mxu0 %v205
  %326 = vmatprep.subr.mxu0 %v210
  %327 = vmatpush1.msra.mxu0 %v209
  %328 = vmatprep.subr.mxu0 %v214
  %329 = vmatpush1.msra.mxu0 %v213
  %330 = vmatprep.subr.mxu0 %v218
  %331 = vmatpush1.msra.mxu0 %v217
  %332 = vmatprep.subr.mxu0 0.0
  %333 = vmatpush1.msra.mxu0 0.0
  %334 = vmatprep.subr.mxu0 0.0
  %335 = vmatpush1.msra.mxu0 0.0
  %336 = vmatprep.subr.mxu0 0.0
  %337 = vmatpush1.msra.mxu0 0.0
  %338 = vmatprep.subr.mxu0 0.0
  %339 = vmatpush1.msra.mxu0 0.0
  %340 = vmatprep.subr.mxu0 0.0
  %341 = vmatpush1.msra.mxu0 0.0
  %342 = vmatprep.subr.mxu0 0.0
  %343 = vmatpush1.msra.mxu0 0.0
  %344 = vmatprep.subr.mxu0 0.0
  %345 = vmatpush1.msra.mxu0 0.0
  %346 = vmatprep.subr.mxu0 0.0
  %347 = vmatpush1.msra.mxu0 0.0
  %348 = vmatprep.subr.mxu0 0.0
  %349 = vmatpush1.msra.mxu0 0.0
  %350 = vmatprep.subr.mxu0 0.0
  %351 = vmatpush1.msra.mxu0 0.0
  %352 = vmatprep.subr.mxu0 0.0
  %353 = vmatpush1.msra.mxu0 0.0
  %354 = vmatprep.subr.mxu0 0.0
  %355 = vmatpush1.msra.mxu0 0.0
  %356 = vmatprep.subr.mxu0 0.0
  %357 = vmatpush1.msra.mxu0 0.0
  %358 = vmatprep.subr.mxu0 0.0
  %359 = vmatpush1.msra.mxu0 0.0
  %360 = vmatprep.mubr.f32.mxu0 %v223
  %361 = vmatmul.mubr.f32.gmra.mrb[0].mxu0 %v19
  %v362 = vpop.f32.mrb[0].mxu0
  %v363 = vadd.f32 %v292, %v362
  %v364 = vpop.f32.mrb[0].mxu0
  %v365 = vadd.f32 %v294, %v364
  %366 = vdwg.mxu0
  %367 = vmatprep.subr.mxu0 %v24
  %368 = vmatpush1.msra.mxu0 %v23
  %369 = vmatprep.subr.mxu0 %v28
  %370 = vmatpush1.msra.mxu0 %v27
  %371 = vmatprep.subr.mxu0 %v32
  %372 = vmatpush1.msra.mxu0 %v31
  %373 = vmatprep.subr.mxu0 %v36
  %374 = vmatpush1.msra.mxu0 %v35
  %375 = vmatprep.subr.mxu0 %v40
  %376 = vmatpush1.msra.mxu0 %v39
  %377 = vmatprep.subr.mxu0 %v44
  %378 = vmatpush1.msra.mxu0 %v43
  %379 = vmatprep.subr.mxu0 %v48
  %380 = vmatpush1.msra.mxu0 %v47
  %381 = vmatprep.subr.mxu0 %v52
  %382 = vmatpush1.msra.mxu0 %v51
  %383 = vmatprep.subr.mxu0 %v56
  %384 = vmatpush1.msra.mxu0 %v55
  %385 = vmatprep.subr.mxu0 %v60
  %386 = vmatpush1.msra.mxu0 %v59
  %387 = vmatprep.subr.mxu0 %v64
  %388 = vmatpush1.msra.mxu0 %v63
  %389 = vmatprep.subr.mxu0 %v68
  %390 = vmatpush1.msra.mxu0 %v67
  %391 = vmatprep.subr.mxu0 %v72
  %392 = vmatpush1.msra.mxu0 %v71
  %393 = vmatprep.subr.mxu0 %v76
  %394 = vmatpush1.msra.mxu0 %v75
  %395 = vmatprep.subr.mxu0 %v80
  %396 = vmatpush1.msra.mxu0 %v79
  %397 = vmatprep.subr.mxu0 %v84
  %398 = vmatpush1.msra.mxu0 %v83
  %399 = vmatprep.subr.mxu0 %v88
  %400 = vmatpush1.msra.mxu0 %v87
  %401 = vmatprep.subr.mxu0 %v92
  %402 = vmatpush1.msra.mxu0 %v91
  %403 = vmatprep.subr.mxu0 %v96
  %404 = vmatpush1.msra.mxu0 %v95
  %405 = vmatprep.subr.mxu0 %v100
  %406 = vmatpush1.msra.mxu0 %v99
  %407 = vmatprep.subr.mxu0 %v104
  %408 = vmatpush1.msra.mxu0 %v103
  %409 = vmatprep.subr.mxu0 %v108
  %410 = vmatpush1.msra.mxu0 %v107
  %411 = vmatprep.subr.mxu0 %v112
  %412 = vmatpush1.msra.mxu0 %v111
  %413 = vmatprep.subr.mxu0 %v116
  %414 = vmatpush1.msra.mxu0 %v115
  %415 = vmatprep.subr.mxu0 %v120
  %416 = vmatpush1.msra.mxu0 %v119
  %417 = vmatprep.subr.mxu0 %v124
  %418 = vmatpush1.msra.mxu0 %v123
  %419 = vmatprep.subr.mxu0 %v128
  %420 = vmatpush1.msra.mxu0 %v127
  %421 = vmatprep.subr.mxu0 %v132
  %422 = vmatpush1.msra.mxu0 %v131
  %423 = vmatprep.subr.mxu0 %v136
  %424 = vmatpush1.msra.mxu0 %v135
  %425 = vmatprep.subr.mxu0 %v140
  %426 = vmatpush1.msra.mxu0 %v139
  %427 = vmatprep.subr.mxu0 %v144
  %428 = vmatpush1.msra.mxu0 %v143
  %429 = vmatprep.subr.mxu0 %v148
  %430 = vmatpush1.msra.mxu0 %v147
  %431 = vmatprep.mubr.f32.mxu0 %v18
  %432 = vmatmul.mubr.f32.gmra.mrb[0].mxu0 %v17
  %v433 = vpop.f32.mrb[0].mxu0
  %v434 = vadd.f32 0.0, %v433
  %v435 = vpop.f32.mrb[0].mxu0
  %v436 = vadd.f32 0.0, %v435
  %437 = vdwg.mxu0
  %438 = vmatprep.subr.mxu0 %v152
  %439 = vmatpush1.msra.mxu0 %v151
  %440 = vmatprep.subr.mxu0 %v156
  %441 = vmatpush1.msra.mxu0 %v155
  %442 = vmatprep.subr.mxu0 %v160
  %443 = vmatpush1.msra.mxu0 %v159
  %444 = vmatprep.subr.mxu0 %v164
  %445 = vmatpush1.msra.mxu0 %v163
  %446 = vmatprep.subr.mxu0 %v168
  %447 = vmatpush1.msra.mxu0 %v167
  %448 = vmatprep.subr.mxu0 %v172
  %449 = vmatpush1.msra.mxu0 %v171
  %450 = vmatprep.subr.mxu0 %v176
  %451 = vmatpush1.msra.mxu0 %v175
  %452 = vmatprep.subr.mxu0 %v180
  %453 = vmatpush1.msra.mxu0 %v179
  %454 = vmatprep.subr.mxu0 %v184
  %455 = vmatpush1.msra.mxu0 %v183
  %456 = vmatprep.subr.mxu0 %v188
  %457 = vmatpush1.msra.mxu0 %v187
  %458 = vmatprep.subr.mxu0 %v192
  %459 = vmatpush1.msra.mxu0 %v191
  %460 = vmatprep.subr.mxu0 %v196
  %461 = vmatpush1.msra.mxu0 %v195
  %462 = vmatprep.subr.mxu0 %v200
  %463 = vmatpush1.msra.mxu0 %v199
  %464 = vmatprep.subr.mxu0 %v204
  %465 = vmatpush1.msra.mxu0 %v203
  %466 = vmatprep.subr.mxu0 %v208
  %467 = vmatpush1.msra.mxu0 %v207
  %468 = vmatprep.subr.mxu0 %v212
  %469 = vmatpush1.msra.mxu0 %v211
  %470 = vmatprep.subr.mxu0 %v216
  %471 = vmatpush1.msra.mxu0 %v215
  %472 = vmatprep.subr.mxu0 %v220
  %473 = vmatpush1.msra.mxu0 %v219
  %474 = vmatprep.subr.mxu0 0.0
  %475 = vmatpush1.msra.mxu0 0.0
  %476 = vmatprep.subr.mxu0 0.0
  %477 = vmatpush1.msra.mxu0 0.0
  %478 = vmatprep.subr.mxu0 0.0
  %479 = vmatpush1.msra.mxu0 0.0
  %480 = vmatprep.subr.mxu0 0.0
  %481 = vmatpush1.msra.mxu0 0.0
  %482 = vmatprep.subr.mxu0 0.0
  %483 = vmatpush1.msra.mxu0 0.0
  %484 = vmatprep.subr.mxu0 0.0
  %485 = vmatpush1.msra.mxu0 0.0
  %486 = vmatprep.subr.mxu0 0.0
  %487 = vmatpush1.msra.mxu0 0.0
  %488 = vmatprep.subr.mxu0 0.0
  %489 = vmatpush1.msra.mxu0 0.0
  %490 = vmatprep.subr.mxu0 0.0
  %491 = vmatpush1.msra.mxu0 0.0
  %492 = vmatprep.subr.mxu0 0.0
  %493 = vmatpush1.msra.mxu0 0.0
  %494 = vmatprep.subr.mxu0 0.0
  %495 = vmatpush1.msra.mxu0 0.0
  %496 = vmatprep.subr.mxu0 0.0
  %497 = vmatpush1.msra.mxu0 0.0
  %498 = vmatprep.subr.mxu0 0.0
  %499 = vmatpush1.msra.mxu0 0.0
  %500 = vmatprep.subr.mxu0 0.0
  %501 = vmatpush1.msra.mxu0 0.0
  %502 = vmatprep.mubr.f32.mxu0 %v223
  %503 = vmatmul.mubr.f32.gmra.mrb[0].mxu0 %v19
  %v504 = vpop.f32.mrb[0].mxu0
  %v505 = vadd.f32 %v434, %v504
  %v506 = vpop.f32.mrb[0].mxu0
  %v507 = vadd.f32 %v436, %v506
  %508 = vdwg.mxu0
  %v509 = vadd.f32 %v363, %v365
  %v510 = vadd.f32 %v509, %v505
  %vm511 = vcmask 539648
  %v512 = vsel %vm511, %v507, 0.0
  %v513 = vadd.f32 %v510, %v512
  %514 = vadd.xlane.f32.xlu0 %v513
  %v515 = vpop.xlane.xlu0 %514
  %v516 = vrcp.pop 450.0
  %v517 = vmul.f32 %v515, %v516
  %v518 = vsub.f32 %v363, %v517
  %v519 = vsub.f32 %v365, %v517
  %v520 = vsub.f32 %v505, %v517
  %v521 = vsub.f32 %v507, %v517
  %v522 = vmul.f32 %v518, %v518
  %v523 = vmul.f32 %v519, %v519
  %v524 = vmul.f32 %v520, %v520
  %v525 = vmul.f32 %v521, %v521
  %v526 = vadd.f32 %v522, %v523
  %v527 = vadd.f32 %v526, %v524
  %v528 = vsel %vm511, %v525, 0.0
  %v529 = vadd.f32 %v527, %v528
  %530 = vadd.xlane.f32.xlu0 %v529
  %v531 = vpop.xlane.xlu0 %530
  %v532 = vmul.f32 %v531, %v516
  %v533 = vadd.f32 %v532, 1e-05
  %v534 = vrsqrt.pop %v533
  %v535 = vmul.f32 %v518, %v534
  %v536 = vmul.f32 %v519, %v534
  %v537 = vmul.f32 %v520, %v534
  %v538 = vmul.f32 %v521, %v534
  %v539 = vld [vmem:[%s1] sm:$0xff]
  %541 = vset.pattern.permute.xlu0 0
  %542 = vperm.xlu0 %541, %v539
  %v543 = vpop.permute.xlu0 %542
  %v545 = vmul.f32 %v535, %v543
  %v546 = vmul.f32 %v536, %v543
  %v547 = vmul.f32 %v537, %v543
  %v548 = vmul.f32 %v538, %v543
  %v549 = vld [vmem:[%s2] sm:$0xff]
  %551 = vset.pattern.permute.xlu0 0
  %552 = vperm.xlu0 %551, %v549
  %v553 = vpop.permute.xlu0 %552
  %v555 = vadd.f32 %v545, %v553
  %v556 = vadd.f32 %v546, %v553
  %v557 = vadd.f32 %v547, %v553
  %v558 = vadd.f32 %v548, %v553
  %v559 = vtanh.pop %v555
  %v560 = vtanh.pop %v556
  %v561 = vtanh.pop %v557
  %v562 = vtanh.pop %v558
  %563 = vst [vmem:[%s4] sm:$0xff] %v559
  %564 = vst [vmem:[%s4 + $0x8] sm:$0xff] %v560
  %565 = vst [vmem:[%s4 + $0x10] sm:$0xff] %v561
  %566 = vst.msk [vmem:[%s4 + $0x18] sm:$0xff] %vm511, %v562
  // Predicated region
  $region18: #{cnnae_forward.8} parent=0 // pred_check
    _
  $region19: #{cnnae_forward.8} parent=0 // pred_check_branch
    %568 = sbr.rel (0) target = $region21
  $region20: #{cnnae_forward.8} parent=0 // pred_region
    _
  $region21: #{cnnae_forward.8} parent=0 // pred_fallthru
    _
  // Predicated region
  $region22: #{cnnae_forward.8} parent=0 // pred_check
    _
  $region23: #{cnnae_forward.8} parent=0 // pred_check_branch
    %570 = sbr.rel (0) target = $region25
  $region24: #{cnnae_forward.8} parent=0 // pred_region
    _
  $region25: #{cnnae_forward.8} parent=0 // pred_fallthru
    _

// kernel: cnnae_forward.9
$region0: #{cnnae_forward.9}
  #allocation0 [shape = 'u32[]', space=smem, size = 0x4, offset = 0x4, fixed_abs, tag = 'smem constant byte address 0x4 - core index']
  #allocation1 [shape = 'u32[144,128]{1,0:T(1,128)}', space=vmem, size = 0x12000, scoped, tag = 'internal scratch']
  %s0 = inlined_call_operand.vmem [shape: f32[3,32], index: 0, kind: input, shape index: {}]
  %s1 = inlined_call_operand.vmem [shape: f32[3,1], index: 1, kind: input, shape index: {}]
  %s2 = inlined_call_operand.vmem [shape: f32[3,1], index: 2, kind: input, shape index: {}]
  %s3 = inlined_call_operand.vmem [shape: f32[32,1568], index: 3, kind: input, shape index: {}]
  %s4 = inlined_call_operand.vmem [shape: f32[3,1568], index: 4, kind: output, shape index: {}]
  %s5 = sld [smem:[#allocation0]]
  $region26: #{cnnae_forward.9} parent=0
    _
  %s7 = ssub.s32 1, %s5
  %s8 = scalar_select 0, %s7, %s5
  // Predicated region
  $region2: #{cnnae_forward.9} parent=0 // pred_check
    _
  $region3: #{cnnae_forward.9} parent=0 // pred_check_branch
    %10 = sbr.rel (0) target = $region5
  $region4: #{cnnae_forward.9} parent=0 // pred_region
    _
  $region5: #{cnnae_forward.9} parent=0 // pred_fallthru
    _
  // Predicated region
  $region6: #{cnnae_forward.9} parent=0 // pred_check
    _
  $region7: #{cnnae_forward.9} parent=0 // pred_check_branch
    %12 = sbr.rel (0) target = $region9
  $region8: #{cnnae_forward.9} parent=0 // pred_region
    _
  $region9: #{cnnae_forward.9} parent=0 // pred_fallthru
    _
  // Predicated region
  $region10: #{cnnae_forward.9} parent=0 // pred_check
    _
  $region11: #{cnnae_forward.9} parent=0 // pred_check_branch
    %14 = sbr.rel (0) target = $region13
  $region12: #{cnnae_forward.9} parent=0 // pred_region
    _
  $region13: #{cnnae_forward.9} parent=0 // pred_fallthru
    _
  // Predicated region
  $region14: #{cnnae_forward.9} parent=0 // pred_check
    _
  $region15: #{cnnae_forward.9} parent=0 // pred_check_branch
    %16 = sbr.rel (0) target = $region17
  $region16: #{cnnae_forward.9} parent=0 // pred_region
    _
  $region17: #{cnnae_forward.9} parent=0 // pred_fallthru
    _
  %v17 = vld [vmem:[%s0] sm:$0x7]
  %v18 = vld [vmem:[%s3] sm:$0xff]
  %v19 = vld [vmem:[%s3 + $0x8] sm:$0xff]
  %v20 = vld [vmem:[%s3 + $0x10] sm:$0xff]
  %v21 = vld [vmem:[%s3 + $0x18] sm:$0xff]
  %v22 = vld [vmem:[%s3 + $0x20] sm:$0xff]
  %v23 = vld [vmem:[%s3 + $0x28] sm:$0xff]
  %v24 = vld [vmem:[%s3 + $0x30] sm:$0xff]
  %v25 = vld [vmem:[%s3 + $0x38] sm:$0xff]
  %v26 = vld [vmem:[%s3 + $0x40] sm:$0xff]
  %v27 = vld [vmem:[%s3 + $0x48] sm:$0xff]
  %v28 = vld [vmem:[%s3 + $0x50] sm:$0xff]
  %v29 = vld [vmem:[%s3 + $0x58] sm:$0xff]
  %v30 = vld [vmem:[%s3 + $0x60] sm:$0xff]
  %v31 = vld [vmem:[%s3 + $0x68] sm:$0xff]
  %v32 = vld [vmem:[%s3 + $0x70] sm:$0xff]
  %v33 = vld [vmem:[%s3 + $0x78] sm:$0xff]
  %v34 = vld [vmem:[%s3 + $0x80] sm:$0xff]
  %v35 = vld [vmem:[%s3 + $0x88] sm:$0xff]
  %v36 = vld [vmem:[%s3 + $0x90] sm:$0xff]
  %v37 = vld [vmem:[%s3 + $0x98] sm:$0xff]
  %v38 = vld [vmem:[%s3 + $0xa0] sm:$0xff]
  %v39 = vld [vmem:[%s3 + $0xa8] sm:$0xff]
  %v40 = vld [vmem:[%s3 + $0xb0] sm:$0xff]
  %v41 = vld [vmem:[%s3 + $0xb8] sm:$0xff]
  %v42 = vld [vmem:[%s3 + $0xc0] sm:$0xff]
  %v43 = vld [vmem:[%s3 + $0xc8] sm:$0xff]
  %v44 = vld [vmem:[%s3 + $0xd0] sm:$0xff]
  %v45 = vld [vmem:[%s3 + $0xd8] sm:$0xff]
  %v46 = vld [vmem:[%s3 + $0xe0] sm:$0xff]
  %v47 = vld [vmem:[%s3 + $0xe8] sm:$0xff]
  %v48 = vld [vmem:[%s3 + $0xf0] sm:$0xff]
  %v49 = vld [vmem:[%s3 + $0xf8] sm:$0xff]
  %v50 = vld [vmem:[%s3 + $0x100] sm:$0xff]
  %v51 = vld [vmem:[%s3 + $0x108] sm:$0xff]
  %v52 = vld [vmem:[%s3 + $0x110] sm:$0xff]
  %v53 = vld [vmem:[%s3 + $0x118] sm:$0xff]
  %v54 = vld [vmem:[%s3 + $0x120] sm:$0xff]
  %v55 = vld [vmem:[%s3 + $0x128] sm:$0xff]
  %v56 = vld [vmem:[%s3 + $0x130] sm:$0xff]
  %v57 = vld [vmem:[%s3 + $0x138] sm:$0xff]
  %v58 = vld [vmem:[%s3 + $0x140] sm:$0xff]
  %v59 = vld [vmem:[%s3 + $0x148] sm:$0xff]
  %v60 = vld [vmem:[%s3 + $0x150] sm:$0xff]
  %v61 = vld [vmem:[%s3 + $0x158] sm:$0xff]
  %v62 = vld [vmem:[%s3 + $0x160] sm:$0xff]
  %v63 = vld [vmem:[%s3 + $0x168] sm:$0xff]
  %v64 = vld [vmem:[%s3 + $0x170] sm:$0xff]
  %v65 = vld [vmem:[%s3 + $0x178] sm:$0xff]
  %v66 = vld [vmem:[%s3 + $0x180] sm:$0xff]
  %v67 = vld [vmem:[%s3 + $0x188] sm:$0xff]
  %v68 = vld [vmem:[%s3 + $0x190] sm:$0xff]
  %v69 = vld [vmem:[%s3 + $0x198] sm:$0xff]
  %vm70 = vcmask 261120
  %v72 = vsel %vm70, %v17, 0
  %74 = vmatprep.subr.mxu0 %v19
  %75 = vmatpush1.msra.mxu0 %v18
  %76 = vmatprep.subr.mxu0 %v32
  %77 = vmatpush1.msra.mxu0 %v31
  %78 = vmatprep.subr.mxu0 %v45
  %79 = vmatpush1.msra.mxu0 %v44
  %80 = vmatprep.subr.mxu0 %v58
  %81 = vmatpush1.msra.mxu0 %v57
  %82 = vmatprep.subr.mxu0 0.0
  %83 = vmatpush1.msra.mxu0 0.0
  %84 = vmatprep.subr.mxu0 0.0
  %85 = vmatpush1.msra.mxu0 0.0
  %86 = vmatprep.subr.mxu0 0.0
  %87 = vmatpush1.msra.mxu0 0.0
  %88 = vmatprep.subr.mxu0 0.0
  %89 = vmatpush1.msra.mxu0 0.0
  %90 = vmatprep.subr.mxu0 0.0
  %91 = vmatpush1.msra.mxu0 0.0
  %92 = vmatprep.subr.mxu0 0.0
  %93 = vmatpush1.msra.mxu0 0.0
  %94 = vmatprep.subr.mxu0 0.0
  %95 = vmatpush1.msra.mxu0 0.0
  %96 = vmatprep.subr.mxu0 0.0
  %97 = vmatpush1.msra.mxu0 0.0
  %98 = vmatprep.subr.mxu0 0.0
  %99 = vmatpush1.msra.mxu0 0.0
  %100 = vmatprep.subr.mxu0 0.0
  %101 = vmatpush1.msra.mxu0 0.0
  %102 = vmatprep.subr.mxu0 0.0
  %103 = vmatpush1.msra.mxu0 0.0
  %104 = vmatprep.subr.mxu0 0.0
  %105 = vmatpush1.msra.mxu0 0.0
  %106 = vmatprep.subr.mxu0 0.0
  %107 = vmatpush1.msra.mxu0 0.0
  %108 = vmatprep.subr.mxu0 0.0
  %109 = vmatpush1.msra.mxu0 0.0
  %110 = vmatprep.subr.mxu0 0.0
  %111 = vmatpush1.msra.mxu0 0.0
  %112 = vmatprep.subr.mxu0 0.0
  %113 = vmatpush1.msra.mxu0 0.0
  %114 = vmatprep.subr.mxu0 0.0
  %115 = vmatpush1.msra.mxu0 0.0
  %116 = vmatprep.subr.mxu0 0.0
  %117 = vmatpush1.msra.mxu0 0.0
  %118 = vmatprep.subr.mxu0 0.0
  %119 = vmatpush1.msra.mxu0 0.0
  %120 = vmatprep.subr.mxu0 0.0
  %121 = vmatpush1.msra.mxu0 0.0
  %122 = vmatprep.subr.mxu0 0.0
  %123 = vmatpush1.msra.mxu0 0.0
  %124 = vmatprep.subr.mxu0 0.0
  %125 = vmatpush1.msra.mxu0 0.0
  %126 = vmatprep.subr.mxu0 0.0
  %127 = vmatpush1.msra.mxu0 0.0
  %128 = vmatprep.subr.mxu0 0.0
  %129 = vmatpush1.msra.mxu0 0.0
  %130 = vmatprep.subr.mxu0 0.0
  %131 = vmatpush1.msra.mxu0 0.0
  %132 = vmatprep.subr.mxu0 0.0
  %133 = vmatpush1.msra.mxu0 0.0
  %134 = vmatprep.subr.mxu0 0.0
  %135 = vmatpush1.msra.mxu0 0.0
  %136 = vmatprep.subr.mxu0 0.0
  %137 = vmatpush1.msra.mxu0 0.0
  %138 = vmatprep.mubr.f32.mxu0 0.0
  %139 = vmatmul.mubr.f32.gmra.mrb[0].mxu0 %v72
  %v140 = vpop.f32.mrb[0].mxu0
  %v141 = vadd.f32 0.0, %v140
  %v142 = vpop.f32.mrb[0].mxu0
  %v143 = vadd.f32 0.0, %v142
  %144 = vdwg.mxu0
  %145 = vmatprep.subr.mxu0 %v21
  %146 = vmatpush1.msra.mxu0 %v20
  %147 = vmatprep.subr.mxu0 %v34
  %148 = vmatpush1.msra.mxu0 %v33
  %149 = vmatprep.subr.mxu0 %v47
  %150 = vmatpush1.msra.mxu0 %v46
  %151 = vmatprep.subr.mxu0 %v60
  %152 = vmatpush1.msra.mxu0 %v59
  %153 = vmatprep.subr.mxu0 0.0
  %154 = vmatpush1.msra.mxu0 0.0
  %155 = vmatprep.subr.mxu0 0.0
  %156 = vmatpush1.msra.mxu0 0.0
  %157 = vmatprep.subr.mxu0 0.0
  %158 = vmatpush1.msra.mxu0 0.0
  %159 = vmatprep.subr.mxu0 0.0
  %160 = vmatpush1.msra.mxu0 0.0
  %161 = vmatprep.subr.mxu0 0.0
  %162 = vmatpush1.msra.mxu0 0.0
  %163 = vmatprep.subr.mxu0 0.0
  %164 = vmatpush1.msra.mxu0 0.0
  %165 = vmatprep.subr.mxu0 0.0
  %166 = vmatpush1.msra.mxu0 0.0
  %167 = vmatprep.subr.mxu0 0.0
  %168 = vmatpush1.msra.mxu0 0.0
  %169 = vmatprep.subr.mxu0 0.0
  %170 = vmatpush1.msra.mxu0 0.0
  %171 = vmatprep.subr.mxu0 0.0
  %172 = vmatpush1.msra.mxu0 0.0
  %173 = vmatprep.subr.mxu0 0.0
  %174 = vmatpush1.msra.mxu0 0.0
  %175 = vmatprep.subr.mxu0 0.0
  %176 = vmatpush1.msra.mxu0 0.0
  %177 = vmatprep.subr.mxu0 0.0
  %178 = vmatpush1.msra.mxu0 0.0
  %179 = vmatprep.subr.mxu0 0.0
  %180 = vmatpush1.msra.mxu0 0.0
  %181 = vmatprep.subr.mxu0 0.0
  %182 = vmatpush1.msra.mxu0 0.0
  %183 = vmatprep.subr.mxu0 0.0
  %184 = vmatpush1.msra.mxu0 0.0
  %185 = vmatprep.subr.mxu0 0.0
  %186 = vmatpush1.msra.mxu0 0.0
  %187 = vmatprep.subr.mxu0 0.0
  %188 = vmatpush1.msra.mxu0 0.0
  %189 = vmatprep.subr.mxu0 0.0
  %190 = vmatpush1.msra.mxu0 0.0
  %191 = vmatprep.subr.mxu0 0.0
  %192 = vmatpush1.msra.mxu0 0.0
  %193 = vmatprep.subr.mxu0 0.0
  %194 = vmatpush1.msra.mxu0 0.0
  %195 = vmatprep.subr.mxu0 0.0
  %196 = vmatpush1.msra.mxu0 0.0
  %197 = vmatprep.subr.mxu0 0.0
  %198 = vmatpush1.msra.mxu0 0.0
  %199 = vmatprep.subr.mxu0 0.0
  %200 = vmatpush1.msra.mxu0 0.0
  %201 = vmatprep.subr.mxu0 0.0
  %202 = vmatpush1.msra.mxu0 0.0
  %203 = vmatprep.subr.mxu0 0.0
  %204 = vmatpush1.msra.mxu0 0.0
  %205 = vmatprep.subr.mxu0 0.0
  %206 = vmatpush1.msra.mxu0 0.0
  %207 = vmatprep.subr.mxu0 0.0
  %208 = vmatpush1.msra.mxu0 0.0
  %209 = vmatprep.mubr.f32.mxu0 0.0
  %210 = vmatmul.mubr.f32.gmra.mrb[0].mxu0 %v72
  %v211 = vpop.f32.mrb[0].mxu0
  %v212 = vadd.f32 0.0, %v211
  %v213 = vpop.f32.mrb[0].mxu0
  %v214 = vadd.f32 0.0, %v213
  %215 = vdwg.mxu0
  %216 = vmatprep.subr.mxu0 %v23
  %217 = vmatpush1.msra.mxu0 %v22
  %218 = vmatprep.subr.mxu0 %v36
  %219 = vmatpush1.msra.mxu0 %v35
  %220 = vmatprep.subr.mxu0 %v49
  %221 = vmatpush1.msra.mxu0 %v48
  %222 = vmatprep.subr.mxu0 %v62
  %223 = vmatpush1.msra.mxu0 %v61
  %224 = vmatprep.subr.mxu0 0.0
  %225 = vmatpush1.msra.mxu0 0.0
  %226 = vmatprep.subr.mxu0 0.0
  %227 = vmatpush1.msra.mxu0 0.0
  %228 = vmatprep.subr.mxu0 0.0
  %229 = vmatpush1.msra.mxu0 0.0
  %230 = vmatprep.subr.mxu0 0.0
  %231 = vmatpush1.msra.mxu0 0.0
  %232 = vmatprep.subr.mxu0 0.0
  %233 = vmatpush1.msra.mxu0 0.0
  %234 = vmatprep.subr.mxu0 0.0
  %235 = vmatpush1.msra.mxu0 0.0
  %236 = vmatprep.subr.mxu0 0.0
  %237 = vmatpush1.msra.mxu0 0.0
  %238 = vmatprep.subr.mxu0 0.0
  %239 = vmatpush1.msra.mxu0 0.0
  %240 = vmatprep.subr.mxu0 0.0
  %241 = vmatpush1.msra.mxu0 0.0
  %242 = vmatprep.subr.mxu0 0.0
  %243 = vmatpush1.msra.mxu0 0.0
  %244 = vmatprep.subr.mxu0 0.0
  %245 = vmatpush1.msra.mxu0 0.0
  %246 = vmatprep.subr.mxu0 0.0
  %247 = vmatpush1.msra.mxu0 0.0
  %248 = vmatprep.subr.mxu0 0.0
  %249 = vmatpush1.msra.mxu0 0.0
  %250 = vmatprep.subr.mxu0 0.0
  %251 = vmatpush1.msra.mxu0 0.0
  %252 = vmatprep.subr.mxu0 0.0
  %253 = vmatpush1.msra.mxu0 0.0
  %254 = vmatprep.subr.mxu0 0.0
  %255 = vmatpush1.msra.mxu0 0.0
  %256 = vmatprep.subr.mxu0 0.0
  %257 = vmatpush1.msra.mxu0 0.0
  %258 = vmatprep.subr.mxu0 0.0
  %259 = vmatpush1.msra.mxu0 0.0
  %260 = vmatprep.subr.mxu0 0.0
  %261 = vmatpush1.msra.mxu0 0.0
  %262 = vmatprep.subr.mxu0 0.0
  %263 = vmatpush1.msra.mxu0 0.0
  %264 = vmatprep.subr.mxu0 0.0
  %265 = vmatpush1.msra.mxu0 0.0
  %266 = vmatprep.subr.mxu0 0.0
  %267 = vmatpush1.msra.mxu0 0.0
  %268 = vmatprep.subr.mxu0 0.0
  %269 = vmatpush1.msra.mxu0 0.0
  %270 = vmatprep.subr.mxu0 0.0
  %271 = vmatpush1.msra.mxu0 0.0
  %272 = vmatprep.subr.mxu0 0.0
  %273 = vmatpush1.msra.mxu0 0.0
  %274 = vmatprep.subr.mxu0 0.0
  %275 = vmatpush1.msra.mxu0 0.0
  %276 = vmatprep.subr.mxu0 0.0
  %277 = vmatpush1.msra.mxu0 0.0
  %278 = vmatprep.subr.mxu0 0.0
  %279 = vmatpush1.msra.mxu0 0.0
  %280 = vmatprep.mubr.f32.mxu0 0.0
  %281 = vmatmul.mubr.f32.gmra.mrb[0].mxu0 %v72
  %v282 = vpop.f32.mrb[0].mxu0
  %v283 = vadd.f32 0.0, %v282
  %v284 = vpop.f32.mrb[0].mxu0
  %v285 = vadd.f32 0.0, %v284
  %286 = vdwg.mxu0
  %287 = vmatprep.subr.mxu0 %v25
  %288 = vmatpush1.msra.mxu0 %v24
  %289 = vmatprep.subr.mxu0 %v38
  %290 = vmatpush1.msra.mxu0 %v37
  %291 = vmatprep.subr.mxu0 %v51
  %292 = vmatpush1.msra.mxu0 %v50
  %293 = vmatprep.subr.mxu0 %v64
  %294 = vmatpush1.msra.mxu0 %v63
  %295 = vmatprep.subr.mxu0 0.0
  %296 = vmatpush1.msra.mxu0 0.0
  %297 = vmatprep.subr.mxu0 0.0
  %298 = vmatpush1.msra.mxu0 0.0
  %299 = vmatprep.subr.mxu0 0.0
  %300 = vmatpush1.msra.mxu0 0.0
  %301 = vmatprep.subr.mxu0 0.0
  %302 = vmatpush1.msra.mxu0 0.0
  %303 = vmatprep.subr.mxu0 0.0
  %304 = vmatpush1.msra.mxu0 0.0
  %305 = vmatprep.subr.mxu0 0.0
  %306 = vmatpush1.msra.mxu0 0.0
  %307 = vmatprep.subr.mxu0 0.0
  %308 = vmatpush1.msra.mxu0 0.0
  %309 = vmatprep.subr.mxu0 0.0
  %310 = vmatpush1.msra.mxu0 0.0
  %311 = vmatprep.subr.mxu0 0.0
  %312 = vmatpush1.msra.mxu0 0.0
  %313 = vmatprep.subr.mxu0 0.0
  %314 = vmatpush1.msra.mxu0 0.0
  %315 = vmatprep.subr.mxu0 0.0
  %316 = vmatpush1.msra.mxu0 0.0
  %317 = vmatprep.subr.mxu0 0.0
  %318 = vmatpush1.msra.mxu0 0.0
  %319 = vmatprep.subr.mxu0 0.0
  %320 = vmatpush1.msra.mxu0 0.0
  %321 = vmatprep.subr.mxu0 0.0
  %322 = vmatpush1.msra.mxu0 0.0
  %323 = vmatprep.subr.mxu0 0.0
  %324 = vmatpush1.msra.mxu0 0.0
  %325 = vmatprep.subr.mxu0 0.0
  %326 = vmatpush1.msra.mxu0 0.0
  %327 = vmatprep.subr.mxu0 0.0
  %328 = vmatpush1.msra.mxu0 0.0
  %329 = vmatprep.subr.mxu0 0.0
  %330 = vmatpush1.msra.mxu0 0.0
  %331 = vmatprep.subr.mxu0 0.0
  %332 = vmatpush1.msra.mxu0 0.0
  %333 = vmatprep.subr.mxu0 0.0
  %334 = vmatpush1.msra.mxu0 0.0
  %335 = vmatprep.subr.mxu0 0.0
  %336 = vmatpush1.msra.mxu0 0.0
  %337 = vmatprep.subr.mxu0 0.0
  %338 = vmatpush1.msra.mxu0 0.0
  %339 = vmatprep.subr.mxu0 0.0
  %340 = vmatpush1.msra.mxu0 0.0
  %341 = vmatprep.subr.mxu0 0.0
  %342 = vmatpush1.msra.mxu0 0.0
  %343 = vmatprep.subr.mxu0 0.0
  %344 = vmatpush1.msra.mxu0 0.0
  %345 = vmatprep.subr.mxu0 0.0
  %346 = vmatpush1.msra.mxu0 0.0
  %347 = vmatprep.subr.mxu0 0.0
  %348 = vmatpush1.msra.mxu0 0.0
  %349 = vmatprep.subr.mxu0 0.0
  %350 = vmatpush1.msra.mxu0 0.0
  %351 = vmatprep.mubr.f32.mxu0 0.0
  %352 = vmatmul.mubr.f32.gmra.mrb[0].mxu0 %v72
  %v353 = vpop.f32.mrb[0].mxu0
  %v354 = vadd.f32 0.0, %v353
  %v355 = vpop.f32.mrb[0].mxu0
  %v356 = vadd.f32 0.0, %v355
  %357 = vdwg.mxu0
  %358 = vmatprep.subr.mxu0 %v27
  %359 = vmatpush1.msra.mxu0 %v26
  %360 = vmatprep.subr.mxu0 %v40
  %361 = vmatpush1.msra.mxu0 %v39
  %362 = vmatprep.subr.mxu0 %v53
  %363 = vmatpush1.msra.mxu0 %v52
  %364 = vmatprep.subr.mxu0 %v66
  %365 = vmatpush1.msra.mxu0 %v65
  %366 = vmatprep.subr.mxu0 0.0
  %367 = vmatpush1.msra.mxu0 0.0
  %368 = vmatprep.subr.mxu0 0.0
  %369 = vmatpush1.msra.mxu0 0.0
  %370 = vmatprep.subr.mxu0 0.0
  %371 = vmatpush1.msra.mxu0 0.0
  %372 = vmatprep.subr.mxu0 0.0
  %373 = vmatpush1.msra.mxu0 0.0
  %374 = vmatprep.subr.mxu0 0.0
  %375 = vmatpush1.msra.mxu0 0.0
  %376 = vmatprep.subr.mxu0 0.0
  %377 = vmatpush1.msra.mxu0 0.0
  %378 = vmatprep.subr.mxu0 0.0
  %379 = vmatpush1.msra.mxu0 0.0
  %380 = vmatprep.subr.mxu0 0.0
  %381 = vmatpush1.msra.mxu0 0.0
  %382 = vmatprep.subr.mxu0 0.0
  %383 = vmatpush1.msra.mxu0 0.0
  %384 = vmatprep.subr.mxu0 0.0
  %385 = vmatpush1.msra.mxu0 0.0
  %386 = vmatprep.subr.mxu0 0.0
  %387 = vmatpush1.msra.mxu0 0.0
  %388 = vmatprep.subr.mxu0 0.0
  %389 = vmatpush1.msra.mxu0 0.0
  %390 = vmatprep.subr.mxu0 0.0
  %391 = vmatpush1.msra.mxu0 0.0
  %392 = vmatprep.subr.mxu0 0.0
  %393 = vmatpush1.msra.mxu0 0.0
  %394 = vmatprep.subr.mxu0 0.0
  %395 = vmatpush1.msra.mxu0 0.0
  %396 = vmatprep.subr.mxu0 0.0
  %397 = vmatpush1.msra.mxu0 0.0
  %398 = vmatprep.subr.mxu0 0.0
  %399 = vmatpush1.msra.mxu0 0.0
  %400 = vmatprep.subr.mxu0 0.0
  %401 = vmatpush1.msra.mxu0 0.0
  %402 = vmatprep.subr.mxu0 0.0
  %403 = vmatpush1.msra.mxu0 0.0
  %404 = vmatprep.subr.mxu0 0.0
  %405 = vmatpush1.msra.mxu0 0.0
  %406 = vmatprep.subr.mxu0 0.0
  %407 = vmatpush1.msra.mxu0 0.0
  %408 = vmatprep.subr.mxu0 0.0
  %409 = vmatpush1.msra.mxu0 0.0
  %410 = vmatprep.subr.mxu0 0.0
  %411 = vmatpush1.msra.mxu0 0.0
  %412 = vmatprep.subr.mxu0 0.0
  %413 = vmatpush1.msra.mxu0 0.0
  %414 = vmatprep.subr.mxu0 0.0
  %415 = vmatpush1.msra.mxu0 0.0
  %416 = vmatprep.subr.mxu0 0.0
  %417 = vmatpush1.msra.mxu0 0.0
  %418 = vmatprep.subr.mxu0 0.0
  %419 = vmatpush1.msra.mxu0 0.0
  %420 = vmatprep.subr.mxu0 0.0
  %421 = vmatpush1.msra.mxu0 0.0
  %422 = vmatprep.mubr.f32.mxu0 0.0
  %423 = vmatmul.mubr.f32.gmra.mrb[0].mxu0 %v72
  %v424 = vpop.f32.mrb[0].mxu0
  %v425 = vadd.f32 0.0, %v424
  %v426 = vpop.f32.mrb[0].mxu0
  %v427 = vadd.f32 0.0, %v426
  %428 = vdwg.mxu0
  %429 = vmatprep.subr.mxu0 %v29
  %430 = vmatpush1.msra.mxu0 %v28
  %431 = vmatprep.subr.mxu0 %v42
  %432 = vmatpush1.msra.mxu0 %v41
  %433 = vmatprep.subr.mxu0 %v55
  %434 = vmatpush1.msra.mxu0 %v54
  %435 = vmatprep.subr.mxu0 %v68
  %436 = vmatpush1.msra.mxu0 %v67
  %437 = vmatprep.subr.mxu0 0.0
  %438 = vmatpush1.msra.mxu0 0.0
  %439 = vmatprep.subr.mxu0 0.0
  %440 = vmatpush1.msra.mxu0 0.0
  %441 = vmatprep.subr.mxu0 0.0
  %442 = vmatpush1.msra.mxu0 0.0
  %443 = vmatprep.subr.mxu0 0.0
  %444 = vmatpush1.msra.mxu0 0.0
  %445 = vmatprep.subr.mxu0 0.0
  %446 = vmatpush1.msra.mxu0 0.0
  %447 = vmatprep.subr.mxu0 0.0
  %448 = vmatpush1.msra.mxu0 0.0
  %449 = vmatprep.subr.mxu0 0.0
  %450 = vmatpush1.msra.mxu0 0.0
  %451 = vmatprep.subr.mxu0 0.0
  %452 = vmatpush1.msra.mxu0 0.0
  %453 = vmatprep.subr.mxu0 0.0
  %454 = vmatpush1.msra.mxu0 0.0
  %455 = vmatprep.subr.mxu0 0.0
  %456 = vmatpush1.msra.mxu0 0.0
  %457 = vmatprep.subr.mxu0 0.0
  %458 = vmatpush1.msra.mxu0 0.0
  %459 = vmatprep.subr.mxu0 0.0
  %460 = vmatpush1.msra.mxu0 0.0
  %461 = vmatprep.subr.mxu0 0.0
  %462 = vmatpush1.msra.mxu0 0.0
  %463 = vmatprep.subr.mxu0 0.0
  %464 = vmatpush1.msra.mxu0 0.0
  %465 = vmatprep.subr.mxu0 0.0
  %466 = vmatpush1.msra.mxu0 0.0
  %467 = vmatprep.subr.mxu0 0.0
  %468 = vmatpush1.msra.mxu0 0.0
  %469 = vmatprep.subr.mxu0 0.0
  %470 = vmatpush1.msra.mxu0 0.0
  %471 = vmatprep.subr.mxu0 0.0
  %472 = vmatpush1.msra.mxu0 0.0
  %473 = vmatprep.subr.mxu0 0.0
  %474 = vmatpush1.msra.mxu0 0.0
  %475 = vmatprep.subr.mxu0 0.0
  %476 = vmatpush1.msra.mxu0 0.0
  %477 = vmatprep.subr.mxu0 0.0
  %478 = vmatpush1.msra.mxu0 0.0
  %479 = vmatprep.subr.mxu0 0.0
  %480 = vmatpush1.msra.mxu0 0.0
  %481 = vmatprep.subr.mxu0 0.0
  %482 = vmatpush1.msra.mxu0 0.0
  %483 = vmatprep.subr.mxu0 0.0
  %484 = vmatpush1.msra.mxu0 0.0
  %485 = vmatprep.subr.mxu0 0.0
  %486 = vmatpush1.msra.mxu0 0.0
  %487 = vmatprep.subr.mxu0 0.0
  %488 = vmatpush1.msra.mxu0 0.0
  %489 = vmatprep.subr.mxu0 0.0
  %490 = vmatpush1.msra.mxu0 0.0
  %491 = vmatprep.subr.mxu0 0.0
  %492 = vmatpush1.msra.mxu0 0.0
  %493 = vmatprep.mubr.f32.mxu0 0.0
  %494 = vmatmul.mubr.f32.gmra.mrb[0].mxu0 %v72
  %v495 = vpop.f32.mrb[0].mxu0
  %v496 = vadd.f32 0.0, %v495
  %v497 = vpop.f32.mrb[0].mxu0
  %v498 = vadd.f32 0.0, %v497
  %499 = vdwg.mxu0
  %500 = vmatprep.subr.mxu0 0.0
  %501 = vmatpush1.msra.mxu0 %v30
  %502 = vmatprep.subr.mxu0 0.0
  %503 = vmatpush1.msra.mxu0 %v43
  %504 = vmatprep.subr.mxu0 0.0
  %505 = vmatpush1.msra.mxu0 %v56
  %506 = vmatprep.subr.mxu0 0.0
  %507 = vmatpush1.msra.mxu0 %v69
  %508 = vmatprep.subr.mxu0 0.0
  %509 = vmatpush1.msra.mxu0 0.0
  %510 = vmatprep.subr.mxu0 0.0
  %511 = vmatpush1.msra.mxu0 0.0
  %512 = vmatprep.subr.mxu0 0.0
  %513 = vmatpush1.msra.mxu0 0.0
  %514 = vmatprep.subr.mxu0 0.0
  %515 = vmatpush1.msra.mxu0 0.0
  %516 = vmatprep.subr.mxu0 0.0
  %517 = vmatpush1.msra.mxu0 0.0
  %518 = vmatprep.subr.mxu0 0.0
  %519 = vmatpush1.msra.mxu0 0.0
  %520 = vmatprep.subr.mxu0 0.0
  %521 = vmatpush1.msra.mxu0 0.0
  %522 = vmatprep.subr.mxu0 0.0
  %523 = vmatpush1.msra.mxu0 0.0
  %524 = vmatprep.subr.mxu0 0.0
  %525 = vmatpush1.msra.mxu0 0.0
  %526 = vmatprep.subr.mxu0 0.0
  %527 = vmatpush1.msra.mxu0 0.0
  %528 = vmatprep.subr.mxu0 0.0
  %529 = vmatpush1.msra.mxu0 0.0
  %530 = vmatprep.subr.mxu0 0.0
  %531 = vmatpush1.msra.mxu0 0.0
  %532 = vmatprep.subr.mxu0 0.0
  %533 = vmatpush1.msra.mxu0 0.0
  %534 = vmatprep.subr.mxu0 0.0
  %535 = vmatpush1.msra.mxu0 0.0
  %536 = vmatprep.subr.mxu0 0.0
  %537 = vmatpush1.msra.mxu0 0.0
  %538 = vmatprep.subr.mxu0 0.0
  %539 = vmatpush1.msra.mxu0 0.0
  %540 = vmatprep.subr.mxu0 0.0
  %541 = vmatpush1.msra.mxu0 0.0
  %542 = vmatprep.subr.mxu0 0.0
  %543 = vmatpush1.msra.mxu0 0.0
  %544 = vmatprep.subr.mxu0 0.0
  %545 = vmatpush1.msra.mxu0 0.0
  %546 = vmatprep.subr.mxu0 0.0
  %547 = vmatpush1.msra.mxu0 0.0
  %548 = vmatprep.subr.mxu0 0.0
  %549 = vmatpush1.msra.mxu0 0.0
  %550 = vmatprep.subr.mxu0 0.0
  %551 = vmatpush1.msra.mxu0 0.0
  %552 = vmatprep.subr.mxu0 0.0
  %553 = vmatpush1.msra.mxu0 0.0
  %554 = vmatprep.subr.mxu0 0.0
  %555 = vmatpush1.msra.mxu0 0.0
  %556 = vmatprep.subr.mxu0 0.0
  %557 = vmatpush1.msra.mxu0 0.0
  %558 = vmatprep.subr.mxu0 0.0
  %559 = vmatpush1.msra.mxu0 0.0
  %560 = vmatprep.subr.mxu0 0.0
  %561 = vmatpush1.msra.mxu0 0.0
  %562 = vmatprep.subr.mxu0 0.0
  %563 = vmatpush1.msra.mxu0 0.0
  %564 = vmatprep.mubr.f32.mxu0 0.0
  %565 = vmatmul.mubr.f32.gmra.mrb[0].mxu0 %v72
  %v566 = vpop.f32.mrb[0].mxu0
  %v567 = vadd.f32 0.0, %v566
  %v568 = vpop.f32.mrb[0].mxu0
  %569 = vdwg.mxu0
  %vm570 = vcmask 1042432
  %v571 = vsel %vm570, %v141, 0.0
  %v572 = vsel %vm570, %v143, 0.0
  %v573 = vadd.f32 %v571, %v572
  %v574 = vsel %vm570, %v212, 0.0
  %v575 = vadd.f32 %v573, %v574
  %v576 = vsel %vm570, %v214, 0.0
  %v577 = vadd.f32 %v575, %v576
  %v578 = vsel %vm570, %v283, 0.0
  %v579 = vadd.f32 %v577, %v578
  %v580 = vsel %vm570, %v285, 0.0
  %v581 = vadd.f32 %v579, %v580
  %v582 = vsel %vm570, %v354, 0.0
  %v583 = vadd.f32 %v581, %v582
  %v584 = vsel %vm570, %v356, 0.0
  %v585 = vadd.f32 %v583, %v584
  %v586 = vsel %vm570, %v425, 0.0
  %v587 = vadd.f32 %v585, %v586
  %v588 = vsel %vm570, %v427, 0.0
  %v589 = vadd.f32 %v587, %v588
  %v590 = vsel %vm570, %v496, 0.0
  %v591 = vadd.f32 %v589, %v590
  %v592 = vsel %vm570, %v498, 0.0
  %v593 = vadd.f32 %v591, %v592
  %vm594 = vcmask 256000
  %v595 = vsel %vm594, %v567, 0.0
  %v596 = vadd.f32 %v593, %v595
  %597 = vadd.xlane.f32.xlu0 %v596
  %v598 = vpop.xlane.xlu0 %597
  %v599 = vrcp.pop 1568.0
  %v600 = vmul.f32 %v598, %v599
  %v601 = vsub.f32 %v141, %v600
  %v602 = vsub.f32 %v143, %v600
  %v603 = vsub.f32 %v212, %v600
  %v604 = vsub.f32 %v214, %v600
  %v605 = vsub.f32 %v283, %v600
  %v606 = vsub.f32 %v285, %v600
  %v607 = vsub.f32 %v354, %v600
  %v608 = vsub.f32 %v356, %v600
  %v609 = vsub.f32 %v425, %v600
  %v610 = vsub.f32 %v427, %v600
  %v611 = vsub.f32 %v496, %v600
  %v612 = vsub.f32 %v498, %v600
  %v613 = vsub.f32 %v567, %v600
  %v614 = vmul.f32 %v601, %v601
  %v615 = vmul.f32 %v602, %v602
  %v616 = vmul.f32 %v603, %v603
  %v617 = vmul.f32 %v604, %v604
  %v618 = vmul.f32 %v605, %v605
  %v619 = vmul.f32 %v606, %v606
  %v620 = vmul.f32 %v607, %v607
  %v621 = vmul.f32 %v608, %v608
  %v622 = vmul.f32 %v609, %v609
  %v623 = vmul.f32 %v610, %v610
  %v624 = vmul.f32 %v611, %v611
  %v625 = vmul.f32 %v612, %v612
  %v626 = vmul.f32 %v613, %v613
  %v627 = vsel %vm570, %v614, 0.0
  %v628 = vsel %vm570, %v615, 0.0
  %v629 = vadd.f32 %v627, %v628
  %v630 = vsel %vm570, %v616, 0.0
  %v631 = vadd.f32 %v629, %v630
  %v632 = vsel %vm570, %v617, 0.0
  %v633 = vadd.f32 %v631, %v632
  %v634 = vsel %vm570, %v618, 0.0
  %v635 = vadd.f32 %v633, %v634
  %v636 = vsel %vm570, %v619, 0.0
  %v637 = vadd.f32 %v635, %v636
  %v638 = vsel %vm570, %v620, 0.0
  %v639 = vadd.f32 %v637, %v638
  %v640 = vsel %vm570, %v621, 0.0
  %v641 = vadd.f32 %v639, %v640
  %v642 = vsel %vm570, %v622, 0.0
  %v643 = vadd.f32 %v641, %v642
  %v644 = vsel %vm570, %v623, 0.0
  %v645 = vadd.f32 %v643, %v644
  %v646 = vsel %vm570, %v624, 0.0
  %v647 = vadd.f32 %v645, %v646
  %v648 = vsel %vm570, %v625, 0.0
  %v649 = vadd.f32 %v647, %v648
  %v650 = vsel %vm594, %v626, 0.0
  %v651 = vadd.f32 %v649, %v650
  %652 = vadd.xlane.f32.xlu0 %v651
  %v653 = vpop.xlane.xlu0 %652
  %v654 = vmul.f32 %v653, %v599
  %v655 = vadd.f32 %v654, 1e-05
  %v656 = vrsqrt.pop %v655
  %v657 = vmul.f32 %v601, %v656
  %v658 = vmul.f32 %v602, %v656
  %v659 = vmul.f32 %v603, %v656
  %v660 = vmul.f32 %v604, %v656
  %v661 = vmul.f32 %v605, %v656
  %v662 = vmul.f32 %v606, %v656
  %v663 = vmul.f32 %v607, %v656
  %v664 = vmul.f32 %v608, %v656
  %v665 = vmul.f32 %v609, %v656
  %v666 = vmul.f32 %v610, %v656
  %v667 = vmul.f32 %v611, %v656
  %v668 = vmul.f32 %v612, %v656
  %v669 = vmul.f32 %v613, %v656
  %v670 = vld [vmem:[%s1] sm:$0x7]
  %672 = vset.pattern.permute.xlu0 0
  %673 = vperm.xlu0 %672, %v670
  %v674 = vpop.permute.xlu0 %673
  %v676 = vmul.f32 %v657, %v674
  %v677 = vmul.f32 %v658, %v674
  %v678 = vmul.f32 %v659, %v674
  %v679 = vmul.f32 %v660, %v674
  %v680 = vmul.f32 %v661, %v674
  %v681 = vmul.f32 %v662, %v674
  %v682 = vmul.f32 %v663, %v674
  %v683 = vmul.f32 %v664, %v674
  %v684 = vmul.f32 %v665, %v674
  %v685 = vmul.f32 %v666, %v674
  %v686 = vmul.f32 %v667, %v674
  %v687 = vmul.f32 %v668, %v674
  %v688 = vmul.f32 %v669, %v674
  %v689 = vld [vmem:[%s2] sm:$0x7]
  %691 = vset.pattern.permute.xlu0 0
  %692 = vperm.xlu0 %691, %v689
  %v693 = vpop.permute.xlu0 %692
  %v695 = vadd.f32 %v676, %v693
  %v696 = vadd.f32 %v677, %v693
  %v697 = vadd.f32 %v678, %v693
  %v698 = vadd.f32 %v679, %v693
  %v699 = vadd.f32 %v680, %v693
  %v700 = vadd.f32 %v681, %v693
  %v701 = vadd.f32 %v682, %v693
  %v702 = vadd.f32 %v683, %v693
  %v703 = vadd.f32 %v684, %v693
  %v704 = vadd.f32 %v685, %v693
  %v705 = vadd.f32 %v686, %v693
  %v706 = vadd.f32 %v687, %v693
  %v707 = vadd.f32 %v688, %v693
  %v708 = vtanh.pop %v695
  %v709 = vtanh.pop %v696
  %v710 = vtanh.pop %v697
  %v711 = vtanh.pop %v698
  %v712 = vtanh.pop %v699
  %v713 = vtanh.pop %v700
  %v714 = vtanh.pop %v701
  %v715 = vtanh.pop %v702
  %v716 = vtanh.pop %v703
  %v717 = vtanh.pop %v704
  %v718 = vtanh.pop %v705
  %v719 = vtanh.pop %v706
  %v720 = vtanh.pop %v707
  %v733 = vcombine.low %v708, %v709
  %v734 = vcombine.low %v710, %v711
  %v735 = vcombine.low %v712, %v713
  %v736 = vcombine.low %v714, %v715
  %v737 = vcombine.low %v716, %v717
  %v738 = vcombine.low %v718, %v719
  %745 = vst [vmem:[%s4] sm:$0x77] %v733
  %746 = vst [vmem:[%s4 + $0x8] sm:$0x77] %v734
  %747 = vst [vmem:[%s4 + $0x10] sm:$0x77] %v735
  %748 = vst [vmem:[%s4 + $0x18] sm:$0x77] %v736
  %749 = vst [vmem:[%s4 + $0x20] sm:$0x77] %v737
  %750 = vst [vmem:[%s4 + $0x28] sm:$0x77] %v738
  %751 = vst.msk [vmem:[%s4 + $0x30] sm:$0x7] %vm594, %v720
  // Predicated region
  $region18: #{cnnae_forward.9} parent=0 // pred_check
    _
  $region19: #{cnnae_forward.9} parent=0 // pred_check_branch
    %753 = sbr.rel (0) target = $region21
  $region20: #{cnnae_forward.9} parent=0 // pred_region
    _
  $region21: #{cnnae_forward.9} parent=0 // pred_fallthru
    _
  // Predicated region
  $region22: #{cnnae_forward.9} parent=0 // pred_check
    _
  $region23: #{cnnae_forward.9} parent=0 // pred_check_branch
    %755 = sbr.rel (0) target = $region25
  $region24: #{cnnae_forward.9} parent=0 // pred_region
    _
  $region25: #{cnnae_forward.9} parent=0 // pred_fallthru
    _

</llo_original>
